<compile_context>
chip_gen: v6e
topology: v6e:2x2x1
jax: 0.10.0
libtpu: 0.0.40
codegen_flags: <defaults>
</compile_context>

<pallas_src>
import jax
import jax.numpy as jnp
from jax import lax
from jax.experimental import pallas as pl
from jax.experimental.pallas import tpu as pltpu

# ----------------------------- configuration --------------------------------
IN_CH = 3            # RGB input (SAM encoder expects 3 channels)
IMG_SIZE = 32        # encoder img_size (small stand-in for 1024)
PATCH = 8            # patch size (stand-in for 16)
EMBED = 32           # transformer width (stand-in for 1280)
HEADS = 4
HEAD_DIM = EMBED // HEADS
MLP_RATIO = 2
MLP_HID = EMBED * MLP_RATIO
NECK = 256           # SAM neck output channels (decoder expects 256)
DEC_HIDDEN = 64
NUM_TYPES = 5
HP = IMG_SIZE // PATCH        # tokens per side (4)
N_TOK = HP * HP               # 16 tokens
CPP = IN_CH * PATCH * PATCH   # 192 flattened patch size
LN_EPS = 1e-6


# --------------------------- the fused Pallas kernel -------------------------
def _vit_cnn_kernel(
    patches_ref,                                   # (1, N_TOK, CPP) f32 per-batch
    pe_w_ref, pe_b_ref, pos_ref,                   # patch embed + pos embed
    ln1_g_ref, ln1_b_ref, qkv_w_ref, qkv_b_ref, proj_w_ref, proj_b_ref,
    ln2_g_ref, ln2_b_ref, fc1_w_ref, fc1_b_ref, fc2_w_ref, fc2_b_ref,
    neck1_w_ref, nln1_g_ref, nln1_b_ref, neck2_w_ref, nln2_g_ref, nln2_b_ref,
    dec1_w_ref, dec2_w_ref, dec2_b_ref, rsz_ref,
    o_ref,                                         # (1, NUM_TYPES, H0*W0) f32
    pad_ref,                                       # (HP+2, HP+2, NECK) f32 scratch
):
    f32, bf16 = jnp.float32, jnp.bfloat16

    def mm(a, w_ref, b_ref=None):
        # bf16 operands, f32 accumulation on the MXU
        y = jnp.dot(a.astype(bf16), w_ref[...], preferred_element_type=f32)
        if b_ref is not None:
            y = y + b_ref[...]
        return y

    def ln(x, g_ref, b_ref):
        mu = jnp.mean(x, axis=-1, keepdims=True)
        var = jnp.mean(jnp.square(x - mu), axis=-1, keepdims=True)
        return (x - mu) * lax.rsqrt(var + LN_EPS) * g_ref[...] + b_ref[...]

    # ---- patch embed (conv k=stride=P as matmul) + positional embedding ----
    tok = mm(patches_ref[0], pe_w_ref, pe_b_ref) + pos_ref[...]     # (N, E) f32

    # ---- transformer block: multi-head self-attention -----------------------
    h = ln(tok, ln1_g_ref, ln1_b_ref)
    qkv = mm(h, qkv_w_ref, qkv_b_ref)                               # (N, 3E)
    scale = 1.0 / float(HEAD_DIM) ** 0.5
    head_outs = []
    for hd in range(HEADS):                                         # head split in-kernel
        lo = hd * HEAD_DIM
        qh = (qkv[:, lo:lo + HEAD_DIM] * scale).astype(bf16)
        kh = qkv[:, EMBED + lo:EMBED + lo + HEAD_DIM].astype(bf16)
        vh = qkv[:, 2 * EMBED + lo:2 * EMBED + lo + HEAD_DIM].astype(bf16)
        s = lax.dot_general(qh, kh, (((1,), (1,)), ((), ())),
                            preferred_element_type=f32)             # (N, N)
        s = s - jnp.max(s, axis=-1, keepdims=True)
        p = jnp.exp(s)
        inv = pl.reciprocal(jnp.sum(p, axis=-1, keepdims=True), approx=True)
        head_outs.append(
            jnp.dot(p.astype(bf16), vh, preferred_element_type=f32) * inv)
    # head merge via a single lane-concat, then ONE output-projection matmul
    attn = jnp.concatenate(head_outs, axis=-1)                      # (N, E)
    tok = tok + mm(attn, proj_w_ref, proj_b_ref)

    # ---- transformer block: MLP ---------------------------------------------
    h = ln(tok, ln2_g_ref, ln2_b_ref)
    # TODO(synk): tanh-approx GELU; PyTorch nn.GELU default is exact erf.
    h = jax.nn.gelu(mm(h, fc1_w_ref, fc1_b_ref))
    tok = tok + mm(h, fc2_w_ref, fc2_b_ref)

    # ---- SAM neck: 1x1 conv -> LN2d -> 3x3 conv (pad=1) -> LN2d -------------
    feat = ln(mm(tok, neck1_w_ref), nln1_g_ref, nln1_b_ref)         # (N, NECK)

    # direct 3x3 conv: padded feature map lives in a VMEM scratch, 9
    # accumulated (N, NECK) x (NECK, NECK) matmuls — no im2col, no HBM trip.
    pad_ref[...] = jnp.zeros_like(pad_ref)
    for hp in range(HP):
        pad_ref[hp + 1, 1:1 + HP, :] = feat[hp * HP:(hp + 1) * HP, :]
    acc = jnp.zeros((N_TOK, NECK), f32)
    for kh in range(3):
        for kw in range(3):
            win = jnp.concatenate(
                [pad_ref[r + kh, kw:kw + HP, :] for r in range(HP)], axis=0)
            acc = acc + jnp.dot(win.astype(bf16), neck2_w_ref[kh * 3 + kw],
                                preferred_element_type=f32)
    feat = ln(acc, nln2_g_ref, nln2_b_ref)

    # ---- decoder head: conv1x1(256->64, no bias) -> ReLU -> conv1x1(+bias) --
    hdec = jnp.maximum(mm(feat, dec1_w_ref), 0.0)
    dec = mm(hdec, dec2_w_ref, dec2_b_ref)                          # (N, NUM_TYPES)

    # ---- fused back bilinear resize (constant operator), lane-dense output --
    # out[c, (H,W)] = sum_n dec[n, c] * rsz[n, (H,W)]   -> (NUM_TYPES, H0*W0)
    o_ref[0] = lax.dot_general(dec, rsz_ref[...], (((0,), (0,)), ((), ())),
                               preferred_element_type=f32)


# ---------------- constant bilinear-resize operator (align_corners=False) ----
def _resize_matrix(out_size, in_size):
    scale = in_size / out_size
    src = (jnp.arange(out_size, dtype=jnp.float32) + 0.5) * scale - 0.5
    src = jnp.maximum(src, 0.0)
    i0 = jnp.minimum(jnp.floor(src).astype(jnp.int32), in_size - 1)
    i1 = jnp.minimum(i0 + 1, in_size - 1)
    w = jnp.clip(src - i0.astype(jnp.float32), 0.0, 1.0)
    return (jax.nn.one_hot(i0, in_size, dtype=jnp.float32) * (1.0 - w)[:, None]
            + jax.nn.one_hot(i1, in_size, dtype=jnp.float32) * w[:, None])


# ------------------------------ parameters -----------------------------------
def init_params(key):
    ks = list(jax.random.split(key, 16))
    n = lambda k, shape, s=0.02: (s * jax.random.normal(k, shape)).astype(jnp.float32)
    return {
        # patch embed: Conv2d(IN_CH, EMBED, PATCH, stride=PATCH)
        "patch_w": n(ks[0], (EMBED, IN_CH, PATCH, PATCH)),
        "patch_b": jnp.zeros((EMBED,), jnp.float32),
        "pos_embed": n(ks[1], (1, HP, HP, EMBED)),
        # transformer block
        "ln1_g": jnp.ones((EMBED,), jnp.float32), "ln1_b": jnp.zeros((EMBED,), jnp.float32),
        "qkv_w": n(ks[2], (EMBED, 3 * EMBED)), "qkv_b": jnp.zeros((3 * EMBED,), jnp.float32),
        "proj_w": n(ks[3], (EMBED, EMBED)), "proj_b": jnp.zeros((EMBED,), jnp.float32),
        "ln2_g": jnp.ones((EMBED,), jnp.float32), "ln2_b": jnp.zeros((EMBED,), jnp.float32),
        "fc1_w": n(ks[4], (EMBED, MLP_HID)), "fc1_b": jnp.zeros((MLP_HID,), jnp.float32),
        "fc2_w": n(ks[5], (MLP_HID, EMBED)), "fc2_b": jnp.zeros((EMBED,), jnp.float32),
        # SAM neck: conv1x1(E->256,no bias) LN2d conv3x3(256->256,no bias) LN2d
        "neck1_w": n(ks[6], (EMBED, NECK)),
        "neck_ln1_g": jnp.ones((NECK,), jnp.float32), "neck_ln1_b": jnp.zeros((NECK,), jnp.float32),
        "neck2_w": n(ks[7], (NECK, NECK, 3, 3)),
        "neck_ln2_g": jnp.ones((NECK,), jnp.float32), "neck_ln2_b": jnp.zeros((NECK,), jnp.float32),
        # decoder: Conv2d(256,64,1,bias=False) ReLU Conv2d(64,num_types,1,bias=True)
        "dec1_w": n(ks[8], (DEC_HIDDEN, NECK, 1, 1)),
        "dec2_w": n(ks[9], (NUM_TYPES, DEC_HIDDEN, 1, 1)),
        "dec2_b": jnp.zeros((NUM_TYPES,), jnp.float32),
    }


# ------------------------------- forward -------------------------------------
def vit_cnn_forward(x, params):
    B, Cin, H0, W0 = x.shape
    f32, bf16 = jnp.float32, jnp.bfloat16
    x = x.astype(f32)

    # front bilinear resize as two constant matmuls (no gathers), then patchify
    # (pure index shuffling; the patch-embed matmul itself runs in the kernel).
    rh_in = _resize_matrix(IMG_SIZE, H0)
    rw_in = _resize_matrix(IMG_SIZE, W0)
    xr = jnp.einsum("Hh,bchw,Ww->bcHW", rh_in, x, rw_in)            # (B,C,32,32)
    patches = (xr.reshape(B, Cin, HP, PATCH, HP, PATCH)
                 .transpose(0, 2, 4, 1, 3, 5)
                 .reshape(B, N_TOK, CPP))

    # folded back-resize operator, consumed inside the kernel:
    # rszT[(h,w), (H,W)] = Rh[H,h] * Rw[W,w]
    rh_out = _resize_matrix(H0, HP)
    rw_out = _resize_matrix(W0, HP)
    rszT = jnp.einsum("Hh,Ww->hwHW", rh_out, rw_out).reshape(N_TOK, H0 * W0)

    # weights: matmul layout, bf16 operands (f32 accumulation in-kernel)
    r2 = lambda a: a.reshape(1, -1).astype(f32)
    pe_w = params["patch_w"].reshape(EMBED, CPP).T.astype(bf16)
    neck2 = params["neck2_w"].transpose(2, 3, 1, 0).reshape(9, NECK, NECK).astype(bf16)
    dec1 = params["dec1_w"].reshape(DEC_HIDDEN, NECK).T.astype(bf16)
    dec2 = params["dec2_w"].reshape(NUM_TYPES, DEC_HIDDEN).T.astype(bf16)

    inputs = (
        patches.astype(f32),
        pe_w, r2(params["patch_b"]),
        params["pos_embed"].reshape(N_TOK, EMBED).astype(f32),
        r2(params["ln1_g"]), r2(params["ln1_b"]),
        params["qkv_w"].astype(bf16), r2(params["qkv_b"]),
        params["proj_w"].astype(bf16), r2(params["proj_b"]),
        r2(params["ln2_g"]), r2(params["ln2_b"]),
        params["fc1_w"].astype(bf16), r2(params["fc1_b"]),
        params["fc2_w"].astype(bf16), r2(params["fc2_b"]),
        params["neck1_w"].astype(bf16),
        r2(params["neck_ln1_g"]), r2(params["neck_ln1_b"]),
        neck2, r2(params["neck_ln2_g"]), r2(params["neck_ln2_b"]),
        dec1, dec2, r2(params["dec2_b"]),
        rszT.astype(f32),
    )

    def const_spec(a):           # full-array block, resident across grid steps
        nd = a.ndim
        return pl.BlockSpec(a.shape, lambda b, _nd=nd: (0,) * _nd)

    in_specs = [pl.BlockSpec((1, N_TOK, CPP), lambda b: (b, 0, 0))]
    in_specs += [const_spec(a) for a in inputs[1:]]

    out = pl.pallas_call(
        _vit_cnn_kernel,
        out_shape=jax.ShapeDtypeStruct((B, NUM_TYPES, H0 * W0), f32),
        grid=(B,),
        in_specs=in_specs,
        out_specs=pl.BlockSpec((1, NUM_TYPES, H0 * W0), lambda b: (b, 0, 0)),
        scratch_shapes=[pltpu.VMEM((HP + 2, HP + 2, NECK), f32)],
        compiler_params=pltpu.CompilerParams(
            dimension_semantics=("parallel",)),
    )(*inputs)

    return out.reshape(B, NUM_TYPES, H0, W0)


# --------------------------------- main ---------------------------------------
if __name__ == "__main__":
    key = jax.random.PRNGKey(0)
    pkey, xkey = jax.random.split(key)
    params = init_params(pkey)
    x = jax.random.normal(xkey, (2, IN_CH, 16, 16), dtype=jnp.float32)

    out = jax.jit(vit_cnn_forward)(x, params)
    out = jax.block_until_ready(out)

    assert out.shape == (2, NUM_TYPES, 16, 16), out.shape
    assert bool(jnp.all(jnp.isfinite(out)))
    print("KERNEL_OK")
</pallas_src>

<mosaic_0001>
module attributes {stable_mosaic.version = 11 : i64} {
  func.func @_vit_cnn_kernel(%arg0: i32, %arg1: memref<1x16x192xf32, #tpu.memory_space<vmem>>, %arg2: memref<192x32xbf16, #tpu.memory_space<vmem>>, %arg3: memref<1x32xf32, #tpu.memory_space<vmem>>, %arg4: memref<16x32xf32, #tpu.memory_space<vmem>>, %arg5: memref<1x32xf32, #tpu.memory_space<vmem>>, %arg6: memref<1x32xf32, #tpu.memory_space<vmem>>, %arg7: memref<32x96xbf16, #tpu.memory_space<vmem>>, %arg8: memref<1x96xf32, #tpu.memory_space<vmem>>, %arg9: memref<32x32xbf16, #tpu.memory_space<vmem>>, %arg10: memref<1x32xf32, #tpu.memory_space<vmem>>, %arg11: memref<1x32xf32, #tpu.memory_space<vmem>>, %arg12: memref<1x32xf32, #tpu.memory_space<vmem>>, %arg13: memref<32x64xbf16, #tpu.memory_space<vmem>>, %arg14: memref<1x64xf32, #tpu.memory_space<vmem>>, %arg15: memref<64x32xbf16, #tpu.memory_space<vmem>>, %arg16: memref<1x32xf32, #tpu.memory_space<vmem>>, %arg17: memref<32x256xbf16, #tpu.memory_space<vmem>>, %arg18: memref<1x256xf32, #tpu.memory_space<vmem>>, %arg19: memref<1x256xf32, #tpu.memory_space<vmem>>, %arg20: memref<9x256x256xbf16, #tpu.memory_space<vmem>>, %arg21: memref<1x256xf32, #tpu.memory_space<vmem>>, %arg22: memref<1x256xf32, #tpu.memory_space<vmem>>, %arg23: memref<256x64xbf16, #tpu.memory_space<vmem>>, %arg24: memref<64x5xbf16, #tpu.memory_space<vmem>>, %arg25: memref<1x5xf32, #tpu.memory_space<vmem>>, %arg26: memref<16x256xf32, #tpu.memory_space<vmem>>, %arg27: memref<1x5x256xf32, #tpu.memory_space<vmem>>, %arg28: memref<6x6x256xf32, #tpu.memory_space<vmem>>) attributes {dimension_semantics = [#tpu.dimension_semantics<parallel>], iteration_bounds = array<i64: 2>, scalar_prefetch = 0 : i64, scratch_operands = 1 : i64, tpu.core_type = #tpu.core_type<tc>, window_params = [{transform_indices = @transform_0, window_bounds = array<i64: 1, 16, 192>}, {pipeline_mode = #tpu.pipeline_mode<synchronous>, transform_indices = @transform_1, window_bounds = array<i64: 192, 32>}, {pipeline_mode = #tpu.pipeline_mode<synchronous>, transform_indices = @transform_2, window_bounds = array<i64: 1, 32>}, {pipeline_mode = #tpu.pipeline_mode<synchronous>, transform_indices = @transform_3, window_bounds = array<i64: 16, 32>}, {pipeline_mode = #tpu.pipeline_mode<synchronous>, transform_indices = @transform_4, window_bounds = array<i64: 1, 32>}, {pipeline_mode = #tpu.pipeline_mode<synchronous>, transform_indices = @transform_5, window_bounds = array<i64: 1, 32>}, {pipeline_mode = #tpu.pipeline_mode<synchronous>, transform_indices = @transform_6, window_bounds = array<i64: 32, 96>}, {pipeline_mode = #tpu.pipeline_mode<synchronous>, transform_indices = @transform_7, window_bounds = array<i64: 1, 96>}, {pipeline_mode = #tpu.pipeline_mode<synchronous>, transform_indices = @transform_8, window_bounds = array<i64: 32, 32>}, {pipeline_mode = #tpu.pipeline_mode<synchronous>, transform_indices = @transform_9, window_bounds = array<i64: 1, 32>}, {pipeline_mode = #tpu.pipeline_mode<synchronous>, transform_indices = @transform_10, window_bounds = array<i64: 1, 32>}, {pipeline_mode = #tpu.pipeline_mode<synchronous>, transform_indices = @transform_11, window_bounds = array<i64: 1, 32>}, {pipeline_mode = #tpu.pipeline_mode<synchronous>, transform_indices = @transform_12, window_bounds = array<i64: 32, 64>}, {pipeline_mode = #tpu.pipeline_mode<synchronous>, transform_indices = @transform_13, window_bounds = array<i64: 1, 64>}, {pipeline_mode = #tpu.pipeline_mode<synchronous>, transform_indices = @transform_14, window_bounds = array<i64: 64, 32>}, {pipeline_mode = #tpu.pipeline_mode<synchronous>, transform_indices = @transform_15, window_bounds = array<i64: 1, 32>}, {pipeline_mode = #tpu.pipeline_mode<synchronous>, transform_indices = @transform_16, window_bounds = array<i64: 32, 256>}, {pipeline_mode = #tpu.pipeline_mode<synchronous>, transform_indices = @transform_17, window_bounds = array<i64: 1, 256>}, {pipeline_mode = #tpu.pipeline_mode<synchronous>, transform_indices = @transform_18, window_bounds = array<i64: 1, 256>}, {pipeline_mode = #tpu.pipeline_mode<synchronous>, transform_indices = @transform_19, window_bounds = array<i64: 9, 256, 256>}, {pipeline_mode = #tpu.pipeline_mode<synchronous>, transform_indices = @transform_20, window_bounds = array<i64: 1, 256>}, {pipeline_mode = #tpu.pipeline_mode<synchronous>, transform_indices = @transform_21, window_bounds = array<i64: 1, 256>}, {pipeline_mode = #tpu.pipeline_mode<synchronous>, transform_indices = @transform_22, window_bounds = array<i64: 256, 64>}, {pipeline_mode = #tpu.pipeline_mode<synchronous>, transform_indices = @transform_23, window_bounds = array<i64: 64, 5>}, {pipeline_mode = #tpu.pipeline_mode<synchronous>, transform_indices = @transform_24, window_bounds = array<i64: 1, 5>}, {pipeline_mode = #tpu.pipeline_mode<synchronous>, transform_indices = @transform_25, window_bounds = array<i64: 16, 256>}, {transform_indices = @transform_26, window_bounds = array<i64: 1, 5, 256>}]} {
    %c0 = arith.constant 0 : index
    %c0_0 = arith.constant 0 : index
    %c0_1 = arith.constant 0 : index
    %0 = vector.load %arg1[%c0, %c0_0, %c0_1] : memref<1x16x192xf32, #tpu.memory_space<vmem>>, vector<1x16x192xf32>
    %1 = vector.shape_cast %0 : vector<1x16x192xf32> to vector<16x192xf32>
    %2 = arith.truncf %1 : vector<16x192xf32> to vector<16x192xbf16>
    %c0_2 = arith.constant 0 : index
    %c0_3 = arith.constant 0 : index
    %3 = vector.load %arg2[%c0_2, %c0_3] : memref<192x32xbf16, #tpu.memory_space<vmem>>, vector<192x32xbf16>
    %cst = arith.constant dense<0.000000e+00> : vector<16x32xf32>
    %4 = tpu.matmul %2, %3, %cst {dimension_numbers = #tpu.dot_dimension_numbers<[1], [0], [0], [1], [0, 0, 1, 1], [], []>} : vector<16x192xbf16>, vector<192x32xbf16>, vector<16x32xf32> -> vector<16x32xf32>
    %c0_4 = arith.constant 0 : index
    %c0_5 = arith.constant 0 : index
    %5 = vector.load %arg3[%c0_4, %c0_5] : memref<1x32xf32, #tpu.memory_space<vmem>>, vector<1x32xf32>
    %6 = vector.broadcast %5 : vector<1x32xf32> to vector<16x32xf32>
    %7 = arith.addf %4, %6 : vector<16x32xf32>
    %c0_6 = arith.constant 0 : index
    %c0_7 = arith.constant 0 : index
    %8 = vector.load %arg4[%c0_6, %c0_7] : memref<16x32xf32, #tpu.memory_space<vmem>>, vector<16x32xf32>
    %9 = arith.addf %7, %8 : vector<16x32xf32>
    %cst_8 = arith.constant dense<0.000000e+00> : vector<16xf32>
    %10 = vector.multi_reduction <add>, %9, %cst_8 [1] : vector<16x32xf32> to vector<16xf32>
    %11 = vector.shape_cast %10 : vector<16xf32> to vector<16x1xf32>
    %cst_9 = arith.constant 3.200000e+01 : f32
    %12 = vector.broadcast %cst_9 : f32 to vector<16x1xf32>
    %13 = arith.divf %11, %12 : vector<16x1xf32>
    %14 = vector.broadcast %13 : vector<16x1xf32> to vector<16x32xf32>
    %15 = arith.subf %9, %14 : vector<16x32xf32>
    %16 = arith.mulf %15, %15 : vector<16x32xf32>
    %cst_10 = arith.constant dense<0.000000e+00> : vector<16xf32>
    %17 = vector.multi_reduction <add>, %16, %cst_10 [1] : vector<16x32xf32> to vector<16xf32>
    %18 = vector.shape_cast %17 : vector<16xf32> to vector<16x1xf32>
    %cst_11 = arith.constant 3.200000e+01 : f32
    %19 = vector.broadcast %cst_11 : f32 to vector<16x1xf32>
    %20 = arith.divf %18, %19 : vector<16x1xf32>
    %21 = vector.broadcast %13 : vector<16x1xf32> to vector<16x32xf32>
    %22 = arith.subf %9, %21 : vector<16x32xf32>
    %cst_12 = arith.constant 9.99999997E-7 : f32
    %23 = vector.broadcast %cst_12 : f32 to vector<16x1xf32>
    %24 = arith.addf %20, %23 : vector<16x1xf32>
    %25 = math.rsqrt %24 : vector<16x1xf32>
    %26 = vector.broadcast %25 : vector<16x1xf32> to vector<16x32xf32>
    %27 = arith.mulf %22, %26 : vector<16x32xf32>
    %c0_13 = arith.constant 0 : index
    %c0_14 = arith.constant 0 : index
    %28 = vector.load %arg5[%c0_13, %c0_14] : memref<1x32xf32, #tpu.memory_space<vmem>>, vector<1x32xf32>
    %29 = vector.broadcast %28 : vector<1x32xf32> to vector<16x32xf32>
    %30 = arith.mulf %27, %29 : vector<16x32xf32>
    %c0_15 = arith.constant 0 : index
    %c0_16 = arith.constant 0 : index
    %31 = vector.load %arg6[%c0_15, %c0_16] : memref<1x32xf32, #tpu.memory_space<vmem>>, vector<1x32xf32>
    %32 = vector.broadcast %31 : vector<1x32xf32> to vector<16x32xf32>
    %33 = arith.addf %30, %32 : vector<16x32xf32>
    %34 = arith.truncf %33 : vector<16x32xf32> to vector<16x32xbf16>
    %c0_17 = arith.constant 0 : index
    %c0_18 = arith.constant 0 : index
    %35 = vector.load %arg7[%c0_17, %c0_18] : memref<32x96xbf16, #tpu.memory_space<vmem>>, vector<32x96xbf16>
    %cst_19 = arith.constant dense<0.000000e+00> : vector<16x96xf32>
    %36 = tpu.matmul %34, %35, %cst_19 {dimension_numbers = #tpu.dot_dimension_numbers<[1], [0], [0], [1], [0, 0, 1, 1], [], []>} : vector<16x32xbf16>, vector<32x96xbf16>, vector<16x96xf32> -> vector<16x96xf32>
    %c0_20 = arith.constant 0 : index
    %c0_21 = arith.constant 0 : index
    %37 = vector.load %arg8[%c0_20, %c0_21] : memref<1x96xf32, #tpu.memory_space<vmem>>, vector<1x96xf32>
    %38 = vector.broadcast %37 : vector<1x96xf32> to vector<16x96xf32>
    %39 = arith.addf %36, %38 : vector<16x96xf32>
    %40 = vector.extract_strided_slice %39 {offsets = [0, 0], sizes = [16, 8], strides = [1, 1]} : vector<16x96xf32> to vector<16x8xf32>
    %cst_22 = arith.constant 0.353553385 : f32
    %41 = vector.broadcast %cst_22 : f32 to vector<16x8xf32>
    %42 = arith.mulf %40, %41 : vector<16x8xf32>
    %43 = arith.truncf %42 : vector<16x8xf32> to vector<16x8xbf16>
    %44 = vector.extract_strided_slice %39 {offsets = [0, 32], sizes = [16, 8], strides = [1, 1]} : vector<16x96xf32> to vector<16x8xf32>
    %45 = arith.truncf %44 : vector<16x8xf32> to vector<16x8xbf16>
    %46 = vector.extract_strided_slice %39 {offsets = [0, 64], sizes = [16, 8], strides = [1, 1]} : vector<16x96xf32> to vector<16x8xf32>
    %47 = arith.truncf %46 : vector<16x8xf32> to vector<16x8xbf16>
    %cst_23 = arith.constant dense<0.000000e+00> : vector<16x16xf32>
    %48 = tpu.matmul %43, %45, %cst_23 {dimension_numbers = #tpu.dot_dimension_numbers<[1], [1], [0], [0], [0, 0, 1, 0], [], []>} : vector<16x8xbf16>, vector<16x8xbf16>, vector<16x16xf32> -> vector<16x16xf32>
    %cst_24 = arith.constant dense<0xFF800000> : vector<16xf32>
    %49 = vector.multi_reduction <maximumf>, %48, %cst_24 [1] : vector<16x16xf32> to vector<16xf32>
    %50 = vector.shape_cast %49 : vector<16xf32> to vector<16x1xf32>
    %51 = vector.broadcast %50 : vector<16x1xf32> to vector<16x16xf32>
    %52 = arith.subf %48, %51 : vector<16x16xf32>
    %53 = math.exp %52 : vector<16x16xf32>
    %cst_25 = arith.constant dense<0.000000e+00> : vector<16xf32>
    %54 = vector.multi_reduction <add>, %53, %cst_25 [1] : vector<16x16xf32> to vector<16xf32>
    %55 = vector.shape_cast %54 : vector<16xf32> to vector<16x1xf32>
    %56 = tpu.reciprocal %55 {approx = true} : vector<16x1xf32> -> vector<16x1xf32>
    %57 = arith.truncf %53 : vector<16x16xf32> to vector<16x16xbf16>
    %cst_26 = arith.constant dense<0.000000e+00> : vector<16x8xf32>
    %58 = tpu.matmul %57, %47, %cst_26 {dimension_numbers = #tpu.dot_dimension_numbers<[1], [0], [0], [1], [0, 0, 1, 1], [], []>} : vector<16x16xbf16>, vector<16x8xbf16>, vector<16x8xf32> -> vector<16x8xf32>
    %59 = vector.broadcast %56 : vector<16x1xf32> to vector<16x8xf32>
    %60 = arith.mulf %58, %59 : vector<16x8xf32>
    %61 = vector.extract_strided_slice %39 {offsets = [0, 8], sizes = [16, 8], strides = [1, 1]} : vector<16x96xf32> to vector<16x8xf32>
    %cst_27 = arith.constant 0.353553385 : f32
    %62 = vector.broadcast %cst_27 : f32 to vector<16x8xf32>
    %63 = arith.mulf %61, %62 : vector<16x8xf32>
    %64 = arith.truncf %63 : vector<16x8xf32> to vector<16x8xbf16>
    %65 = vector.extract_strided_slice %39 {offsets = [0, 40], sizes = [16, 8], strides = [1, 1]} : vector<16x96xf32> to vector<16x8xf32>
    %66 = arith.truncf %65 : vector<16x8xf32> to vector<16x8xbf16>
    %67 = vector.extract_strided_slice %39 {offsets = [0, 72], sizes = [16, 8], strides = [1, 1]} : vector<16x96xf32> to vector<16x8xf32>
    %68 = arith.truncf %67 : vector<16x8xf32> to vector<16x8xbf16>
    %cst_28 = arith.constant dense<0.000000e+00> : vector<16x16xf32>
    %69 = tpu.matmul %64, %66, %cst_28 {dimension_numbers = #tpu.dot_dimension_numbers<[1], [1], [0], [0], [0, 0, 1, 0], [], []>} : vector<16x8xbf16>, vector<16x8xbf16>, vector<16x16xf32> -> vector<16x16xf32>
    %cst_29 = arith.constant dense<0xFF800000> : vector<16xf32>
    %70 = vector.multi_reduction <maximumf>, %69, %cst_29 [1] : vector<16x16xf32> to vector<16xf32>
    %71 = vector.shape_cast %70 : vector<16xf32> to vector<16x1xf32>
    %72 = vector.broadcast %71 : vector<16x1xf32> to vector<16x16xf32>
    %73 = arith.subf %69, %72 : vector<16x16xf32>
    %74 = math.exp %73 : vector<16x16xf32>
    %cst_30 = arith.constant dense<0.000000e+00> : vector<16xf32>
    %75 = vector.multi_reduction <add>, %74, %cst_30 [1] : vector<16x16xf32> to vector<16xf32>
    %76 = vector.shape_cast %75 : vector<16xf32> to vector<16x1xf32>
    %77 = tpu.reciprocal %76 {approx = true} : vector<16x1xf32> -> vector<16x1xf32>
    %78 = arith.truncf %74 : vector<16x16xf32> to vector<16x16xbf16>
    %cst_31 = arith.constant dense<0.000000e+00> : vector<16x8xf32>
    %79 = tpu.matmul %78, %68, %cst_31 {dimension_numbers = #tpu.dot_dimension_numbers<[1], [0], [0], [1], [0, 0, 1, 1], [], []>} : vector<16x16xbf16>, vector<16x8xbf16>, vector<16x8xf32> -> vector<16x8xf32>
    %80 = vector.broadcast %77 : vector<16x1xf32> to vector<16x8xf32>
    %81 = arith.mulf %79, %80 : vector<16x8xf32>
    %82 = vector.extract_strided_slice %39 {offsets = [0, 16], sizes = [16, 8], strides = [1, 1]} : vector<16x96xf32> to vector<16x8xf32>
    %cst_32 = arith.constant 0.353553385 : f32
    %83 = vector.broadcast %cst_32 : f32 to vector<16x8xf32>
    %84 = arith.mulf %82, %83 : vector<16x8xf32>
    %85 = arith.truncf %84 : vector<16x8xf32> to vector<16x8xbf16>
    %86 = vector.extract_strided_slice %39 {offsets = [0, 48], sizes = [16, 8], strides = [1, 1]} : vector<16x96xf32> to vector<16x8xf32>
    %87 = arith.truncf %86 : vector<16x8xf32> to vector<16x8xbf16>
    %88 = vector.extract_strided_slice %39 {offsets = [0, 80], sizes = [16, 8], strides = [1, 1]} : vector<16x96xf32> to vector<16x8xf32>
    %89 = arith.truncf %88 : vector<16x8xf32> to vector<16x8xbf16>
    %cst_33 = arith.constant dense<0.000000e+00> : vector<16x16xf32>
    %90 = tpu.matmul %85, %87, %cst_33 {dimension_numbers = #tpu.dot_dimension_numbers<[1], [1], [0], [0], [0, 0, 1, 0], [], []>} : vector<16x8xbf16>, vector<16x8xbf16>, vector<16x16xf32> -> vector<16x16xf32>
    %cst_34 = arith.constant dense<0xFF800000> : vector<16xf32>
    %91 = vector.multi_reduction <maximumf>, %90, %cst_34 [1] : vector<16x16xf32> to vector<16xf32>
    %92 = vector.shape_cast %91 : vector<16xf32> to vector<16x1xf32>
    %93 = vector.broadcast %92 : vector<16x1xf32> to vector<16x16xf32>
    %94 = arith.subf %90, %93 : vector<16x16xf32>
    %95 = math.exp %94 : vector<16x16xf32>
    %cst_35 = arith.constant dense<0.000000e+00> : vector<16xf32>
    %96 = vector.multi_reduction <add>, %95, %cst_35 [1] : vector<16x16xf32> to vector<16xf32>
    %97 = vector.shape_cast %96 : vector<16xf32> to vector<16x1xf32>
    %98 = tpu.reciprocal %97 {approx = true} : vector<16x1xf32> -> vector<16x1xf32>
    %99 = arith.truncf %95 : vector<16x16xf32> to vector<16x16xbf16>
    %cst_36 = arith.constant dense<0.000000e+00> : vector<16x8xf32>
    %100 = tpu.matmul %99, %89, %cst_36 {dimension_numbers = #tpu.dot_dimension_numbers<[1], [0], [0], [1], [0, 0, 1, 1], [], []>} : vector<16x16xbf16>, vector<16x8xbf16>, vector<16x8xf32> -> vector<16x8xf32>
    %101 = vector.broadcast %98 : vector<16x1xf32> to vector<16x8xf32>
    %102 = arith.mulf %100, %101 : vector<16x8xf32>
    %103 = vector.extract_strided_slice %39 {offsets = [0, 24], sizes = [16, 8], strides = [1, 1]} : vector<16x96xf32> to vector<16x8xf32>
    %cst_37 = arith.constant 0.353553385 : f32
    %104 = vector.broadcast %cst_37 : f32 to vector<16x8xf32>
    %105 = arith.mulf %103, %104 : vector<16x8xf32>
    %106 = arith.truncf %105 : vector<16x8xf32> to vector<16x8xbf16>
    %107 = vector.extract_strided_slice %39 {offsets = [0, 56], sizes = [16, 8], strides = [1, 1]} : vector<16x96xf32> to vector<16x8xf32>
    %108 = arith.truncf %107 : vector<16x8xf32> to vector<16x8xbf16>
    %109 = vector.extract_strided_slice %39 {offsets = [0, 88], sizes = [16, 8], strides = [1, 1]} : vector<16x96xf32> to vector<16x8xf32>
    %110 = arith.truncf %109 : vector<16x8xf32> to vector<16x8xbf16>
    %cst_38 = arith.constant dense<0.000000e+00> : vector<16x16xf32>
    %111 = tpu.matmul %106, %108, %cst_38 {dimension_numbers = #tpu.dot_dimension_numbers<[1], [1], [0], [0], [0, 0, 1, 0], [], []>} : vector<16x8xbf16>, vector<16x8xbf16>, vector<16x16xf32> -> vector<16x16xf32>
    %cst_39 = arith.constant dense<0xFF800000> : vector<16xf32>
    %112 = vector.multi_reduction <maximumf>, %111, %cst_39 [1] : vector<16x16xf32> to vector<16xf32>
    %113 = vector.shape_cast %112 : vector<16xf32> to vector<16x1xf32>
    %114 = vector.broadcast %113 : vector<16x1xf32> to vector<16x16xf32>
    %115 = arith.subf %111, %114 : vector<16x16xf32>
    %116 = math.exp %115 : vector<16x16xf32>
    %cst_40 = arith.constant dense<0.000000e+00> : vector<16xf32>
    %117 = vector.multi_reduction <add>, %116, %cst_40 [1] : vector<16x16xf32> to vector<16xf32>
    %118 = vector.shape_cast %117 : vector<16xf32> to vector<16x1xf32>
    %119 = tpu.reciprocal %118 {approx = true} : vector<16x1xf32> -> vector<16x1xf32>
    %120 = arith.truncf %116 : vector<16x16xf32> to vector<16x16xbf16>
    %cst_41 = arith.constant dense<0.000000e+00> : vector<16x8xf32>
    %121 = tpu.matmul %120, %110, %cst_41 {dimension_numbers = #tpu.dot_dimension_numbers<[1], [0], [0], [1], [0, 0, 1, 1], [], []>} : vector<16x16xbf16>, vector<16x8xbf16>, vector<16x8xf32> -> vector<16x8xf32>
    %122 = vector.broadcast %119 : vector<16x1xf32> to vector<16x8xf32>
    %123 = arith.mulf %121, %122 : vector<16x8xf32>
    %124 = tpu.concatenate %60, %81, %102, %123 in 1 : vector<16x8xf32>, vector<16x8xf32>, vector<16x8xf32>, vector<16x8xf32> -> vector<16x32xf32>
    %125 = arith.truncf %124 : vector<16x32xf32> to vector<16x32xbf16>
    %c0_42 = arith.constant 0 : index
    %c0_43 = arith.constant 0 : index
    %126 = vector.load %arg9[%c0_42, %c0_43] : memref<32x32xbf16, #tpu.memory_space<vmem>>, vector<32x32xbf16>
    %cst_44 = arith.constant dense<0.000000e+00> : vector<16x32xf32>
    %127 = tpu.matmul %125, %126, %cst_44 {dimension_numbers = #tpu.dot_dimension_numbers<[1], [0], [0], [1], [0, 0, 1, 1], [], []>} : vector<16x32xbf16>, vector<32x32xbf16>, vector<16x32xf32> -> vector<16x32xf32>
    %c0_45 = arith.constant 0 : index
    %c0_46 = arith.constant 0 : index
    %128 = vector.load %arg10[%c0_45, %c0_46] : memref<1x32xf32, #tpu.memory_space<vmem>>, vector<1x32xf32>
    %129 = vector.broadcast %128 : vector<1x32xf32> to vector<16x32xf32>
    %130 = arith.addf %127, %129 : vector<16x32xf32>
    %131 = arith.addf %9, %130 : vector<16x32xf32>
    %cst_47 = arith.constant dense<0.000000e+00> : vector<16xf32>
    %132 = vector.multi_reduction <add>, %131, %cst_47 [1] : vector<16x32xf32> to vector<16xf32>
    %133 = vector.shape_cast %132 : vector<16xf32> to vector<16x1xf32>
    %cst_48 = arith.constant 3.200000e+01 : f32
    %134 = vector.broadcast %cst_48 : f32 to vector<16x1xf32>
    %135 = arith.divf %133, %134 : vector<16x1xf32>
    %136 = vector.broadcast %135 : vector<16x1xf32> to vector<16x32xf32>
    %137 = arith.subf %131, %136 : vector<16x32xf32>
    %138 = arith.mulf %137, %137 : vector<16x32xf32>
    %cst_49 = arith.constant dense<0.000000e+00> : vector<16xf32>
    %139 = vector.multi_reduction <add>, %138, %cst_49 [1] : vector<16x32xf32> to vector<16xf32>
    %140 = vector.shape_cast %139 : vector<16xf32> to vector<16x1xf32>
    %cst_50 = arith.constant 3.200000e+01 : f32
    %141 = vector.broadcast %cst_50 : f32 to vector<16x1xf32>
    %142 = arith.divf %140, %141 : vector<16x1xf32>
    %143 = vector.broadcast %135 : vector<16x1xf32> to vector<16x32xf32>
    %144 = arith.subf %131, %143 : vector<16x32xf32>
    %cst_51 = arith.constant 9.99999997E-7 : f32
    %145 = vector.broadcast %cst_51 : f32 to vector<16x1xf32>
    %146 = arith.addf %142, %145 : vector<16x1xf32>
    %147 = math.rsqrt %146 : vector<16x1xf32>
    %148 = vector.broadcast %147 : vector<16x1xf32> to vector<16x32xf32>
    %149 = arith.mulf %144, %148 : vector<16x32xf32>
    %c0_52 = arith.constant 0 : index
    %c0_53 = arith.constant 0 : index
    %150 = vector.load %arg11[%c0_52, %c0_53] : memref<1x32xf32, #tpu.memory_space<vmem>>, vector<1x32xf32>
    %151 = vector.broadcast %150 : vector<1x32xf32> to vector<16x32xf32>
    %152 = arith.mulf %149, %151 : vector<16x32xf32>
    %c0_54 = arith.constant 0 : index
    %c0_55 = arith.constant 0 : index
    %153 = vector.load %arg12[%c0_54, %c0_55] : memref<1x32xf32, #tpu.memory_space<vmem>>, vector<1x32xf32>
    %154 = vector.broadcast %153 : vector<1x32xf32> to vector<16x32xf32>
    %155 = arith.addf %152, %154 : vector<16x32xf32>
    %156 = arith.truncf %155 : vector<16x32xf32> to vector<16x32xbf16>
    %c0_56 = arith.constant 0 : index
    %c0_57 = arith.constant 0 : index
    %157 = vector.load %arg13[%c0_56, %c0_57] : memref<32x64xbf16, #tpu.memory_space<vmem>>, vector<32x64xbf16>
    %cst_58 = arith.constant dense<0.000000e+00> : vector<16x64xf32>
    %158 = tpu.matmul %156, %157, %cst_58 {dimension_numbers = #tpu.dot_dimension_numbers<[1], [0], [0], [1], [0, 0, 1, 1], [], []>} : vector<16x32xbf16>, vector<32x64xbf16>, vector<16x64xf32> -> vector<16x64xf32>
    %c0_59 = arith.constant 0 : index
    %c0_60 = arith.constant 0 : index
    %159 = vector.load %arg14[%c0_59, %c0_60] : memref<1x64xf32, #tpu.memory_space<vmem>>, vector<1x64xf32>
    %160 = vector.broadcast %159 : vector<1x64xf32> to vector<16x64xf32>
    %161 = arith.addf %158, %160 : vector<16x64xf32>
    %162 = arith.mulf %161, %161 : vector<16x64xf32>
    %163 = arith.mulf %161, %162 : vector<16x64xf32>
    %cst_61 = arith.constant 4.471500e-02 : f32
    %164 = vector.broadcast %cst_61 : f32 to vector<16x64xf32>
    %165 = arith.mulf %164, %163 : vector<16x64xf32>
    %166 = arith.addf %161, %165 : vector<16x64xf32>
    %cst_62 = arith.constant 0.797884583 : f32
    %167 = vector.broadcast %cst_62 : f32 to vector<16x64xf32>
    %168 = arith.mulf %167, %166 : vector<16x64xf32>
    %169 = math.tanh %168 : vector<16x64xf32>
    %cst_63 = arith.constant 1.000000e+00 : f32
    %170 = vector.broadcast %cst_63 : f32 to vector<16x64xf32>
    %171 = arith.addf %170, %169 : vector<16x64xf32>
    %cst_64 = arith.constant 5.000000e-01 : f32
    %172 = vector.broadcast %cst_64 : f32 to vector<16x64xf32>
    %173 = arith.mulf %172, %171 : vector<16x64xf32>
    %174 = arith.mulf %161, %173 : vector<16x64xf32>
    %175 = arith.truncf %174 : vector<16x64xf32> to vector<16x64xbf16>
    %c0_65 = arith.constant 0 : index
    %c0_66 = arith.constant 0 : index
    %176 = vector.load %arg15[%c0_65, %c0_66] : memref<64x32xbf16, #tpu.memory_space<vmem>>, vector<64x32xbf16>
    %cst_67 = arith.constant dense<0.000000e+00> : vector<16x32xf32>
    %177 = tpu.matmul %175, %176, %cst_67 {dimension_numbers = #tpu.dot_dimension_numbers<[1], [0], [0], [1], [0, 0, 1, 1], [], []>} : vector<16x64xbf16>, vector<64x32xbf16>, vector<16x32xf32> -> vector<16x32xf32>
    %c0_68 = arith.constant 0 : index
    %c0_69 = arith.constant 0 : index
    %178 = vector.load %arg16[%c0_68, %c0_69] : memref<1x32xf32, #tpu.memory_space<vmem>>, vector<1x32xf32>
    %179 = vector.broadcast %178 : vector<1x32xf32> to vector<16x32xf32>
    %180 = arith.addf %177, %179 : vector<16x32xf32>
    %181 = arith.addf %131, %180 : vector<16x32xf32>
    %182 = arith.truncf %181 : vector<16x32xf32> to vector<16x32xbf16>
    %c0_70 = arith.constant 0 : index
    %c0_71 = arith.constant 0 : index
    %183 = vector.load %arg17[%c0_70, %c0_71] : memref<32x256xbf16, #tpu.memory_space<vmem>>, vector<32x256xbf16>
    %cst_72 = arith.constant dense<0.000000e+00> : vector<16x256xf32>
    %184 = tpu.matmul %182, %183, %cst_72 {dimension_numbers = #tpu.dot_dimension_numbers<[1], [0], [0], [1], [0, 0, 1, 1], [], []>} : vector<16x32xbf16>, vector<32x256xbf16>, vector<16x256xf32> -> vector<16x256xf32>
    %cst_73 = arith.constant dense<0.000000e+00> : vector<16xf32>
    %185 = vector.multi_reduction <add>, %184, %cst_73 [1] : vector<16x256xf32> to vector<16xf32>
    %186 = vector.shape_cast %185 : vector<16xf32> to vector<16x1xf32>
    %cst_74 = arith.constant 2.560000e+02 : f32
    %187 = vector.broadcast %cst_74 : f32 to vector<16x1xf32>
    %188 = arith.divf %186, %187 : vector<16x1xf32>
    %189 = vector.broadcast %188 : vector<16x1xf32> to vector<16x256xf32>
    %190 = arith.subf %184, %189 : vector<16x256xf32>
    %191 = arith.mulf %190, %190 : vector<16x256xf32>
    %cst_75 = arith.constant dense<0.000000e+00> : vector<16xf32>
    %192 = vector.multi_reduction <add>, %191, %cst_75 [1] : vector<16x256xf32> to vector<16xf32>
    %193 = vector.shape_cast %192 : vector<16xf32> to vector<16x1xf32>
    %cst_76 = arith.constant 2.560000e+02 : f32
    %194 = vector.broadcast %cst_76 : f32 to vector<16x1xf32>
    %195 = arith.divf %193, %194 : vector<16x1xf32>
    %196 = vector.broadcast %188 : vector<16x1xf32> to vector<16x256xf32>
    %197 = arith.subf %184, %196 : vector<16x256xf32>
    %cst_77 = arith.constant 9.99999997E-7 : f32
    %198 = vector.broadcast %cst_77 : f32 to vector<16x1xf32>
    %199 = arith.addf %195, %198 : vector<16x1xf32>
    %200 = math.rsqrt %199 : vector<16x1xf32>
    %201 = vector.broadcast %200 : vector<16x1xf32> to vector<16x256xf32>
    %202 = arith.mulf %197, %201 : vector<16x256xf32>
    %c0_78 = arith.constant 0 : index
    %c0_79 = arith.constant 0 : index
    %203 = vector.load %arg18[%c0_78, %c0_79] : memref<1x256xf32, #tpu.memory_space<vmem>>, vector<1x256xf32>
    %204 = vector.broadcast %203 : vector<1x256xf32> to vector<16x256xf32>
    %205 = arith.mulf %202, %204 : vector<16x256xf32>
    %c0_80 = arith.constant 0 : index
    %c0_81 = arith.constant 0 : index
    %206 = vector.load %arg19[%c0_80, %c0_81] : memref<1x256xf32, #tpu.memory_space<vmem>>, vector<1x256xf32>
    %207 = vector.broadcast %206 : vector<1x256xf32> to vector<16x256xf32>
    %208 = arith.addf %205, %207 : vector<16x256xf32>
    %cst_82 = arith.constant 0.000000e+00 : f32
    %209 = vector.broadcast %cst_82 : f32 to vector<6x6x256xf32>
    %c0_83 = arith.constant 0 : index
    %c0_84 = arith.constant 0 : index
    %c0_85 = arith.constant 0 : index
    %210 = vector.load %arg28[%c0_83, %c0_84, %c0_85] : memref<6x6x256xf32, #tpu.memory_space<vmem>>, vector<6x6x256xf32>
    tpu.vector_store %arg28[%c0_83, %c0_84, %c0_85], %209 {strides = array<i32>} : memref<6x6x256xf32, #tpu.memory_space<vmem>>, vector<6x6x256xf32>,
    %211 = vector.extract_strided_slice %208 {offsets = [0, 0], sizes = [4, 256], strides = [1, 1]} : vector<16x256xf32> to vector<4x256xf32>
    %c1 = arith.constant 1 : index
    %c1_86 = arith.constant 1 : index
    %c0_87 = arith.constant 0 : index
    %212 = vector.load %arg28[%c1, %c1_86, %c0_87] : memref<6x6x256xf32, #tpu.memory_space<vmem>>, vector<1x4x256xf32>
    %213 = vector.shape_cast %212 : vector<1x4x256xf32> to vector<4x256xf32>
    %214 = vector.shape_cast %211 : vector<4x256xf32> to vector<1x4x256xf32>
    tpu.vector_store %arg28[%c1, %c1_86, %c0_87], %214 {strides = array<i32>} : memref<6x6x256xf32, #tpu.memory_space<vmem>>, vector<1x4x256xf32>,
    %215 = vector.extract_strided_slice %208 {offsets = [4, 0], sizes = [4, 256], strides = [1, 1]} : vector<16x256xf32> to vector<4x256xf32>
    %c2 = arith.constant 2 : index
    %c1_88 = arith.constant 1 : index
    %c0_89 = arith.constant 0 : index
    %216 = vector.load %arg28[%c2, %c1_88, %c0_89] : memref<6x6x256xf32, #tpu.memory_space<vmem>>, vector<1x4x256xf32>
    %217 = vector.shape_cast %216 : vector<1x4x256xf32> to vector<4x256xf32>
    %218 = vector.shape_cast %215 : vector<4x256xf32> to vector<1x4x256xf32>
    tpu.vector_store %arg28[%c2, %c1_88, %c0_89], %218 {strides = array<i32>} : memref<6x6x256xf32, #tpu.memory_space<vmem>>, vector<1x4x256xf32>,
    %219 = vector.extract_strided_slice %208 {offsets = [8, 0], sizes = [4, 256], strides = [1, 1]} : vector<16x256xf32> to vector<4x256xf32>
    %c3 = arith.constant 3 : index
    %c1_90 = arith.constant 1 : index
    %c0_91 = arith.constant 0 : index
    %220 = vector.load %arg28[%c3, %c1_90, %c0_91] : memref<6x6x256xf32, #tpu.memory_space<vmem>>, vector<1x4x256xf32>
    %221 = vector.shape_cast %220 : vector<1x4x256xf32> to vector<4x256xf32>
    %222 = vector.shape_cast %219 : vector<4x256xf32> to vector<1x4x256xf32>
    tpu.vector_store %arg28[%c3, %c1_90, %c0_91], %222 {strides = array<i32>} : memref<6x6x256xf32, #tpu.memory_space<vmem>>, vector<1x4x256xf32>,
    %223 = vector.extract_strided_slice %208 {offsets = [12, 0], sizes = [4, 256], strides = [1, 1]} : vector<16x256xf32> to vector<4x256xf32>
    %c4 = arith.constant 4 : index
    %c1_92 = arith.constant 1 : index
    %c0_93 = arith.constant 0 : index
    %224 = vector.load %arg28[%c4, %c1_92, %c0_93] : memref<6x6x256xf32, #tpu.memory_space<vmem>>, vector<1x4x256xf32>
    %225 = vector.shape_cast %224 : vector<1x4x256xf32> to vector<4x256xf32>
    %226 = vector.shape_cast %223 : vector<4x256xf32> to vector<1x4x256xf32>
    tpu.vector_store %arg28[%c4, %c1_92, %c0_93], %226 {strides = array<i32>} : memref<6x6x256xf32, #tpu.memory_space<vmem>>, vector<1x4x256xf32>,
    %cst_94 = arith.constant 0.000000e+00 : f32
    %227 = vector.broadcast %cst_94 : f32 to vector<16x256xf32>
    %c0_95 = arith.constant 0 : index
    %c0_96 = arith.constant 0 : index
    %c0_97 = arith.constant 0 : index
    %228 = vector.load %arg28[%c0_95, %c0_96, %c0_97] : memref<6x6x256xf32, #tpu.memory_space<vmem>>, vector<1x4x256xf32>
    %229 = vector.shape_cast %228 : vector<1x4x256xf32> to vector<4x256xf32>
    %c1_98 = arith.constant 1 : index
    %c0_99 = arith.constant 0 : index
    %c0_100 = arith.constant 0 : index
    %230 = vector.load %arg28[%c1_98, %c0_99, %c0_100] : memref<6x6x256xf32, #tpu.memory_space<vmem>>, vector<1x4x256xf32>
    %231 = vector.shape_cast %230 : vector<1x4x256xf32> to vector<4x256xf32>
    %c2_101 = arith.constant 2 : index
    %c0_102 = arith.constant 0 : index
    %c0_103 = arith.constant 0 : index
    %232 = vector.load %arg28[%c2_101, %c0_102, %c0_103] : memref<6x6x256xf32, #tpu.memory_space<vmem>>, vector<1x4x256xf32>
    %233 = vector.shape_cast %232 : vector<1x4x256xf32> to vector<4x256xf32>
    %c3_104 = arith.constant 3 : index
    %c0_105 = arith.constant 0 : index
    %c0_106 = arith.constant 0 : index
    %234 = vector.load %arg28[%c3_104, %c0_105, %c0_106] : memref<6x6x256xf32, #tpu.memory_space<vmem>>, vector<1x4x256xf32>
    %235 = vector.shape_cast %234 : vector<1x4x256xf32> to vector<4x256xf32>
    %236 = tpu.concatenate %229, %231, %233, %235 in 0 : vector<4x256xf32>, vector<4x256xf32>, vector<4x256xf32>, vector<4x256xf32> -> vector<16x256xf32>
    %237 = arith.truncf %236 : vector<16x256xf32> to vector<16x256xbf16>
    %c0_107 = arith.constant 0 : index
    %c0_108 = arith.constant 0 : index
    %c0_109 = arith.constant 0 : index
    %238 = vector.load %arg20[%c0_107, %c0_108, %c0_109] : memref<9x256x256xbf16, #tpu.memory_space<vmem>>, vector<1x256x256xbf16>
    %239 = vector.shape_cast %238 : vector<1x256x256xbf16> to vector<256x256xbf16>
    %cst_110 = arith.constant dense<0.000000e+00> : vector<16x256xf32>
    %240 = tpu.matmul %237, %239, %cst_110 {dimension_numbers = #tpu.dot_dimension_numbers<[1], [0], [0], [1], [0, 0, 1, 1], [], []>} : vector<16x256xbf16>, vector<256x256xbf16>, vector<16x256xf32> -> vector<16x256xf32>
    %241 = arith.addf %227, %240 : vector<16x256xf32>
    %c0_111 = arith.constant 0 : index
    %c1_112 = arith.constant 1 : index
    %c0_113 = arith.constant 0 : index
    %242 = vector.load %arg28[%c0_111, %c1_112, %c0_113] : memref<6x6x256xf32, #tpu.memory_space<vmem>>, vector<1x4x256xf32>
    %243 = vector.shape_cast %242 : vector<1x4x256xf32> to vector<4x256xf32>
    %c1_114 = arith.constant 1 : index
    %c1_115 = arith.constant 1 : index
    %c0_116 = arith.constant 0 : index
    %244 = vector.load %arg28[%c1_114, %c1_115, %c0_116] : memref<6x6x256xf32, #tpu.memory_space<vmem>>, vector<1x4x256xf32>
    %245 = vector.shape_cast %244 : vector<1x4x256xf32> to vector<4x256xf32>
    %c2_117 = arith.constant 2 : index
    %c1_118 = arith.constant 1 : index
    %c0_119 = arith.constant 0 : index
    %246 = vector.load %arg28[%c2_117, %c1_118, %c0_119] : memref<6x6x256xf32, #tpu.memory_space<vmem>>, vector<1x4x256xf32>
    %247 = vector.shape_cast %246 : vector<1x4x256xf32> to vector<4x256xf32>
    %c3_120 = arith.constant 3 : index
    %c1_121 = arith.constant 1 : index
    %c0_122 = arith.constant 0 : index
    %248 = vector.load %arg28[%c3_120, %c1_121, %c0_122] : memref<6x6x256xf32, #tpu.memory_space<vmem>>, vector<1x4x256xf32>
    %249 = vector.shape_cast %248 : vector<1x4x256xf32> to vector<4x256xf32>
    %250 = tpu.concatenate %243, %245, %247, %249 in 0 : vector<4x256xf32>, vector<4x256xf32>, vector<4x256xf32>, vector<4x256xf32> -> vector<16x256xf32>
    %251 = arith.truncf %250 : vector<16x256xf32> to vector<16x256xbf16>
    %c1_123 = arith.constant 1 : index
    %c0_124 = arith.constant 0 : index
    %c0_125 = arith.constant 0 : index
    %252 = vector.load %arg20[%c1_123, %c0_124, %c0_125] : memref<9x256x256xbf16, #tpu.memory_space<vmem>>, vector<1x256x256xbf16>
    %253 = vector.shape_cast %252 : vector<1x256x256xbf16> to vector<256x256xbf16>
    %cst_126 = arith.constant dense<0.000000e+00> : vector<16x256xf32>
    %254 = tpu.matmul %251, %253, %cst_126 {dimension_numbers = #tpu.dot_dimension_numbers<[1], [0], [0], [1], [0, 0, 1, 1], [], []>} : vector<16x256xbf16>, vector<256x256xbf16>, vector<16x256xf32> -> vector<16x256xf32>
    %255 = arith.addf %241, %254 : vector<16x256xf32>
    %c0_127 = arith.constant 0 : index
    %c2_128 = arith.constant 2 : index
    %c0_129 = arith.constant 0 : index
    %256 = vector.load %arg28[%c0_127, %c2_128, %c0_129] : memref<6x6x256xf32, #tpu.memory_space<vmem>>, vector<1x4x256xf32>
    %257 = vector.shape_cast %256 : vector<1x4x256xf32> to vector<4x256xf32>
    %c1_130 = arith.constant 1 : index
    %c2_131 = arith.constant 2 : index
    %c0_132 = arith.constant 0 : index
    %258 = vector.load %arg28[%c1_130, %c2_131, %c0_132] : memref<6x6x256xf32, #tpu.memory_space<vmem>>, vector<1x4x256xf32>
    %259 = vector.shape_cast %258 : vector<1x4x256xf32> to vector<4x256xf32>
    %c2_133 = arith.constant 2 : index
    %c2_134 = arith.constant 2 : index
    %c0_135 = arith.constant 0 : index
    %260 = vector.load %arg28[%c2_133, %c2_134, %c0_135] : memref<6x6x256xf32, #tpu.memory_space<vmem>>, vector<1x4x256xf32>
    %261 = vector.shape_cast %260 : vector<1x4x256xf32> to vector<4x256xf32>
    %c3_136 = arith.constant 3 : index
    %c2_137 = arith.constant 2 : index
    %c0_138 = arith.constant 0 : index
    %262 = vector.load %arg28[%c3_136, %c2_137, %c0_138] : memref<6x6x256xf32, #tpu.memory_space<vmem>>, vector<1x4x256xf32>
    %263 = vector.shape_cast %262 : vector<1x4x256xf32> to vector<4x256xf32>
    %264 = tpu.concatenate %257, %259, %261, %263 in 0 : vector<4x256xf32>, vector<4x256xf32>, vector<4x256xf32>, vector<4x256xf32> -> vector<16x256xf32>
    %265 = arith.truncf %264 : vector<16x256xf32> to vector<16x256xbf16>
    %c2_139 = arith.constant 2 : index
    %c0_140 = arith.constant 0 : index
    %c0_141 = arith.constant 0 : index
    %266 = vector.load %arg20[%c2_139, %c0_140, %c0_141] : memref<9x256x256xbf16, #tpu.memory_space<vmem>>, vector<1x256x256xbf16>
    %267 = vector.shape_cast %266 : vector<1x256x256xbf16> to vector<256x256xbf16>
    %cst_142 = arith.constant dense<0.000000e+00> : vector<16x256xf32>
    %268 = tpu.matmul %265, %267, %cst_142 {dimension_numbers = #tpu.dot_dimension_numbers<[1], [0], [0], [1], [0, 0, 1, 1], [], []>} : vector<16x256xbf16>, vector<256x256xbf16>, vector<16x256xf32> -> vector<16x256xf32>
    %269 = arith.addf %255, %268 : vector<16x256xf32>
    %c1_143 = arith.constant 1 : index
    %c0_144 = arith.constant 0 : index
    %c0_145 = arith.constant 0 : index
    %270 = vector.load %arg28[%c1_143, %c0_144, %c0_145] : memref<6x6x256xf32, #tpu.memory_space<vmem>>, vector<1x4x256xf32>
    %271 = vector.shape_cast %270 : vector<1x4x256xf32> to vector<4x256xf32>
    %c2_146 = arith.constant 2 : index
    %c0_147 = arith.constant 0 : index
    %c0_148 = arith.constant 0 : index
    %272 = vector.load %arg28[%c2_146, %c0_147, %c0_148] : memref<6x6x256xf32, #tpu.memory_space<vmem>>, vector<1x4x256xf32>
    %273 = vector.shape_cast %272 : vector<1x4x256xf32> to vector<4x256xf32>
    %c3_149 = arith.constant 3 : index
    %c0_150 = arith.constant 0 : index
    %c0_151 = arith.constant 0 : index
    %274 = vector.load %arg28[%c3_149, %c0_150, %c0_151] : memref<6x6x256xf32, #tpu.memory_space<vmem>>, vector<1x4x256xf32>
    %275 = vector.shape_cast %274 : vector<1x4x256xf32> to vector<4x256xf32>
    %c4_152 = arith.constant 4 : index
    %c0_153 = arith.constant 0 : index
    %c0_154 = arith.constant 0 : index
    %276 = vector.load %arg28[%c4_152, %c0_153, %c0_154] : memref<6x6x256xf32, #tpu.memory_space<vmem>>, vector<1x4x256xf32>
    %277 = vector.shape_cast %276 : vector<1x4x256xf32> to vector<4x256xf32>
    %278 = tpu.concatenate %271, %273, %275, %277 in 0 : vector<4x256xf32>, vector<4x256xf32>, vector<4x256xf32>, vector<4x256xf32> -> vector<16x256xf32>
    %279 = arith.truncf %278 : vector<16x256xf32> to vector<16x256xbf16>
    %c3_155 = arith.constant 3 : index
    %c0_156 = arith.constant 0 : index
    %c0_157 = arith.constant 0 : index
    %280 = vector.load %arg20[%c3_155, %c0_156, %c0_157] : memref<9x256x256xbf16, #tpu.memory_space<vmem>>, vector<1x256x256xbf16>
    %281 = vector.shape_cast %280 : vector<1x256x256xbf16> to vector<256x256xbf16>
    %cst_158 = arith.constant dense<0.000000e+00> : vector<16x256xf32>
    %282 = tpu.matmul %279, %281, %cst_158 {dimension_numbers = #tpu.dot_dimension_numbers<[1], [0], [0], [1], [0, 0, 1, 1], [], []>} : vector<16x256xbf16>, vector<256x256xbf16>, vector<16x256xf32> -> vector<16x256xf32>
    %283 = arith.addf %269, %282 : vector<16x256xf32>
    %c1_159 = arith.constant 1 : index
    %c1_160 = arith.constant 1 : index
    %c0_161 = arith.constant 0 : index
    %284 = vector.load %arg28[%c1_159, %c1_160, %c0_161] : memref<6x6x256xf32, #tpu.memory_space<vmem>>, vector<1x4x256xf32>
    %285 = vector.shape_cast %284 : vector<1x4x256xf32> to vector<4x256xf32>
    %c2_162 = arith.constant 2 : index
    %c1_163 = arith.constant 1 : index
    %c0_164 = arith.constant 0 : index
    %286 = vector.load %arg28[%c2_162, %c1_163, %c0_164] : memref<6x6x256xf32, #tpu.memory_space<vmem>>, vector<1x4x256xf32>
    %287 = vector.shape_cast %286 : vector<1x4x256xf32> to vector<4x256xf32>
    %c3_165 = arith.constant 3 : index
    %c1_166 = arith.constant 1 : index
    %c0_167 = arith.constant 0 : index
    %288 = vector.load %arg28[%c3_165, %c1_166, %c0_167] : memref<6x6x256xf32, #tpu.memory_space<vmem>>, vector<1x4x256xf32>
    %289 = vector.shape_cast %288 : vector<1x4x256xf32> to vector<4x256xf32>
    %c4_168 = arith.constant 4 : index
    %c1_169 = arith.constant 1 : index
    %c0_170 = arith.constant 0 : index
    %290 = vector.load %arg28[%c4_168, %c1_169, %c0_170] : memref<6x6x256xf32, #tpu.memory_space<vmem>>, vector<1x4x256xf32>
    %291 = vector.shape_cast %290 : vector<1x4x256xf32> to vector<4x256xf32>
    %292 = tpu.concatenate %285, %287, %289, %291 in 0 : vector<4x256xf32>, vector<4x256xf32>, vector<4x256xf32>, vector<4x256xf32> -> vector<16x256xf32>
    %293 = arith.truncf %292 : vector<16x256xf32> to vector<16x256xbf16>
    %c4_171 = arith.constant 4 : index
    %c0_172 = arith.constant 0 : index
    %c0_173 = arith.constant 0 : index
    %294 = vector.load %arg20[%c4_171, %c0_172, %c0_173] : memref<9x256x256xbf16, #tpu.memory_space<vmem>>, vector<1x256x256xbf16>
    %295 = vector.shape_cast %294 : vector<1x256x256xbf16> to vector<256x256xbf16>
    %cst_174 = arith.constant dense<0.000000e+00> : vector<16x256xf32>
    %296 = tpu.matmul %293, %295, %cst_174 {dimension_numbers = #tpu.dot_dimension_numbers<[1], [0], [0], [1], [0, 0, 1, 1], [], []>} : vector<16x256xbf16>, vector<256x256xbf16>, vector<16x256xf32> -> vector<16x256xf32>
    %297 = arith.addf %283, %296 : vector<16x256xf32>
    %c1_175 = arith.constant 1 : index
    %c2_176 = arith.constant 2 : index
    %c0_177 = arith.constant 0 : index
    %298 = vector.load %arg28[%c1_175, %c2_176, %c0_177] : memref<6x6x256xf32, #tpu.memory_space<vmem>>, vector<1x4x256xf32>
    %299 = vector.shape_cast %298 : vector<1x4x256xf32> to vector<4x256xf32>
    %c2_178 = arith.constant 2 : index
    %c2_179 = arith.constant 2 : index
    %c0_180 = arith.constant 0 : index
    %300 = vector.load %arg28[%c2_178, %c2_179, %c0_180] : memref<6x6x256xf32, #tpu.memory_space<vmem>>, vector<1x4x256xf32>
    %301 = vector.shape_cast %300 : vector<1x4x256xf32> to vector<4x256xf32>
    %c3_181 = arith.constant 3 : index
    %c2_182 = arith.constant 2 : index
    %c0_183 = arith.constant 0 : index
    %302 = vector.load %arg28[%c3_181, %c2_182, %c0_183] : memref<6x6x256xf32, #tpu.memory_space<vmem>>, vector<1x4x256xf32>
    %303 = vector.shape_cast %302 : vector<1x4x256xf32> to vector<4x256xf32>
    %c4_184 = arith.constant 4 : index
    %c2_185 = arith.constant 2 : index
    %c0_186 = arith.constant 0 : index
    %304 = vector.load %arg28[%c4_184, %c2_185, %c0_186] : memref<6x6x256xf32, #tpu.memory_space<vmem>>, vector<1x4x256xf32>
    %305 = vector.shape_cast %304 : vector<1x4x256xf32> to vector<4x256xf32>
    %306 = tpu.concatenate %299, %301, %303, %305 in 0 : vector<4x256xf32>, vector<4x256xf32>, vector<4x256xf32>, vector<4x256xf32> -> vector<16x256xf32>
    %307 = arith.truncf %306 : vector<16x256xf32> to vector<16x256xbf16>
    %c5 = arith.constant 5 : index
    %c0_187 = arith.constant 0 : index
    %c0_188 = arith.constant 0 : index
    %308 = vector.load %arg20[%c5, %c0_187, %c0_188] : memref<9x256x256xbf16, #tpu.memory_space<vmem>>, vector<1x256x256xbf16>
    %309 = vector.shape_cast %308 : vector<1x256x256xbf16> to vector<256x256xbf16>
    %cst_189 = arith.constant dense<0.000000e+00> : vector<16x256xf32>
    %310 = tpu.matmul %307, %309, %cst_189 {dimension_numbers = #tpu.dot_dimension_numbers<[1], [0], [0], [1], [0, 0, 1, 1], [], []>} : vector<16x256xbf16>, vector<256x256xbf16>, vector<16x256xf32> -> vector<16x256xf32>
    %311 = arith.addf %297, %310 : vector<16x256xf32>
    %c2_190 = arith.constant 2 : index
    %c0_191 = arith.constant 0 : index
    %c0_192 = arith.constant 0 : index
    %312 = vector.load %arg28[%c2_190, %c0_191, %c0_192] : memref<6x6x256xf32, #tpu.memory_space<vmem>>, vector<1x4x256xf32>
    %313 = vector.shape_cast %312 : vector<1x4x256xf32> to vector<4x256xf32>
    %c3_193 = arith.constant 3 : index
    %c0_194 = arith.constant 0 : index
    %c0_195 = arith.constant 0 : index
    %314 = vector.load %arg28[%c3_193, %c0_194, %c0_195] : memref<6x6x256xf32, #tpu.memory_space<vmem>>, vector<1x4x256xf32>
    %315 = vector.shape_cast %314 : vector<1x4x256xf32> to vector<4x256xf32>
    %c4_196 = arith.constant 4 : index
    %c0_197 = arith.constant 0 : index
    %c0_198 = arith.constant 0 : index
    %316 = vector.load %arg28[%c4_196, %c0_197, %c0_198] : memref<6x6x256xf32, #tpu.memory_space<vmem>>, vector<1x4x256xf32>
    %317 = vector.shape_cast %316 : vector<1x4x256xf32> to vector<4x256xf32>
    %c5_199 = arith.constant 5 : index
    %c0_200 = arith.constant 0 : index
    %c0_201 = arith.constant 0 : index
    %318 = vector.load %arg28[%c5_199, %c0_200, %c0_201] : memref<6x6x256xf32, #tpu.memory_space<vmem>>, vector<1x4x256xf32>
    %319 = vector.shape_cast %318 : vector<1x4x256xf32> to vector<4x256xf32>
    %320 = tpu.concatenate %313, %315, %317, %319 in 0 : vector<4x256xf32>, vector<4x256xf32>, vector<4x256xf32>, vector<4x256xf32> -> vector<16x256xf32>
    %321 = arith.truncf %320 : vector<16x256xf32> to vector<16x256xbf16>
    %c6 = arith.constant 6 : index
    %c0_202 = arith.constant 0 : index
    %c0_203 = arith.constant 0 : index
    %322 = vector.load %arg20[%c6, %c0_202, %c0_203] : memref<9x256x256xbf16, #tpu.memory_space<vmem>>, vector<1x256x256xbf16>
    %323 = vector.shape_cast %322 : vector<1x256x256xbf16> to vector<256x256xbf16>
    %cst_204 = arith.constant dense<0.000000e+00> : vector<16x256xf32>
    %324 = tpu.matmul %321, %323, %cst_204 {dimension_numbers = #tpu.dot_dimension_numbers<[1], [0], [0], [1], [0, 0, 1, 1], [], []>} : vector<16x256xbf16>, vector<256x256xbf16>, vector<16x256xf32> -> vector<16x256xf32>
    %325 = arith.addf %311, %324 : vector<16x256xf32>
    %c2_205 = arith.constant 2 : index
    %c1_206 = arith.constant 1 : index
    %c0_207 = arith.constant 0 : index
    %326 = vector.load %arg28[%c2_205, %c1_206, %c0_207] : memref<6x6x256xf32, #tpu.memory_space<vmem>>, vector<1x4x256xf32>
    %327 = vector.shape_cast %326 : vector<1x4x256xf32> to vector<4x256xf32>
    %c3_208 = arith.constant 3 : index
    %c1_209 = arith.constant 1 : index
    %c0_210 = arith.constant 0 : index
    %328 = vector.load %arg28[%c3_208, %c1_209, %c0_210] : memref<6x6x256xf32, #tpu.memory_space<vmem>>, vector<1x4x256xf32>
    %329 = vector.shape_cast %328 : vector<1x4x256xf32> to vector<4x256xf32>
    %c4_211 = arith.constant 4 : index
    %c1_212 = arith.constant 1 : index
    %c0_213 = arith.constant 0 : index
    %330 = vector.load %arg28[%c4_211, %c1_212, %c0_213] : memref<6x6x256xf32, #tpu.memory_space<vmem>>, vector<1x4x256xf32>
    %331 = vector.shape_cast %330 : vector<1x4x256xf32> to vector<4x256xf32>
    %c5_214 = arith.constant 5 : index
    %c1_215 = arith.constant 1 : index
    %c0_216 = arith.constant 0 : index
    %332 = vector.load %arg28[%c5_214, %c1_215, %c0_216] : memref<6x6x256xf32, #tpu.memory_space<vmem>>, vector<1x4x256xf32>
    %333 = vector.shape_cast %332 : vector<1x4x256xf32> to vector<4x256xf32>
    %334 = tpu.concatenate %327, %329, %331, %333 in 0 : vector<4x256xf32>, vector<4x256xf32>, vector<4x256xf32>, vector<4x256xf32> -> vector<16x256xf32>
    %335 = arith.truncf %334 : vector<16x256xf32> to vector<16x256xbf16>
    %c7 = arith.constant 7 : index
    %c0_217 = arith.constant 0 : index
    %c0_218 = arith.constant 0 : index
    %336 = vector.load %arg20[%c7, %c0_217, %c0_218] : memref<9x256x256xbf16, #tpu.memory_space<vmem>>, vector<1x256x256xbf16>
    %337 = vector.shape_cast %336 : vector<1x256x256xbf16> to vector<256x256xbf16>
    %cst_219 = arith.constant dense<0.000000e+00> : vector<16x256xf32>
    %338 = tpu.matmul %335, %337, %cst_219 {dimension_numbers = #tpu.dot_dimension_numbers<[1], [0], [0], [1], [0, 0, 1, 1], [], []>} : vector<16x256xbf16>, vector<256x256xbf16>, vector<16x256xf32> -> vector<16x256xf32>
    %339 = arith.addf %325, %338 : vector<16x256xf32>
    %c2_220 = arith.constant 2 : index
    %c2_221 = arith.constant 2 : index
    %c0_222 = arith.constant 0 : index
    %340 = vector.load %arg28[%c2_220, %c2_221, %c0_222] : memref<6x6x256xf32, #tpu.memory_space<vmem>>, vector<1x4x256xf32>
    %341 = vector.shape_cast %340 : vector<1x4x256xf32> to vector<4x256xf32>
    %c3_223 = arith.constant 3 : index
    %c2_224 = arith.constant 2 : index
    %c0_225 = arith.constant 0 : index
    %342 = vector.load %arg28[%c3_223, %c2_224, %c0_225] : memref<6x6x256xf32, #tpu.memory_space<vmem>>, vector<1x4x256xf32>
    %343 = vector.shape_cast %342 : vector<1x4x256xf32> to vector<4x256xf32>
    %c4_226 = arith.constant 4 : index
    %c2_227 = arith.constant 2 : index
    %c0_228 = arith.constant 0 : index
    %344 = vector.load %arg28[%c4_226, %c2_227, %c0_228] : memref<6x6x256xf32, #tpu.memory_space<vmem>>, vector<1x4x256xf32>
    %345 = vector.shape_cast %344 : vector<1x4x256xf32> to vector<4x256xf32>
    %c5_229 = arith.constant 5 : index
    %c2_230 = arith.constant 2 : index
    %c0_231 = arith.constant 0 : index
    %346 = vector.load %arg28[%c5_229, %c2_230, %c0_231] : memref<6x6x256xf32, #tpu.memory_space<vmem>>, vector<1x4x256xf32>
    %347 = vector.shape_cast %346 : vector<1x4x256xf32> to vector<4x256xf32>
    %348 = tpu.concatenate %341, %343, %345, %347 in 0 : vector<4x256xf32>, vector<4x256xf32>, vector<4x256xf32>, vector<4x256xf32> -> vector<16x256xf32>
    %349 = arith.truncf %348 : vector<16x256xf32> to vector<16x256xbf16>
    %c8 = arith.constant 8 : index
    %c0_232 = arith.constant 0 : index
    %c0_233 = arith.constant 0 : index
    %350 = vector.load %arg20[%c8, %c0_232, %c0_233] : memref<9x256x256xbf16, #tpu.memory_space<vmem>>, vector<1x256x256xbf16>
    %351 = vector.shape_cast %350 : vector<1x256x256xbf16> to vector<256x256xbf16>
    %cst_234 = arith.constant dense<0.000000e+00> : vector<16x256xf32>
    %352 = tpu.matmul %349, %351, %cst_234 {dimension_numbers = #tpu.dot_dimension_numbers<[1], [0], [0], [1], [0, 0, 1, 1], [], []>} : vector<16x256xbf16>, vector<256x256xbf16>, vector<16x256xf32> -> vector<16x256xf32>
    %353 = arith.addf %339, %352 : vector<16x256xf32>
    %cst_235 = arith.constant dense<0.000000e+00> : vector<16xf32>
    %354 = vector.multi_reduction <add>, %353, %cst_235 [1] : vector<16x256xf32> to vector<16xf32>
    %355 = vector.shape_cast %354 : vector<16xf32> to vector<16x1xf32>
    %cst_236 = arith.constant 2.560000e+02 : f32
    %356 = vector.broadcast %cst_236 : f32 to vector<16x1xf32>
    %357 = arith.divf %355, %356 : vector<16x1xf32>
    %358 = vector.broadcast %357 : vector<16x1xf32> to vector<16x256xf32>
    %359 = arith.subf %353, %358 : vector<16x256xf32>
    %360 = arith.mulf %359, %359 : vector<16x256xf32>
    %cst_237 = arith.constant dense<0.000000e+00> : vector<16xf32>
    %361 = vector.multi_reduction <add>, %360, %cst_237 [1] : vector<16x256xf32> to vector<16xf32>
    %362 = vector.shape_cast %361 : vector<16xf32> to vector<16x1xf32>
    %cst_238 = arith.constant 2.560000e+02 : f32
    %363 = vector.broadcast %cst_238 : f32 to vector<16x1xf32>
    %364 = arith.divf %362, %363 : vector<16x1xf32>
    %365 = vector.broadcast %357 : vector<16x1xf32> to vector<16x256xf32>
    %366 = arith.subf %353, %365 : vector<16x256xf32>
    %cst_239 = arith.constant 9.99999997E-7 : f32
    %367 = vector.broadcast %cst_239 : f32 to vector<16x1xf32>
    %368 = arith.addf %364, %367 : vector<16x1xf32>
    %369 = math.rsqrt %368 : vector<16x1xf32>
    %370 = vector.broadcast %369 : vector<16x1xf32> to vector<16x256xf32>
    %371 = arith.mulf %366, %370 : vector<16x256xf32>
    %c0_240 = arith.constant 0 : index
    %c0_241 = arith.constant 0 : index
    %372 = vector.load %arg21[%c0_240, %c0_241] : memref<1x256xf32, #tpu.memory_space<vmem>>, vector<1x256xf32>
    %373 = vector.broadcast %372 : vector<1x256xf32> to vector<16x256xf32>
    %374 = arith.mulf %371, %373 : vector<16x256xf32>
    %c0_242 = arith.constant 0 : index
    %c0_243 = arith.constant 0 : index
    %375 = vector.load %arg22[%c0_242, %c0_243] : memref<1x256xf32, #tpu.memory_space<vmem>>, vector<1x256xf32>
    %376 = vector.broadcast %375 : vector<1x256xf32> to vector<16x256xf32>
    %377 = arith.addf %374, %376 : vector<16x256xf32>
    %378 = arith.truncf %377 : vector<16x256xf32> to vector<16x256xbf16>
    %c0_244 = arith.constant 0 : index
    %c0_245 = arith.constant 0 : index
    %379 = vector.load %arg23[%c0_244, %c0_245] : memref<256x64xbf16, #tpu.memory_space<vmem>>, vector<256x64xbf16>
    %cst_246 = arith.constant dense<0.000000e+00> : vector<16x64xf32>
    %380 = tpu.matmul %378, %379, %cst_246 {dimension_numbers = #tpu.dot_dimension_numbers<[1], [0], [0], [1], [0, 0, 1, 1], [], []>} : vector<16x256xbf16>, vector<256x64xbf16>, vector<16x64xf32> -> vector<16x64xf32>
    %cst_247 = arith.constant 0.000000e+00 : f32
    %381 = vector.broadcast %cst_247 : f32 to vector<16x64xf32>
    %382 = arith.maximumf %380, %381 : vector<16x64xf32>
    %383 = arith.truncf %382 : vector<16x64xf32> to vector<16x64xbf16>
    %c0_248 = arith.constant 0 : index
    %c0_249 = arith.constant 0 : index
    %384 = vector.load %arg24[%c0_248, %c0_249] : memref<64x5xbf16, #tpu.memory_space<vmem>>, vector<64x5xbf16>
    %cst_250 = arith.constant dense<0.000000e+00> : vector<16x5xf32>
    %385 = tpu.matmul %383, %384, %cst_250 {dimension_numbers = #tpu.dot_dimension_numbers<[1], [0], [0], [1], [0, 0, 1, 1], [], []>} : vector<16x64xbf16>, vector<64x5xbf16>, vector<16x5xf32> -> vector<16x5xf32>
    %c0_251 = arith.constant 0 : index
    %c0_252 = arith.constant 0 : index
    %386 = vector.load %arg25[%c0_251, %c0_252] : memref<1x5xf32, #tpu.memory_space<vmem>>, vector<1x5xf32>
    %387 = vector.broadcast %386 : vector<1x5xf32> to vector<16x5xf32>
    %388 = arith.addf %385, %387 : vector<16x5xf32>
    %c0_253 = arith.constant 0 : index
    %c0_254 = arith.constant 0 : index
    %389 = vector.load %arg26[%c0_253, %c0_254] : memref<16x256xf32, #tpu.memory_space<vmem>>, vector<16x256xf32>
    %cst_255 = arith.constant dense<0.000000e+00> : vector<5x256xf32>
    %390 = tpu.matmul %388, %389, %cst_255 {dimension_numbers = #tpu.dot_dimension_numbers<[0], [0], [1], [1], [0, 1, 1, 1], [], []>} : vector<16x5xf32>, vector<16x256xf32>, vector<5x256xf32> -> vector<5x256xf32>
    %c0_256 = arith.constant 0 : index
    %c0_257 = arith.constant 0 : index
    %c0_258 = arith.constant 0 : index
    %391 = vector.load %arg27[%c0_256, %c0_257, %c0_258] : memref<1x5x256xf32, #tpu.memory_space<vmem>>, vector<1x5x256xf32>
    %392 = vector.shape_cast %391 : vector<1x5x256xf32> to vector<5x256xf32>
    %393 = vector.shape_cast %390 : vector<5x256xf32> to vector<1x5x256xf32>
    tpu.vector_store %arg27[%c0_256, %c0_257, %c0_258], %393 {strides = array<i32>} : memref<1x5x256xf32, #tpu.memory_space<vmem>>, vector<1x5x256xf32>,
    return
  }
  func.func @transform_0(%arg0: i32) -> (i32, i32, i32) {
    %c0_i32 = arith.constant 0 : i32
    %c0_i32_0 = arith.constant 0 : i32
    %c0_i32_1 = arith.constant 0 : i32
    return %arg0, %c0_i32, %c0_i32_0 : i32, i32, i32
  }
  func.func @transform_1(%arg0: i32) -> (i32, i32) {
    %c0_i32 = arith.constant 0 : i32
    %c0_i32_0 = arith.constant 0 : i32
    %c0_i32_1 = arith.constant 0 : i32
    return %c0_i32, %c0_i32_0 : i32, i32
  }
  func.func @transform_2(%arg0: i32) -> (i32, i32) {
    %c0_i32 = arith.constant 0 : i32
    %c0_i32_0 = arith.constant 0 : i32
    %c0_i32_1 = arith.constant 0 : i32
    return %c0_i32, %c0_i32_0 : i32, i32
  }
  func.func @transform_3(%arg0: i32) -> (i32, i32) {
    %c0_i32 = arith.constant 0 : i32
    %c0_i32_0 = arith.constant 0 : i32
    %c0_i32_1 = arith.constant 0 : i32
    return %c0_i32, %c0_i32_0 : i32, i32
  }
  func.func @transform_4(%arg0: i32) -> (i32, i32) {
    %c0_i32 = arith.constant 0 : i32
    %c0_i32_0 = arith.constant 0 : i32
    %c0_i32_1 = arith.constant 0 : i32
    return %c0_i32, %c0_i32_0 : i32, i32
  }
  func.func @transform_5(%arg0: i32) -> (i32, i32) {
    %c0_i32 = arith.constant 0 : i32
    %c0_i32_0 = arith.constant 0 : i32
    %c0_i32_1 = arith.constant 0 : i32
    return %c0_i32, %c0_i32_0 : i32, i32
  }
  func.func @transform_6(%arg0: i32) -> (i32, i32) {
    %c0_i32 = arith.constant 0 : i32
    %c0_i32_0 = arith.constant 0 : i32
    %c0_i32_1 = arith.constant 0 : i32
    return %c0_i32, %c0_i32_0 : i32, i32
  }
  func.func @transform_7(%arg0: i32) -> (i32, i32) {
    %c0_i32 = arith.constant 0 : i32
    %c0_i32_0 = arith.constant 0 : i32
    %c0_i32_1 = arith.constant 0 : i32
    return %c0_i32, %c0_i32_0 : i32, i32
  }
  func.func @transform_8(%arg0: i32) -> (i32, i32) {
    %c0_i32 = arith.constant 0 : i32
    %c0_i32_0 = arith.constant 0 : i32
    %c0_i32_1 = arith.constant 0 : i32
    return %c0_i32, %c0_i32_0 : i32, i32
  }
  func.func @transform_9(%arg0: i32) -> (i32, i32) {
    %c0_i32 = arith.constant 0 : i32
    %c0_i32_0 = arith.constant 0 : i32
    %c0_i32_1 = arith.constant 0 : i32
    return %c0_i32, %c0_i32_0 : i32, i32
  }
  func.func @transform_10(%arg0: i32) -> (i32, i32) {
    %c0_i32 = arith.constant 0 : i32
    %c0_i32_0 = arith.constant 0 : i32
    %c0_i32_1 = arith.constant 0 : i32
    return %c0_i32, %c0_i32_0 : i32, i32
  }
  func.func @transform_11(%arg0: i32) -> (i32, i32) {
    %c0_i32 = arith.constant 0 : i32
    %c0_i32_0 = arith.constant 0 : i32
    %c0_i32_1 = arith.constant 0 : i32
    return %c0_i32, %c0_i32_0 : i32, i32
  }
  func.func @transform_12(%arg0: i32) -> (i32, i32) {
    %c0_i32 = arith.constant 0 : i32
    %c0_i32_0 = arith.constant 0 : i32
    %c0_i32_1 = arith.constant 0 : i32
    return %c0_i32, %c0_i32_0 : i32, i32
  }
  func.func @transform_13(%arg0: i32) -> (i32, i32) {
    %c0_i32 = arith.constant 0 : i32
    %c0_i32_0 = arith.constant 0 : i32
    %c0_i32_1 = arith.constant 0 : i32
    return %c0_i32, %c0_i32_0 : i32, i32
  }
  func.func @transform_14(%arg0: i32) -> (i32, i32) {
    %c0_i32 = arith.constant 0 : i32
    %c0_i32_0 = arith.constant 0 : i32
    %c0_i32_1 = arith.constant 0 : i32
    return %c0_i32, %c0_i32_0 : i32, i32
  }
  func.func @transform_15(%arg0: i32) -> (i32, i32) {
    %c0_i32 = arith.constant 0 : i32
    %c0_i32_0 = arith.constant 0 : i32
    %c0_i32_1 = arith.constant 0 : i32
    return %c0_i32, %c0_i32_0 : i32, i32
  }
  func.func @transform_16(%arg0: i32) -> (i32, i32) {
    %c0_i32 = arith.constant 0 : i32
    %c0_i32_0 = arith.constant 0 : i32
    %c0_i32_1 = arith.constant 0 : i32
    return %c0_i32, %c0_i32_0 : i32, i32
  }
  func.func @transform_17(%arg0: i32) -> (i32, i32) {
    %c0_i32 = arith.constant 0 : i32
    %c0_i32_0 = arith.constant 0 : i32
    %c0_i32_1 = arith.constant 0 : i32
    return %c0_i32, %c0_i32_0 : i32, i32
  }
  func.func @transform_18(%arg0: i32) -> (i32, i32) {
    %c0_i32 = arith.constant 0 : i32
    %c0_i32_0 = arith.constant 0 : i32
    %c0_i32_1 = arith.constant 0 : i32
    return %c0_i32, %c0_i32_0 : i32, i32
  }
  func.func @transform_19(%arg0: i32) -> (i32, i32, i32) {
    %c0_i32 = arith.constant 0 : i32
    %c0_i32_0 = arith.constant 0 : i32
    %c0_i32_1 = arith.constant 0 : i32
    %c0_i32_2 = arith.constant 0 : i32
    return %c0_i32, %c0_i32_0, %c0_i32_1 : i32, i32, i32
  }
  func.func @transform_20(%arg0: i32) -> (i32, i32) {
    %c0_i32 = arith.constant 0 : i32
    %c0_i32_0 = arith.constant 0 : i32
    %c0_i32_1 = arith.constant 0 : i32
    return %c0_i32, %c0_i32_0 : i32, i32
  }
  func.func @transform_21(%arg0: i32) -> (i32, i32) {
    %c0_i32 = arith.constant 0 : i32
    %c0_i32_0 = arith.constant 0 : i32
    %c0_i32_1 = arith.constant 0 : i32
    return %c0_i32, %c0_i32_0 : i32, i32
  }
  func.func @transform_22(%arg0: i32) -> (i32, i32) {
    %c0_i32 = arith.constant 0 : i32
    %c0_i32_0 = arith.constant 0 : i32
    %c0_i32_1 = arith.constant 0 : i32
    return %c0_i32, %c0_i32_0 : i32, i32
  }
  func.func @transform_23(%arg0: i32) -> (i32, i32) {
    %c0_i32 = arith.constant 0 : i32
    %c0_i32_0 = arith.constant 0 : i32
    %c0_i32_1 = arith.constant 0 : i32
    return %c0_i32, %c0_i32_0 : i32, i32
  }
  func.func @transform_24(%arg0: i32) -> (i32, i32) {
    %c0_i32 = arith.constant 0 : i32
    %c0_i32_0 = arith.constant 0 : i32
    %c0_i32_1 = arith.constant 0 : i32
    return %c0_i32, %c0_i32_0 : i32, i32
  }
  func.func @transform_25(%arg0: i32) -> (i32, i32) {
    %c0_i32 = arith.constant 0 : i32
    %c0_i32_0 = arith.constant 0 : i32
    %c0_i32_1 = arith.constant 0 : i32
    return %c0_i32, %c0_i32_0 : i32, i32
  }
  func.func @transform_26(%arg0: i32) -> (i32, i32, i32) {
    %c0_i32 = arith.constant 0 : i32
    %c0_i32_0 = arith.constant 0 : i32
    %c0_i32_1 = arith.constant 0 : i32
    return %arg0, %c0_i32, %c0_i32_0 : i32, i32, i32
  }
}

</mosaic_0001>

<llo_original>
// kernel: vit_cnn_forward.1
$region0: #{vit_cnn_forward.1}
  #allocation0 [shape = 'u32[]', space=smem, size = 0x4, offset = 0x4, fixed_abs, tag = 'smem constant byte address 0x4 - core index']
  #allocation1 [shape = 'u32[144,128]{1,0:T(1,128)}', space=vmem, size = 0x12000, scoped, tag = 'internal scratch']
  #allocation2 [shape = 'f32[6,6,256]{2,1,0:T(8,128)}', space=vmem, size = 0xc000, scoped, tag = 'scratch operand']
  %s0 = inlined_call_operand.vmem [shape: f32[2,16,192], index: 0, kind: input, shape index: {}]
  %s1 = inlined_call_operand.vmem [shape: bf16[192,32], index: 1, kind: input, shape index: {}]
  %s2 = inlined_call_operand.vmem [shape: f32[1,32], index: 2, kind: input, shape index: {}]
  %s3 = inlined_call_operand.vmem [shape: f32[16,32], index: 3, kind: input, shape index: {}]
  %s4 = inlined_call_operand.vmem [shape: f32[1,32], index: 4, kind: input, shape index: {}]
  %s5 = inlined_call_operand.vmem [shape: f32[1,32], index: 5, kind: input, shape index: {}]
  %s6 = inlined_call_operand.vmem [shape: bf16[32,96], index: 6, kind: input, shape index: {}]
  %s7 = inlined_call_operand.vmem [shape: f32[1,96], index: 7, kind: input, shape index: {}]
  %s8 = inlined_call_operand.vmem [shape: bf16[32,32], index: 8, kind: input, shape index: {}]
  %s9 = inlined_call_operand.vmem [shape: f32[1,32], index: 9, kind: input, shape index: {}]
  %s10 = inlined_call_operand.vmem [shape: f32[1,32], index: 10, kind: input, shape index: {}]
  %s11 = inlined_call_operand.vmem [shape: f32[1,32], index: 11, kind: input, shape index: {}]
  %s12 = inlined_call_operand.vmem [shape: bf16[32,64], index: 12, kind: input, shape index: {}]
  %s13 = inlined_call_operand.vmem [shape: f32[1,64], index: 13, kind: input, shape index: {}]
  %s14 = inlined_call_operand.vmem [shape: bf16[64,32], index: 14, kind: input, shape index: {}]
  %s15 = inlined_call_operand.vmem [shape: f32[1,32], index: 15, kind: input, shape index: {}]
  %s16 = inlined_call_operand.vmem [shape: bf16[32,256], index: 16, kind: input, shape index: {}]
  %s17 = inlined_call_operand.vmem [shape: f32[1,256], index: 17, kind: input, shape index: {}]
  %s18 = inlined_call_operand.vmem [shape: f32[1,256], index: 18, kind: input, shape index: {}]
  %s19 = inlined_call_operand.vmem [shape: bf16[9,256,256], index: 19, kind: input, shape index: {}]
  %s20 = inlined_call_operand.vmem [shape: f32[1,256], index: 20, kind: input, shape index: {}]
  %s21 = inlined_call_operand.vmem [shape: f32[1,256], index: 21, kind: input, shape index: {}]
  %s22 = inlined_call_operand.vmem [shape: bf16[256,64], index: 22, kind: input, shape index: {}]
  %s23 = inlined_call_operand.vmem [shape: bf16[64,5], index: 23, kind: input, shape index: {}]
  %s24 = inlined_call_operand.vmem [shape: f32[1,5], index: 24, kind: input, shape index: {}]
  %s25 = inlined_call_operand.vmem [shape: f32[16,256], index: 25, kind: input, shape index: {}]
  %s26 = inlined_call_operand.vmem [shape: f32[2,5,256], index: 26, kind: output, shape index: {}]
  %s27 = sld [smem:[#allocation0]]
  $region137: #{vit_cnn_forward.1} parent=0
    _
  %s29 = ssub.s32 1, %s27
  %s30 = scalar_select 0, %s29, %s27
  loop: start=0, step=1, limit=4
  $region2: #{vit_cnn_forward.1} parent=0 // loop_pre_header
    _
  $region3: #{vit_cnn_forward.1} parent=0 // loop_header
    %s32 = sphi 0, %s36
    %p33 = scmp.ge.s32.totalorder %s32, 4
    %s42 = sphi 0, %s44
    %s45 = sphi 0, %s42
    %s46 = sphi 0, %s45
    %s62 = sphi 0, %s46
    %s66 = sphi 0, %s66
    %s68 = sphi 0, %s66
    %s69 = sphi 0, %s68
    %s83 = sphi 0, %s69
    %s87 = sphi 0, %s87
    %s89 = sphi 0, %s87
    %s90 = sphi 0, %s89
    %s104 = sphi 0, %s90
    %s108 = sphi 0, %s108
    %s110 = sphi 0, %s108
    %s111 = sphi 0, %s110
    %s125 = sphi 0, %s111
    %s129 = sphi 0, %s129
    %s131 = sphi 0, %s129
    %s132 = sphi 0, %s131
    %s146 = sphi 0, %s132
    %s150 = sphi 0, %s150
    %s152 = sphi 0, %s150
    %s153 = sphi 0, %s152
    %s167 = sphi 0, %s153
    %s171 = sphi 0, %s171
    %s173 = sphi 0, %s171
    %s174 = sphi 0, %s173
    %s188 = sphi 0, %s174
    %s192 = sphi 0, %s192
    %s194 = sphi 0, %s192
    %s195 = sphi 0, %s194
    %s209 = sphi 0, %s195
    %s213 = sphi 0, %s213
    %s215 = sphi 0, %s213
    %s216 = sphi 0, %s215
    %s230 = sphi 0, %s216
    %s234 = sphi 0, %s234
    %s236 = sphi 0, %s234
    %s237 = sphi 0, %s236
    %s251 = sphi 0, %s237
    %s255 = sphi 0, %s255
    %s257 = sphi 0, %s255
    %s258 = sphi 0, %s257
    %s272 = sphi 0, %s258
    %s276 = sphi 0, %s276
    %s278 = sphi 0, %s276
    %s279 = sphi 0, %s278
    %s293 = sphi 0, %s279
    %s297 = sphi 0, %s297
    %s299 = sphi 0, %s297
    %s300 = sphi 0, %s299
    %s314 = sphi 0, %s300
    %s318 = sphi 0, %s318
    %s320 = sphi 0, %s318
    %s321 = sphi 0, %s320
    %s335 = sphi 0, %s321
    %s339 = sphi 0, %s339
    %s341 = sphi 0, %s339
    %s342 = sphi 0, %s341
    %s356 = sphi 0, %s342
    %s360 = sphi 0, %s360
    %s362 = sphi 0, %s360
    %s363 = sphi 0, %s362
    %s377 = sphi 0, %s363
    %s381 = sphi 0, %s381
    %s383 = sphi 0, %s381
    %s384 = sphi 0, %s383
    %s398 = sphi 0, %s384
    %s402 = sphi 0, %s402
    %s404 = sphi 0, %s402
    %s405 = sphi 0, %s404
    %s419 = sphi 0, %s405
    %s423 = sphi 0, %s423
    %s425 = sphi 0, %s423
    %s426 = sphi 0, %s425
    %s440 = sphi 0, %s426
    %s444 = sphi 0, %s444
    %s446 = sphi 0, %s444
    %s447 = sphi 0, %s446
    %s461 = sphi 0, %s447
    %s465 = sphi 0, %s465
    %s467 = sphi 0, %s465
    %s468 = sphi 0, %s467
    %s482 = sphi 0, %s468
    %s486 = sphi 0, %s486
    %s488 = sphi 0, %s486
    %s489 = sphi 0, %s488
    %s503 = sphi 0, %s489
    %s507 = sphi 0, %s507
    %s509 = sphi 0, %s507
    %s510 = sphi 0, %s509
    %s524 = sphi 0, %s510
    %s528 = sphi 0, %s528
    %s530 = sphi 0, %s528
    %s531 = sphi 0, %s530
    %s545 = sphi 0, %s531
    %s549 = sphi 0, %s549
    %s551 = sphi 0, %s549
    %s552 = sphi 0, %s551
    %s566 = sphi 0, %s552
    %s570 = sphi 0, %s570
    %s572 = sphi 0, %s570
    %s573 = sphi 0, %s572
    %s587 = sphi 0, %s573
    %s593 = sphi 0, %s595
    %s596 = sphi 0, %s593
    %s597 = sphi 0, %s596
    %s613 = sphi 0, %s597
  $region4: #{vit_cnn_forward.1} parent=0 // loop_header_branch
    %35 = sbr.rel (%p33) target = $region8
  $region5: #{vit_cnn_forward.1} parent=0 // loop_body
    %s37 = ssub.s32 %s32, 1
    %s38 = ssub.s32 %s32, 2
    %s39 = sadd.s32 %s32, 1
    %s40 = ssub.s32 %s32, %s39
    %p41 = scmp.eq.s32.totalorder %s40, 0
    %s43 = sadd.s32 %s42, 1
    %s44 = scalar_select %p41, %s42, %s43
    %p47 = pneg %p41
    %p48 = scmp.eq.s32.totalorder %s32, 1
    %p49 = por %p47, %p48
    %p50 = scmp.ne.s32.totalorder %s42, %s45
    %p51 = scmp.eq.s32.totalorder %s32, 0
    %p52 = por %p50, %p51
    %p53 = scmp.ne.s32.totalorder %s42, %s45
    %p54 = scmp.eq.s32.totalorder %s37, 1
    %p55 = por %p53, %p54
    %p56 = scmp.ne.s32.totalorder %s45, %s46
    %p57 = scmp.eq.s32.totalorder %s37, 0
    %p58 = por %p56, %p57
    %p59 = scmp.ne.s32.totalorder %s45, %s46
    %p60 = scmp.eq.s32.totalorder %s38, 1
    %p61 = por %p59, %p60
    %p63 = scmp.ne.s32.totalorder %s46, %s62
    %p64 = scmp.eq.s32.totalorder %s38, 0
    %p65 = por %p63, %p64
    %s67 = sadd.s32 %s66, 1
    %p70 = scmp.eq.s32.totalorder %s32, 1
    %p71 = scmp.ne.s32.totalorder %s66, %s68
    %p72 = scmp.eq.s32.totalorder %s32, 0
    %p73 = por %p71, %p72
    %p74 = scmp.ne.s32.totalorder %s66, %s68
    %p75 = scmp.eq.s32.totalorder %s37, 1
    %p76 = por %p74, %p75
    %p77 = scmp.ne.s32.totalorder %s68, %s69
    %p78 = scmp.eq.s32.totalorder %s37, 0
    %p79 = por %p77, %p78
    %p80 = scmp.ne.s32.totalorder %s68, %s69
    %p81 = scmp.eq.s32.totalorder %s38, 1
    %p82 = por %p80, %p81
    %p84 = scmp.ne.s32.totalorder %s69, %s83
    %p85 = scmp.eq.s32.totalorder %s38, 0
    %p86 = por %p84, %p85
    %s88 = sadd.s32 %s87, 1
    %p91 = scmp.eq.s32.totalorder %s32, 1
    %p92 = scmp.ne.s32.totalorder %s87, %s89
    %p93 = scmp.eq.s32.totalorder %s32, 0
    %p94 = por %p92, %p93
    %p95 = scmp.ne.s32.totalorder %s87, %s89
    %p96 = scmp.eq.s32.totalorder %s37, 1
    %p97 = por %p95, %p96
    %p98 = scmp.ne.s32.totalorder %s89, %s90
    %p99 = scmp.eq.s32.totalorder %s37, 0
    %p100 = por %p98, %p99
    %p101 = scmp.ne.s32.totalorder %s89, %s90
    %p102 = scmp.eq.s32.totalorder %s38, 1
    %p103 = por %p101, %p102
    %p105 = scmp.ne.s32.totalorder %s90, %s104
    %p106 = scmp.eq.s32.totalorder %s38, 0
    %p107 = por %p105, %p106
    %s109 = sadd.s32 %s108, 1
    %p112 = scmp.eq.s32.totalorder %s32, 1
    %p113 = scmp.ne.s32.totalorder %s108, %s110
    %p114 = scmp.eq.s32.totalorder %s32, 0
    %p115 = por %p113, %p114
    %p116 = scmp.ne.s32.totalorder %s108, %s110
    %p117 = scmp.eq.s32.totalorder %s37, 1
    %p118 = por %p116, %p117
    %p119 = scmp.ne.s32.totalorder %s110, %s111
    %p120 = scmp.eq.s32.totalorder %s37, 0
    %p121 = por %p119, %p120
    %p122 = scmp.ne.s32.totalorder %s110, %s111
    %p123 = scmp.eq.s32.totalorder %s38, 1
    %p124 = por %p122, %p123
    %p126 = scmp.ne.s32.totalorder %s111, %s125
    %p127 = scmp.eq.s32.totalorder %s38, 0
    %p128 = por %p126, %p127
    %s130 = sadd.s32 %s129, 1
    %p133 = scmp.eq.s32.totalorder %s32, 1
    %p134 = scmp.ne.s32.totalorder %s129, %s131
    %p135 = scmp.eq.s32.totalorder %s32, 0
    %p136 = por %p134, %p135
    %p137 = scmp.ne.s32.totalorder %s129, %s131
    %p138 = scmp.eq.s32.totalorder %s37, 1
    %p139 = por %p137, %p138
    %p140 = scmp.ne.s32.totalorder %s131, %s132
    %p141 = scmp.eq.s32.totalorder %s37, 0
    %p142 = por %p140, %p141
    %p143 = scmp.ne.s32.totalorder %s131, %s132
    %p144 = scmp.eq.s32.totalorder %s38, 1
    %p145 = por %p143, %p144
    %p147 = scmp.ne.s32.totalorder %s132, %s146
    %p148 = scmp.eq.s32.totalorder %s38, 0
    %p149 = por %p147, %p148
    %s151 = sadd.s32 %s150, 1
    %p154 = scmp.eq.s32.totalorder %s32, 1
    %p155 = scmp.ne.s32.totalorder %s150, %s152
    %p156 = scmp.eq.s32.totalorder %s32, 0
    %p157 = por %p155, %p156
    %p158 = scmp.ne.s32.totalorder %s150, %s152
    %p159 = scmp.eq.s32.totalorder %s37, 1
    %p160 = por %p158, %p159
    %p161 = scmp.ne.s32.totalorder %s152, %s153
    %p162 = scmp.eq.s32.totalorder %s37, 0
    %p163 = por %p161, %p162
    %p164 = scmp.ne.s32.totalorder %s152, %s153
    %p165 = scmp.eq.s32.totalorder %s38, 1
    %p166 = por %p164, %p165
    %p168 = scmp.ne.s32.totalorder %s153, %s167
    %p169 = scmp.eq.s32.totalorder %s38, 0
    %p170 = por %p168, %p169
    %s172 = sadd.s32 %s171, 1
    %p175 = scmp.eq.s32.totalorder %s32, 1
    %p176 = scmp.ne.s32.totalorder %s171, %s173
    %p177 = scmp.eq.s32.totalorder %s32, 0
    %p178 = por %p176, %p177
    %p179 = scmp.ne.s32.totalorder %s171, %s173
    %p180 = scmp.eq.s32.totalorder %s37, 1
    %p181 = por %p179, %p180
    %p182 = scmp.ne.s32.totalorder %s173, %s174
    %p183 = scmp.eq.s32.totalorder %s37, 0
    %p184 = por %p182, %p183
    %p185 = scmp.ne.s32.totalorder %s173, %s174
    %p186 = scmp.eq.s32.totalorder %s38, 1
    %p187 = por %p185, %p186
    %p189 = scmp.ne.s32.totalorder %s174, %s188
    %p190 = scmp.eq.s32.totalorder %s38, 0
    %p191 = por %p189, %p190
    %s193 = sadd.s32 %s192, 1
    %p196 = scmp.eq.s32.totalorder %s32, 1
    %p197 = scmp.ne.s32.totalorder %s192, %s194
    %p198 = scmp.eq.s32.totalorder %s32, 0
    %p199 = por %p197, %p198
    %p200 = scmp.ne.s32.totalorder %s192, %s194
    %p201 = scmp.eq.s32.totalorder %s37, 1
    %p202 = por %p200, %p201
    %p203 = scmp.ne.s32.totalorder %s194, %s195
    %p204 = scmp.eq.s32.totalorder %s37, 0
    %p205 = por %p203, %p204
    %p206 = scmp.ne.s32.totalorder %s194, %s195
    %p207 = scmp.eq.s32.totalorder %s38, 1
    %p208 = por %p206, %p207
    %p210 = scmp.ne.s32.totalorder %s195, %s209
    %p211 = scmp.eq.s32.totalorder %s38, 0
    %p212 = por %p210, %p211
    %s214 = sadd.s32 %s213, 1
    %p217 = scmp.eq.s32.totalorder %s32, 1
    %p218 = scmp.ne.s32.totalorder %s213, %s215
    %p219 = scmp.eq.s32.totalorder %s32, 0
    %p220 = por %p218, %p219
    %p221 = scmp.ne.s32.totalorder %s213, %s215
    %p222 = scmp.eq.s32.totalorder %s37, 1
    %p223 = por %p221, %p222
    %p224 = scmp.ne.s32.totalorder %s215, %s216
    %p225 = scmp.eq.s32.totalorder %s37, 0
    %p226 = por %p224, %p225
    %p227 = scmp.ne.s32.totalorder %s215, %s216
    %p228 = scmp.eq.s32.totalorder %s38, 1
    %p229 = por %p227, %p228
    %p231 = scmp.ne.s32.totalorder %s216, %s230
    %p232 = scmp.eq.s32.totalorder %s38, 0
    %p233 = por %p231, %p232
    %s235 = sadd.s32 %s234, 1
    %p238 = scmp.eq.s32.totalorder %s32, 1
    %p239 = scmp.ne.s32.totalorder %s234, %s236
    %p240 = scmp.eq.s32.totalorder %s32, 0
    %p241 = por %p239, %p240
    %p242 = scmp.ne.s32.totalorder %s234, %s236
    %p243 = scmp.eq.s32.totalorder %s37, 1
    %p244 = por %p242, %p243
    %p245 = scmp.ne.s32.totalorder %s236, %s237
    %p246 = scmp.eq.s32.totalorder %s37, 0
    %p247 = por %p245, %p246
    %p248 = scmp.ne.s32.totalorder %s236, %s237
    %p249 = scmp.eq.s32.totalorder %s38, 1
    %p250 = por %p248, %p249
    %p252 = scmp.ne.s32.totalorder %s237, %s251
    %p253 = scmp.eq.s32.totalorder %s38, 0
    %p254 = por %p252, %p253
    %s256 = sadd.s32 %s255, 1
    %p259 = scmp.eq.s32.totalorder %s32, 1
    %p260 = scmp.ne.s32.totalorder %s255, %s257
    %p261 = scmp.eq.s32.totalorder %s32, 0
    %p262 = por %p260, %p261
    %p263 = scmp.ne.s32.totalorder %s255, %s257
    %p264 = scmp.eq.s32.totalorder %s37, 1
    %p265 = por %p263, %p264
    %p266 = scmp.ne.s32.totalorder %s257, %s258
    %p267 = scmp.eq.s32.totalorder %s37, 0
    %p268 = por %p266, %p267
    %p269 = scmp.ne.s32.totalorder %s257, %s258
    %p270 = scmp.eq.s32.totalorder %s38, 1
    %p271 = por %p269, %p270
    %p273 = scmp.ne.s32.totalorder %s258, %s272
    %p274 = scmp.eq.s32.totalorder %s38, 0
    %p275 = por %p273, %p274
    %s277 = sadd.s32 %s276, 1
    %p280 = scmp.eq.s32.totalorder %s32, 1
    %p281 = scmp.ne.s32.totalorder %s276, %s278
    %p282 = scmp.eq.s32.totalorder %s32, 0
    %p283 = por %p281, %p282
    %p284 = scmp.ne.s32.totalorder %s276, %s278
    %p285 = scmp.eq.s32.totalorder %s37, 1
    %p286 = por %p284, %p285
    %p287 = scmp.ne.s32.totalorder %s278, %s279
    %p288 = scmp.eq.s32.totalorder %s37, 0
    %p289 = por %p287, %p288
    %p290 = scmp.ne.s32.totalorder %s278, %s279
    %p291 = scmp.eq.s32.totalorder %s38, 1
    %p292 = por %p290, %p291
    %p294 = scmp.ne.s32.totalorder %s279, %s293
    %p295 = scmp.eq.s32.totalorder %s38, 0
    %p296 = por %p294, %p295
    %s298 = sadd.s32 %s297, 1
    %p301 = scmp.eq.s32.totalorder %s32, 1
    %p302 = scmp.ne.s32.totalorder %s297, %s299
    %p303 = scmp.eq.s32.totalorder %s32, 0
    %p304 = por %p302, %p303
    %p305 = scmp.ne.s32.totalorder %s297, %s299
    %p306 = scmp.eq.s32.totalorder %s37, 1
    %p307 = por %p305, %p306
    %p308 = scmp.ne.s32.totalorder %s299, %s300
    %p309 = scmp.eq.s32.totalorder %s37, 0
    %p310 = por %p308, %p309
    %p311 = scmp.ne.s32.totalorder %s299, %s300
    %p312 = scmp.eq.s32.totalorder %s38, 1
    %p313 = por %p311, %p312
    %p315 = scmp.ne.s32.totalorder %s300, %s314
    %p316 = scmp.eq.s32.totalorder %s38, 0
    %p317 = por %p315, %p316
    %s319 = sadd.s32 %s318, 1
    %p322 = scmp.eq.s32.totalorder %s32, 1
    %p323 = scmp.ne.s32.totalorder %s318, %s320
    %p324 = scmp.eq.s32.totalorder %s32, 0
    %p325 = por %p323, %p324
    %p326 = scmp.ne.s32.totalorder %s318, %s320
    %p327 = scmp.eq.s32.totalorder %s37, 1
    %p328 = por %p326, %p327
    %p329 = scmp.ne.s32.totalorder %s320, %s321
    %p330 = scmp.eq.s32.totalorder %s37, 0
    %p331 = por %p329, %p330
    %p332 = scmp.ne.s32.totalorder %s320, %s321
    %p333 = scmp.eq.s32.totalorder %s38, 1
    %p334 = por %p332, %p333
    %p336 = scmp.ne.s32.totalorder %s321, %s335
    %p337 = scmp.eq.s32.totalorder %s38, 0
    %p338 = por %p336, %p337
    %s340 = sadd.s32 %s339, 1
    %p343 = scmp.eq.s32.totalorder %s32, 1
    %p344 = scmp.ne.s32.totalorder %s339, %s341
    %p345 = scmp.eq.s32.totalorder %s32, 0
    %p346 = por %p344, %p345
    %p347 = scmp.ne.s32.totalorder %s339, %s341
    %p348 = scmp.eq.s32.totalorder %s37, 1
    %p349 = por %p347, %p348
    %p350 = scmp.ne.s32.totalorder %s341, %s342
    %p351 = scmp.eq.s32.totalorder %s37, 0
    %p352 = por %p350, %p351
    %p353 = scmp.ne.s32.totalorder %s341, %s342
    %p354 = scmp.eq.s32.totalorder %s38, 1
    %p355 = por %p353, %p354
    %p357 = scmp.ne.s32.totalorder %s342, %s356
    %p358 = scmp.eq.s32.totalorder %s38, 0
    %p359 = por %p357, %p358
    %s361 = sadd.s32 %s360, 1
    %p364 = scmp.eq.s32.totalorder %s32, 1
    %p365 = scmp.ne.s32.totalorder %s360, %s362
    %p366 = scmp.eq.s32.totalorder %s32, 0
    %p367 = por %p365, %p366
    %p368 = scmp.ne.s32.totalorder %s360, %s362
    %p369 = scmp.eq.s32.totalorder %s37, 1
    %p370 = por %p368, %p369
    %p371 = scmp.ne.s32.totalorder %s362, %s363
    %p372 = scmp.eq.s32.totalorder %s37, 0
    %p373 = por %p371, %p372
    %p374 = scmp.ne.s32.totalorder %s362, %s363
    %p375 = scmp.eq.s32.totalorder %s38, 1
    %p376 = por %p374, %p375
    %p378 = scmp.ne.s32.totalorder %s363, %s377
    %p379 = scmp.eq.s32.totalorder %s38, 0
    %p380 = por %p378, %p379
    %s382 = sadd.s32 %s381, 1
    %p385 = scmp.eq.s32.totalorder %s32, 1
    %p386 = scmp.ne.s32.totalorder %s381, %s383
    %p387 = scmp.eq.s32.totalorder %s32, 0
    %p388 = por %p386, %p387
    %p389 = scmp.ne.s32.totalorder %s381, %s383
    %p390 = scmp.eq.s32.totalorder %s37, 1
    %p391 = por %p389, %p390
    %p392 = scmp.ne.s32.totalorder %s383, %s384
    %p393 = scmp.eq.s32.totalorder %s37, 0
    %p394 = por %p392, %p393
    %p395 = scmp.ne.s32.totalorder %s383, %s384
    %p396 = scmp.eq.s32.totalorder %s38, 1
    %p397 = por %p395, %p396
    %p399 = scmp.ne.s32.totalorder %s384, %s398
    %p400 = scmp.eq.s32.totalorder %s38, 0
    %p401 = por %p399, %p400
    %s403 = sadd.s32 %s402, 1
    %p406 = scmp.eq.s32.totalorder %s32, 1
    %p407 = scmp.ne.s32.totalorder %s402, %s404
    %p408 = scmp.eq.s32.totalorder %s32, 0
    %p409 = por %p407, %p408
    %p410 = scmp.ne.s32.totalorder %s402, %s404
    %p411 = scmp.eq.s32.totalorder %s37, 1
    %p412 = por %p410, %p411
    %p413 = scmp.ne.s32.totalorder %s404, %s405
    %p414 = scmp.eq.s32.totalorder %s37, 0
    %p415 = por %p413, %p414
    %p416 = scmp.ne.s32.totalorder %s404, %s405
    %p417 = scmp.eq.s32.totalorder %s38, 1
    %p418 = por %p416, %p417
    %p420 = scmp.ne.s32.totalorder %s405, %s419
    %p421 = scmp.eq.s32.totalorder %s38, 0
    %p422 = por %p420, %p421
    %s424 = sadd.s32 %s423, 1
    %p427 = scmp.eq.s32.totalorder %s32, 1
    %p428 = scmp.ne.s32.totalorder %s423, %s425
    %p429 = scmp.eq.s32.totalorder %s32, 0
    %p430 = por %p428, %p429
    %p431 = scmp.ne.s32.totalorder %s423, %s425
    %p432 = scmp.eq.s32.totalorder %s37, 1
    %p433 = por %p431, %p432
    %p434 = scmp.ne.s32.totalorder %s425, %s426
    %p435 = scmp.eq.s32.totalorder %s37, 0
    %p436 = por %p434, %p435
    %p437 = scmp.ne.s32.totalorder %s425, %s426
    %p438 = scmp.eq.s32.totalorder %s38, 1
    %p439 = por %p437, %p438
    %p441 = scmp.ne.s32.totalorder %s426, %s440
    %p442 = scmp.eq.s32.totalorder %s38, 0
    %p443 = por %p441, %p442
    %s445 = sadd.s32 %s444, 1
    %p448 = scmp.eq.s32.totalorder %s32, 1
    %p449 = scmp.ne.s32.totalorder %s444, %s446
    %p450 = scmp.eq.s32.totalorder %s32, 0
    %p451 = por %p449, %p450
    %p452 = scmp.ne.s32.totalorder %s444, %s446
    %p453 = scmp.eq.s32.totalorder %s37, 1
    %p454 = por %p452, %p453
    %p455 = scmp.ne.s32.totalorder %s446, %s447
    %p456 = scmp.eq.s32.totalorder %s37, 0
    %p457 = por %p455, %p456
    %p458 = scmp.ne.s32.totalorder %s446, %s447
    %p459 = scmp.eq.s32.totalorder %s38, 1
    %p460 = por %p458, %p459
    %p462 = scmp.ne.s32.totalorder %s447, %s461
    %p463 = scmp.eq.s32.totalorder %s38, 0
    %p464 = por %p462, %p463
    %s466 = sadd.s32 %s465, 1
    %p469 = scmp.eq.s32.totalorder %s32, 1
    %p470 = scmp.ne.s32.totalorder %s465, %s467
    %p471 = scmp.eq.s32.totalorder %s32, 0
    %p472 = por %p470, %p471
    %p473 = scmp.ne.s32.totalorder %s465, %s467
    %p474 = scmp.eq.s32.totalorder %s37, 1
    %p475 = por %p473, %p474
    %p476 = scmp.ne.s32.totalorder %s467, %s468
    %p477 = scmp.eq.s32.totalorder %s37, 0
    %p478 = por %p476, %p477
    %p479 = scmp.ne.s32.totalorder %s467, %s468
    %p480 = scmp.eq.s32.totalorder %s38, 1
    %p481 = por %p479, %p480
    %p483 = scmp.ne.s32.totalorder %s468, %s482
    %p484 = scmp.eq.s32.totalorder %s38, 0
    %p485 = por %p483, %p484
    %s487 = sadd.s32 %s486, 1
    %p490 = scmp.eq.s32.totalorder %s32, 1
    %p491 = scmp.ne.s32.totalorder %s486, %s488
    %p492 = scmp.eq.s32.totalorder %s32, 0
    %p493 = por %p491, %p492
    %p494 = scmp.ne.s32.totalorder %s486, %s488
    %p495 = scmp.eq.s32.totalorder %s37, 1
    %p496 = por %p494, %p495
    %p497 = scmp.ne.s32.totalorder %s488, %s489
    %p498 = scmp.eq.s32.totalorder %s37, 0
    %p499 = por %p497, %p498
    %p500 = scmp.ne.s32.totalorder %s488, %s489
    %p501 = scmp.eq.s32.totalorder %s38, 1
    %p502 = por %p500, %p501
    %p504 = scmp.ne.s32.totalorder %s489, %s503
    %p505 = scmp.eq.s32.totalorder %s38, 0
    %p506 = por %p504, %p505
    %s508 = sadd.s32 %s507, 1
    %p511 = scmp.eq.s32.totalorder %s32, 1
    %p512 = scmp.ne.s32.totalorder %s507, %s509
    %p513 = scmp.eq.s32.totalorder %s32, 0
    %p514 = por %p512, %p513
    %p515 = scmp.ne.s32.totalorder %s507, %s509
    %p516 = scmp.eq.s32.totalorder %s37, 1
    %p517 = por %p515, %p516
    %p518 = scmp.ne.s32.totalorder %s509, %s510
    %p519 = scmp.eq.s32.totalorder %s37, 0
    %p520 = por %p518, %p519
    %p521 = scmp.ne.s32.totalorder %s509, %s510
    %p522 = scmp.eq.s32.totalorder %s38, 1
    %p523 = por %p521, %p522
    %p525 = scmp.ne.s32.totalorder %s510, %s524
    %p526 = scmp.eq.s32.totalorder %s38, 0
    %p527 = por %p525, %p526
    %s529 = sadd.s32 %s528, 1
    %p532 = scmp.eq.s32.totalorder %s32, 1
    %p533 = scmp.ne.s32.totalorder %s528, %s530
    %p534 = scmp.eq.s32.totalorder %s32, 0
    %p535 = por %p533, %p534
    %p536 = scmp.ne.s32.totalorder %s528, %s530
    %p537 = scmp.eq.s32.totalorder %s37, 1
    %p538 = por %p536, %p537
    %p539 = scmp.ne.s32.totalorder %s530, %s531
    %p540 = scmp.eq.s32.totalorder %s37, 0
    %p541 = por %p539, %p540
    %p542 = scmp.ne.s32.totalorder %s530, %s531
    %p543 = scmp.eq.s32.totalorder %s38, 1
    %p544 = por %p542, %p543
    %p546 = scmp.ne.s32.totalorder %s531, %s545
    %p547 = scmp.eq.s32.totalorder %s38, 0
    %p548 = por %p546, %p547
    %s550 = sadd.s32 %s549, 1
    %p553 = scmp.eq.s32.totalorder %s32, 1
    %p554 = scmp.ne.s32.totalorder %s549, %s551
    %p555 = scmp.eq.s32.totalorder %s32, 0
    %p556 = por %p554, %p555
    %p557 = scmp.ne.s32.totalorder %s549, %s551
    %p558 = scmp.eq.s32.totalorder %s37, 1
    %p559 = por %p557, %p558
    %p560 = scmp.ne.s32.totalorder %s551, %s552
    %p561 = scmp.eq.s32.totalorder %s37, 0
    %p562 = por %p560, %p561
    %p563 = scmp.ne.s32.totalorder %s551, %s552
    %p564 = scmp.eq.s32.totalorder %s38, 1
    %p565 = por %p563, %p564
    %p567 = scmp.ne.s32.totalorder %s552, %s566
    %p568 = scmp.eq.s32.totalorder %s38, 0
    %p569 = por %p567, %p568
    %s571 = sadd.s32 %s570, 1
    %p574 = scmp.eq.s32.totalorder %s32, 1
    %p575 = scmp.ne.s32.totalorder %s570, %s572
    %p576 = scmp.eq.s32.totalorder %s32, 0
    %p577 = por %p575, %p576
    %p578 = scmp.ne.s32.totalorder %s570, %s572
    %p579 = scmp.eq.s32.totalorder %s37, 1
    %p580 = por %p578, %p579
    %p581 = scmp.ne.s32.totalorder %s572, %s573
    %p582 = scmp.eq.s32.totalorder %s37, 0
    %p583 = por %p581, %p582
    %p584 = scmp.ne.s32.totalorder %s572, %s573
    %p585 = scmp.eq.s32.totalorder %s38, 1
    %p586 = por %p584, %p585
    %p588 = scmp.ne.s32.totalorder %s573, %s587
    %p589 = scmp.eq.s32.totalorder %s38, 0
    %p590 = por %p588, %p589
    %s591 = ssub.s32 %s32, %s39
    %p592 = scmp.eq.s32.totalorder %s591, 0
    %s594 = sadd.s32 %s593, 1
    %s595 = scalar_select %p592, %s593, %s594
    %p598 = pneg %p592
    %p599 = scmp.eq.s32.totalorder %s32, 1
    %p600 = por %p598, %p599
    %p601 = scmp.ne.s32.totalorder %s593, %s596
    %p602 = scmp.eq.s32.totalorder %s32, 0
    %p603 = por %p601, %p602
    %p604 = scmp.ne.s32.totalorder %s593, %s596
    %p605 = scmp.eq.s32.totalorder %s37, 1
    %p606 = por %p604, %p605
    %p607 = scmp.ne.s32.totalorder %s596, %s597
    %p608 = scmp.eq.s32.totalorder %s37, 0
    %p609 = por %p607, %p608
    %p610 = scmp.ne.s32.totalorder %s596, %s597
    %p611 = scmp.eq.s32.totalorder %s38, 1
    %p612 = por %p610, %p611
    %p614 = scmp.ne.s32.totalorder %s597, %s613
    %p615 = scmp.eq.s32.totalorder %s38, 0
    %p616 = por %p614, %p615
    %p617 = scmp.le.s32.totalorder 1, %s32
    %p618 = scmp.lt.s32.totalorder %s32, 3
    %p619 = pnand %p617, %p618
    %p620 = pneg %p619
    // Predicated region
    $region9: #{vit_cnn_forward.1} parent=5 // pred_check
      _
    $region10: #{vit_cnn_forward.1} parent=5 // pred_check_branch
      %622 = sbr.rel (%p619) target = $region12
    $region11: #{vit_cnn_forward.1} parent=5 // pred_region
      %s623 = ssub.s32 %s32, 1
      // Predicated region
      $region13: #{vit_cnn_forward.1} parent=11 // pred_check
        %p624 = pneg %p79
      $region14: #{vit_cnn_forward.1} parent=11 // pred_check_branch
        %626 = sbr.rel (%p624) target = $region16
      $region15: #{vit_cnn_forward.1} parent=11 // pred_region
        _
      $region16: #{vit_cnn_forward.1} parent=11 // pred_fallthru
        _
      // Predicated region
      $region17: #{vit_cnn_forward.1} parent=11 // pred_check
        %p627 = pneg %p100
      $region18: #{vit_cnn_forward.1} parent=11 // pred_check_branch
        %629 = sbr.rel (%p627) target = $region20
      $region19: #{vit_cnn_forward.1} parent=11 // pred_region
        _
      $region20: #{vit_cnn_forward.1} parent=11 // pred_fallthru
        _
      // Predicated region
      $region21: #{vit_cnn_forward.1} parent=11 // pred_check
        %p630 = pneg %p121
      $region22: #{vit_cnn_forward.1} parent=11 // pred_check_branch
        %632 = sbr.rel (%p630) target = $region24
      $region23: #{vit_cnn_forward.1} parent=11 // pred_region
        _
      $region24: #{vit_cnn_forward.1} parent=11 // pred_fallthru
        _
      // Predicated region
      $region25: #{vit_cnn_forward.1} parent=11 // pred_check
        %p633 = pneg %p142
      $region26: #{vit_cnn_forward.1} parent=11 // pred_check_branch
        %635 = sbr.rel (%p633) target = $region28
      $region27: #{vit_cnn_forward.1} parent=11 // pred_region
        _
      $region28: #{vit_cnn_forward.1} parent=11 // pred_fallthru
        _
      // Predicated region
      $region29: #{vit_cnn_forward.1} parent=11 // pred_check
        %p636 = pneg %p163
      $region30: #{vit_cnn_forward.1} parent=11 // pred_check_branch
        %638 = sbr.rel (%p636) target = $region32
      $region31: #{vit_cnn_forward.1} parent=11 // pred_region
        _
      $region32: #{vit_cnn_forward.1} parent=11 // pred_fallthru
        _
      // Predicated region
      $region33: #{vit_cnn_forward.1} parent=11 // pred_check
        %p639 = pneg %p184
      $region34: #{vit_cnn_forward.1} parent=11 // pred_check_branch
        %641 = sbr.rel (%p639) target = $region36
      $region35: #{vit_cnn_forward.1} parent=11 // pred_region
        _
      $region36: #{vit_cnn_forward.1} parent=11 // pred_fallthru
        _
      // Predicated region
      $region37: #{vit_cnn_forward.1} parent=11 // pred_check
        %p642 = pneg %p205
      $region38: #{vit_cnn_forward.1} parent=11 // pred_check_branch
        %644 = sbr.rel (%p642) target = $region40
      $region39: #{vit_cnn_forward.1} parent=11 // pred_region
        _
      $region40: #{vit_cnn_forward.1} parent=11 // pred_fallthru
        _
      // Predicated region
      $region41: #{vit_cnn_forward.1} parent=11 // pred_check
        %p645 = pneg %p226
      $region42: #{vit_cnn_forward.1} parent=11 // pred_check_branch
        %647 = sbr.rel (%p645) target = $region44
      $region43: #{vit_cnn_forward.1} parent=11 // pred_region
        _
      $region44: #{vit_cnn_forward.1} parent=11 // pred_fallthru
        _
      // Predicated region
      $region45: #{vit_cnn_forward.1} parent=11 // pred_check
        %p648 = pneg %p247
      $region46: #{vit_cnn_forward.1} parent=11 // pred_check_branch
        %650 = sbr.rel (%p648) target = $region48
      $region47: #{vit_cnn_forward.1} parent=11 // pred_region
        _
      $region48: #{vit_cnn_forward.1} parent=11 // pred_fallthru
        _
      // Predicated region
      $region49: #{vit_cnn_forward.1} parent=11 // pred_check
        %p651 = pneg %p268
      $region50: #{vit_cnn_forward.1} parent=11 // pred_check_branch
        %653 = sbr.rel (%p651) target = $region52
      $region51: #{vit_cnn_forward.1} parent=11 // pred_region
        _
      $region52: #{vit_cnn_forward.1} parent=11 // pred_fallthru
        _
      // Predicated region
      $region53: #{vit_cnn_forward.1} parent=11 // pred_check
        %p654 = pneg %p289
      $region54: #{vit_cnn_forward.1} parent=11 // pred_check_branch
        %656 = sbr.rel (%p654) target = $region56
      $region55: #{vit_cnn_forward.1} parent=11 // pred_region
        _
      $region56: #{vit_cnn_forward.1} parent=11 // pred_fallthru
        _
      // Predicated region
      $region57: #{vit_cnn_forward.1} parent=11 // pred_check
        %p657 = pneg %p310
      $region58: #{vit_cnn_forward.1} parent=11 // pred_check_branch
        %659 = sbr.rel (%p657) target = $region60
      $region59: #{vit_cnn_forward.1} parent=11 // pred_region
        _
      $region60: #{vit_cnn_forward.1} parent=11 // pred_fallthru
        _
      // Predicated region
      $region61: #{vit_cnn_forward.1} parent=11 // pred_check
        %p660 = pneg %p331
      $region62: #{vit_cnn_forward.1} parent=11 // pred_check_branch
        %662 = sbr.rel (%p660) target = $region64
      $region63: #{vit_cnn_forward.1} parent=11 // pred_region
        _
      $region64: #{vit_cnn_forward.1} parent=11 // pred_fallthru
        _
      // Predicated region
      $region65: #{vit_cnn_forward.1} parent=11 // pred_check
        %p663 = pneg %p352
      $region66: #{vit_cnn_forward.1} parent=11 // pred_check_branch
        %665 = sbr.rel (%p663) target = $region68
      $region67: #{vit_cnn_forward.1} parent=11 // pred_region
        _
      $region68: #{vit_cnn_forward.1} parent=11 // pred_fallthru
        _
      // Predicated region
      $region69: #{vit_cnn_forward.1} parent=11 // pred_check
        %p666 = pneg %p373
      $region70: #{vit_cnn_forward.1} parent=11 // pred_check_branch
        %668 = sbr.rel (%p666) target = $region72
      $region71: #{vit_cnn_forward.1} parent=11 // pred_region
        _
      $region72: #{vit_cnn_forward.1} parent=11 // pred_fallthru
        _
      // Predicated region
      $region73: #{vit_cnn_forward.1} parent=11 // pred_check
        %p669 = pneg %p394
      $region74: #{vit_cnn_forward.1} parent=11 // pred_check_branch
        %671 = sbr.rel (%p669) target = $region76
      $region75: #{vit_cnn_forward.1} parent=11 // pred_region
        _
      $region76: #{vit_cnn_forward.1} parent=11 // pred_fallthru
        _
      // Predicated region
      $region77: #{vit_cnn_forward.1} parent=11 // pred_check
        %p672 = pneg %p415
      $region78: #{vit_cnn_forward.1} parent=11 // pred_check_branch
        %674 = sbr.rel (%p672) target = $region80
      $region79: #{vit_cnn_forward.1} parent=11 // pred_region
        _
      $region80: #{vit_cnn_forward.1} parent=11 // pred_fallthru
        _
      // Predicated region
      $region81: #{vit_cnn_forward.1} parent=11 // pred_check
        %p675 = pneg %p436
      $region82: #{vit_cnn_forward.1} parent=11 // pred_check_branch
        %677 = sbr.rel (%p675) target = $region84
      $region83: #{vit_cnn_forward.1} parent=11 // pred_region
        _
      $region84: #{vit_cnn_forward.1} parent=11 // pred_fallthru
        _
      // Predicated region
      $region85: #{vit_cnn_forward.1} parent=11 // pred_check
        %p678 = pneg %p457
      $region86: #{vit_cnn_forward.1} parent=11 // pred_check_branch
        %680 = sbr.rel (%p678) target = $region88
      $region87: #{vit_cnn_forward.1} parent=11 // pred_region
        _
      $region88: #{vit_cnn_forward.1} parent=11 // pred_fallthru
        _
      // Predicated region
      $region89: #{vit_cnn_forward.1} parent=11 // pred_check
        %p681 = pneg %p478
      $region90: #{vit_cnn_forward.1} parent=11 // pred_check_branch
        %683 = sbr.rel (%p681) target = $region92
      $region91: #{vit_cnn_forward.1} parent=11 // pred_region
        _
      $region92: #{vit_cnn_forward.1} parent=11 // pred_fallthru
        _
      // Predicated region
      $region93: #{vit_cnn_forward.1} parent=11 // pred_check
        %p684 = pneg %p499
      $region94: #{vit_cnn_forward.1} parent=11 // pred_check_branch
        %686 = sbr.rel (%p684) target = $region96
      $region95: #{vit_cnn_forward.1} parent=11 // pred_region
        _
      $region96: #{vit_cnn_forward.1} parent=11 // pred_fallthru
        _
      // Predicated region
      $region97: #{vit_cnn_forward.1} parent=11 // pred_check
        %p687 = pneg %p520
      $region98: #{vit_cnn_forward.1} parent=11 // pred_check_branch
        %689 = sbr.rel (%p687) target = $region100
      $region99: #{vit_cnn_forward.1} parent=11 // pred_region
        _
      $region100: #{vit_cnn_forward.1} parent=11 // pred_fallthru
        _
      // Predicated region
      $region101: #{vit_cnn_forward.1} parent=11 // pred_check
        %p690 = pneg %p541
      $region102: #{vit_cnn_forward.1} parent=11 // pred_check_branch
        %692 = sbr.rel (%p690) target = $region104
      $region103: #{vit_cnn_forward.1} parent=11 // pred_region
        _
      $region104: #{vit_cnn_forward.1} parent=11 // pred_fallthru
        _
      // Predicated region
      $region105: #{vit_cnn_forward.1} parent=11 // pred_check
        %p693 = pneg %p562
      $region106: #{vit_cnn_forward.1} parent=11 // pred_check_branch
        %695 = sbr.rel (%p693) target = $region108
      $region107: #{vit_cnn_forward.1} parent=11 // pred_region
        _
      $region108: #{vit_cnn_forward.1} parent=11 // pred_fallthru
        _
      // Predicated region
      $region109: #{vit_cnn_forward.1} parent=11 // pred_check
        %p696 = pneg %p583
      $region110: #{vit_cnn_forward.1} parent=11 // pred_check_branch
        %698 = sbr.rel (%p696) target = $region112
      $region111: #{vit_cnn_forward.1} parent=11 // pred_region
        _
      $region112: #{vit_cnn_forward.1} parent=11 // pred_fallthru
        _
    $region12: #{vit_cnn_forward.1} parent=5 // pred_fallthru
      _
    %p699 = scmp.lt.s32.totalorder %s32, 2
    // Predicated region
    $region113: #{vit_cnn_forward.1} parent=5 // pred_check
      %p700 = pneg %p699
    $region114: #{vit_cnn_forward.1} parent=5 // pred_check_branch
      %702 = sbr.rel (%p700) target = $region116
    $region115: #{vit_cnn_forward.1} parent=5 // pred_region
      // Predicated region
      $region117: #{vit_cnn_forward.1} parent=115 // pred_check
        %p703 = pneg %p52
      $region118: #{vit_cnn_forward.1} parent=115 // pred_check_branch
        %705 = sbr.rel (%p703) target = $region120
      $region119: #{vit_cnn_forward.1} parent=115 // pred_region
        %p706 = scmp.lt.s32.totalorder %s32, 1
        %s707 = scalar_select %p706, %s32, 1
        %s708 = smul.addr %s707, 4
        %s709 = smul.addr %s708, 8
        %s710 = scalar_lea.vmem %s0, %s709
      $region120: #{vit_cnn_forward.1} parent=115 // pred_fallthru
        _
    $region116: #{vit_cnn_forward.1} parent=5 // pred_fallthru
      _
    %p711 = scmp.le.s32.totalorder 1, %s32
    %p712 = scmp.lt.s32.totalorder %s32, 3
    %p713 = pnand %p711, %p712
    %p714 = pneg %p713
    // Predicated region
    $region121: #{vit_cnn_forward.1} parent=5 // pred_check
      _
    $region122: #{vit_cnn_forward.1} parent=5 // pred_check_branch
      %716 = sbr.rel (%p713) target = $region124
    $region123: #{vit_cnn_forward.1} parent=5 // pred_region
      %s717 = ssub.s32 %s32, 1
      %p718 = scmp.lt.s32.totalorder %s37, 1
      %s719 = scalar_select %p718, %s37, 1
      %s720 = smul.addr %s719, 4
      %s721 = smul.addr %s720, 8
      %s722 = scalar_lea.vmem %s0, %s721
      %p723 = pneg %p58
      %p724 = pneg %p55
      %p725 = pneg %p79
      %p726 = pneg %p76
      %p727 = pneg %p100
      %p728 = pneg %p97
      %p729 = pneg %p121
      %p730 = pneg %p118
      %p731 = pneg %p142
      %p732 = pneg %p139
      %p733 = pneg %p163
      %p734 = pneg %p160
      %p735 = pneg %p184
      %p736 = pneg %p181
      %p737 = pneg %p205
      %p738 = pneg %p202
      %p739 = pneg %p226
      %p740 = pneg %p223
      %p741 = pneg %p247
      %p742 = pneg %p244
      %p743 = pneg %p268
      %p744 = pneg %p265
      %p745 = pneg %p289
      %p746 = pneg %p286
      %p747 = pneg %p310
      %p748 = pneg %p307
      %p749 = pneg %p331
      %p750 = pneg %p328
      %p751 = pneg %p352
      %p752 = pneg %p349
      %p753 = pneg %p373
      %p754 = pneg %p370
      %p755 = pneg %p394
      %p756 = pneg %p391
      %p757 = pneg %p415
      %p758 = pneg %p412
      %p759 = pneg %p436
      %p760 = pneg %p433
      %p761 = pneg %p457
      %p762 = pneg %p454
      %p763 = pneg %p478
      %p764 = pneg %p475
      %p765 = pneg %p499
      %p766 = pneg %p496
      %p767 = pneg %p520
      %p768 = pneg %p517
      %p769 = pneg %p541
      %p770 = pneg %p538
      %p771 = pneg %p562
      %p772 = pneg %p559
      %p773 = pneg %p583
      %p774 = pneg %p580
      %p775 = pneg %p609
      %p776 = pneg %p606
      %p777 = scmp.lt.s32.totalorder %s37, 1
      %s778 = scalar_select %p777, %s37, 1
      %s779 = smul.addr %s778, 2
      %s780 = smul.addr %s779, 8
      %s781 = scalar_lea.vmem %s26, %s780
      %p782 = scmp.lt.s32.totalorder %s37, 1
      %s783 = scalar_select %p782, %s37, 1
      %s784 = smul.addr %s783, 4
      %s785 = smul.addr %s784, 8
      %s786 = scalar_lea.vmem %s0, %s785
      %p787 = scmp.lt.s32.totalorder %s37, 1
      %s788 = scalar_select %p787, %s37, 1
      %s789 = smul.addr %s788, 2
      %s790 = smul.addr %s789, 8
      %s791 = scalar_lea.vmem %s26, %s790
      %v793 = vld [vmem:[%s786] sm:$0xff]
      %v794 = vld [vmem:[%s786 + $0x8] sm:$0xff]
      %v795 = vld [vmem:[%s786 + $0x10] sm:$0xff]
      %v796 = vld [vmem:[%s786 + $0x18] sm:$0xff]
      %v797 = vpack.c.bf16 %v795, %v793
      %v798 = vpack.c.bf16 %v796, %v794
      %v799 = vld [vmem:[%s1] sm:$0xf]
      %v800 = vld [vmem:[%s1 + $0x4] sm:$0xf]
      %v801 = vld [vmem:[%s1 + $0x8] sm:$0xf]
      %v802 = vld [vmem:[%s1 + $0xc] sm:$0xf]
      %v803 = vld [vmem:[%s1 + $0x10] sm:$0xf]
      %v804 = vld [vmem:[%s1 + $0x14] sm:$0xf]
      %v805 = vld [vmem:[%s1 + $0x18] sm:$0xf]
      %v806 = vld [vmem:[%s1 + $0x1c] sm:$0xf]
      %v807 = vld [vmem:[%s1 + $0x20] sm:$0xf]
      %v808 = vld [vmem:[%s1 + $0x24] sm:$0xf]
      %v809 = vld [vmem:[%s1 + $0x28] sm:$0xf]
      %v810 = vld [vmem:[%s1 + $0x2c] sm:$0xf]
      %v811 = vld [vmem:[%s1 + $0x30] sm:$0xf]
      %v812 = vld [vmem:[%s1 + $0x34] sm:$0xf]
      %v813 = vld [vmem:[%s1 + $0x38] sm:$0xf]
      %v814 = vld [vmem:[%s1 + $0x3c] sm:$0xf]
      %v815 = vld [vmem:[%s1 + $0x40] sm:$0xf]
      %v816 = vld [vmem:[%s1 + $0x44] sm:$0xf]
      %v817 = vld [vmem:[%s1 + $0x48] sm:$0xf]
      %v818 = vld [vmem:[%s1 + $0x4c] sm:$0xf]
      %v819 = vld [vmem:[%s1 + $0x50] sm:$0xf]
      %v820 = vld [vmem:[%s1 + $0x54] sm:$0xf]
      %v821 = vld [vmem:[%s1 + $0x58] sm:$0xf]
      %v822 = vld [vmem:[%s1 + $0x5c] sm:$0xf]
      %v823 = vld [vmem:[%s2] sm:$0x1]
      %v825 = vlaneseq
      %v826 = vshrl.u32 %v825, 7
      %v827 = vsub.s32 0, %v826
      %v828 = vrot.slane %v823, %v827
      %v854 = vunpack.c.l.b16 %v799
      %v855 = vunpack.c.l.b16 %v800
      %v856 = vunpack.c.l.b16 %v801
      %v857 = vunpack.c.l.b16 %v802
      %v858 = vunpack.c.l.b16 %v803
      %v859 = vunpack.c.l.b16 %v804
      %v860 = vunpack.c.l.b16 %v805
      %v861 = vunpack.c.l.b16 %v806
      %v862 = vunpack.c.l.b16 %v807
      %v863 = vunpack.c.l.b16 %v808
      %v864 = vunpack.c.l.b16 %v809
      %v865 = vunpack.c.l.b16 %v810
      %v866 = vunpack.c.l.b16 %v811
      %v867 = vunpack.c.l.b16 %v812
      %v868 = vunpack.c.l.b16 %v813
      %v869 = vunpack.c.l.b16 %v814
      %v870 = vunpack.c.l.b16 %v815
      %v871 = vunpack.c.l.b16 %v816
      %v872 = vunpack.c.l.b16 %v817
      %v873 = vunpack.c.l.b16 %v818
      %v874 = vunpack.c.l.b16 %v819
      %v875 = vunpack.c.l.b16 %v820
      %v876 = vunpack.c.l.b16 %v821
      %v877 = vunpack.c.l.b16 %v822
      %v878 = vpack.c.b16 %v855, %v854
      %v879 = vpack.c.b16 %v857, %v856
      %v880 = vpack.c.b16 %v859, %v858
      %v881 = vpack.c.b16 %v861, %v860
      %v882 = vpack.c.b16 %v863, %v862
      %v883 = vpack.c.b16 %v865, %v864
      %v884 = vpack.c.b16 %v867, %v866
      %v885 = vpack.c.b16 %v869, %v868
      %v886 = vpack.c.b16 %v871, %v870
      %v887 = vpack.c.b16 %v873, %v872
      %v888 = vpack.c.b16 %v875, %v874
      %v889 = vpack.c.b16 %v877, %v876
      %vm902 = vcmask 523264
      %v904 = vsel %vm902, %v798, 0
      %906 = vmatprep.subr.bf16.mxu0 0
      %907 = vmatpush1.bf16.msra.mxu0 %v885
      %908 = vmatprep.subr.bf16.mxu0 0
      %909 = vmatpush1.bf16.msra.mxu0 %v884
      %910 = vmatprep.subr.bf16.mxu0 0
      %911 = vmatpush1.bf16.msra.mxu0 %v883
      %912 = vmatprep.subr.bf16.mxu0 0
      %913 = vmatpush1.bf16.msra.mxu0 %v882
      %914 = vmatprep.subr.bf16.mxu0 0
      %915 = vmatpush1.bf16.msra.mxu0 %v881
      %916 = vmatprep.subr.bf16.mxu0 0
      %917 = vmatpush1.bf16.msra.mxu0 %v880
      %918 = vmatprep.subr.bf16.mxu0 0
      %919 = vmatpush1.bf16.msra.mxu0 %v879
      %920 = vmatprep.subr.bf16.mxu0 0
      %921 = vmatpush1.bf16.msra.mxu0 %v878
      %922 = vmatprep.subr.bf16.mxu0 0
      %923 = vmatpush2.bf16.msra.mxu0 0
      %924 = vmatprep.subr.bf16.mxu0 0
      %925 = vmatpush2.bf16.msra.mxu0 0
      %926 = vmatprep.subr.bf16.mxu0 0
      %927 = vmatpush2.bf16.msra.mxu0 0
      %928 = vmatprep.subr.bf16.mxu0 0
      %929 = vmatpush2.bf16.msra.mxu0 0
      %930 = vmatprep.subr.bf16.mxu0 0
      %931 = vmatpush2.bf16.msra.mxu0 %v889
      %932 = vmatprep.subr.bf16.mxu0 0
      %933 = vmatpush2.bf16.msra.mxu0 %v888
      %934 = vmatprep.subr.bf16.mxu0 0
      %935 = vmatpush2.bf16.msra.mxu0 %v887
      %936 = vmatprep.subr.bf16.mxu0 0
      %937 = vmatpush2.bf16.msra.mxu0 %v886
      %938 = vmatprep.mubr.bf16.mxu0 %v904
      %939 = vmatmul.mubr.bf16.gmra.mxu0 %v797
      %v940 = vpop.f32.mrf.mxu0
      %v941 = vadd.f32 %v828, %v940
      %v942 = vpop.f32.mrf.mxu0
      %v943 = vpop.f32.mrf.mxu0
      %v944 = vadd.f32 %v828, %v943
      %v945 = vpop.f32.mrf.mxu0
      %946 = vdwg.mxu0
      %v947 = vld [vmem:[%s3] sm:$0xff]
      %v948 = vld [vmem:[%s3 + $0x8] sm:$0xff]
      %v949 = vadd.f32 %v941, %v947
      %v950 = vadd.f32 %v944, %v948
      %vm951 = vcmask 261120
      %v952 = vsel %vm951, %v949, 0.0
      %953 = vadd.xlane.f32.xlu0 %v952
      %v954 = vpop.xlane.xlu0 %953
      %v955 = vsel %vm951, %v950, 0.0
      %956 = vadd.xlane.f32.xlu0 %v955
      %v957 = vpop.xlane.xlu0 %956
      %v958 = vrcp.pop 32.0
      %v959 = vmul.f32 %v954, %v958
      %v960 = vmul.f32 %v957, %v958
      %v961 = vsub.f32 %v949, %v959
      %v962 = vsub.f32 %v950, %v960
      %v963 = vmul.f32 %v961, %v961
      %v964 = vmul.f32 %v962, %v962
      %v965 = vsel %vm951, %v963, 0.0
      %966 = vadd.xlane.f32.xlu0 %v965
      %v967 = vpop.xlane.xlu0 %966
      %v968 = vsel %vm951, %v964, 0.0
      %969 = vadd.xlane.f32.xlu0 %v968
      %v970 = vpop.xlane.xlu0 %969
      %v971 = vmul.f32 %v967, %v958
      %v972 = vmul.f32 %v970, %v958
      %v973 = vadd.f32 %v971, 1e-06
      %v974 = vadd.f32 %v972, 1e-06
      %v975 = vrsqrt.pop %v973
      %v976 = vrsqrt.pop %v974
      %v977 = vmul.f32 %v961, %v975
      %v978 = vmul.f32 %v962, %v976
      %v979 = vld [vmem:[%s4] sm:$0x1]
      %v981 = vlaneseq
      %v982 = vshrl.u32 %v981, 7
      %v983 = vsub.s32 0, %v982
      %v984 = vrot.slane %v979, %v983
      %v986 = vmul.f32 %v977, %v984
      %v987 = vmul.f32 %v978, %v984
      %v988 = vld [vmem:[%s5] sm:$0x1]
      %v990 = vlaneseq
      %v991 = vshrl.u32 %v990, 7
      %v992 = vsub.s32 0, %v991
      %v993 = vrot.slane %v988, %v992
      %v995 = vadd.f32 %v986, %v993
      %v996 = vadd.f32 %v987, %v993
      %v997 = vpack.c.bf16 %v996, %v995
      %v998 = vld [vmem:[%s6] sm:$0xf]
      %v999 = vld [vmem:[%s6 + $0x4] sm:$0xf]
      %v1000 = vld [vmem:[%s6 + $0x8] sm:$0xf]
      %v1001 = vld [vmem:[%s6 + $0xc] sm:$0xf]
      %v1002 = vld [vmem:[%s7] sm:$0x1]
      %v1004 = vlaneseq
      %v1005 = vshrl.u32 %v1004, 7
      %v1006 = vsub.s32 0, %v1005
      %v1007 = vrot.slane %v1002, %v1006
      %v1013 = vunpack.c.l.b16 %v998
      %v1014 = vunpack.c.l.b16 %v999
      %v1015 = vunpack.c.l.b16 %v1000
      %v1016 = vunpack.c.l.b16 %v1001
      %v1017 = vpack.c.b16 %v1014, %v1013
      %v1018 = vpack.c.b16 %v1016, %v1015
      %v1022 = vsel %vm951, %v997, 0
      %1024 = vmatprep.subr.bf16.mxu0 0
      %1025 = vmatpush1.bf16.msra.mxu0 0
      %1026 = vmatprep.subr.bf16.mxu0 0
      %1027 = vmatpush1.bf16.msra.mxu0 0
      %1028 = vmatprep.subr.bf16.mxu0 0
      %1029 = vmatpush1.bf16.msra.mxu0 0
      %1030 = vmatprep.subr.bf16.mxu0 0
      %1031 = vmatpush1.bf16.msra.mxu0 0
      %1032 = vmatprep.subr.bf16.mxu0 0
      %1033 = vmatpush1.bf16.msra.mxu0 0
      %1034 = vmatprep.subr.bf16.mxu0 0
      %1035 = vmatpush1.bf16.msra.mxu0 0
      %1036 = vmatprep.subr.bf16.mxu0 0
      %1037 = vmatpush1.bf16.msra.mxu0 %v1018
      %1038 = vmatprep.subr.bf16.mxu0 0
      %1039 = vmatpush1.bf16.msra.mxu0 %v1017
      %1040 = vmatprep.subr.bf16.mxu0 0
      %1041 = vmatpush2.bf16.msra.mxu0 0
      %1042 = vmatprep.subr.bf16.mxu0 0
      %1043 = vmatpush2.bf16.msra.mxu0 0
      %1044 = vmatprep.subr.bf16.mxu0 0
      %1045 = vmatpush2.bf16.msra.mxu0 0
      %1046 = vmatprep.subr.bf16.mxu0 0
      %1047 = vmatpush2.bf16.msra.mxu0 0
      %1048 = vmatprep.subr.bf16.mxu0 0
      %1049 = vmatpush2.bf16.msra.mxu0 0
      %1050 = vmatprep.subr.bf16.mxu0 0
      %1051 = vmatpush2.bf16.msra.mxu0 0
      %1052 = vmatprep.subr.bf16.mxu0 0
      %1053 = vmatpush2.bf16.msra.mxu0 0
      %1054 = vmatprep.subr.bf16.mxu0 0
      %1055 = vmatpush2.bf16.msra.mxu0 0
      %1056 = vmatprep.mubr.bf16.mxu0 0
      %1057 = vmatmul.mubr.bf16.gmra.mxu0 %v1022
      %v1058 = vpop.f32.mrf.mxu0
      %v1059 = vadd.f32 %v1007, %v1058
      %v1060 = vpop.f32.mrf.mxu0
      %v1061 = vpop.f32.mrf.mxu0
      %v1062 = vadd.f32 %v1007, %v1061
      %v1063 = vpop.f32.mrf.mxu0
      %1064 = vdwg.mxu0
      %v1065 = vmul.f32 %v1059, 0.35355338
      %v1066 = vmul.f32 %v1062, 0.35355338
      %v1067 = vpack.c.bf16 %v1066, %v1065
      %v1068 = vpack.c.bf16 %v1062, %v1059
      %1070 = vrot.lane.b32.xlu0 %v1068, 96
      %v1071 = vpop.permute.xlu0 %1070
      %vm1072 = vcmask 64512
      %v1074 = vsel %vm1072, %v1067, 0
      %v1077 = vsel %vm1072, %v1071, 0
      %1079 = vmatprep.subr.bf16.mxu0 0
      %1080 = vmatpush1.bf16.xpose.msra.mxu0 0
      %1081 = vmatprep.subr.bf16.mxu0 0
      %1082 = vmatpush1.bf16.xpose.msra.mxu0 0
      %1083 = vmatprep.subr.bf16.mxu0 0
      %1084 = vmatpush1.bf16.xpose.msra.mxu0 0
      %1085 = vmatprep.subr.bf16.mxu0 0
      %1086 = vmatpush1.bf16.xpose.msra.mxu0 0
      %1087 = vmatprep.subr.bf16.mxu0 0
      %1088 = vmatpush1.bf16.xpose.msra.mxu0 0
      %1089 = vmatprep.subr.bf16.mxu0 0
      %1090 = vmatpush1.bf16.xpose.msra.mxu0 0
      %1091 = vmatprep.subr.bf16.mxu0 0
      %1092 = vmatpush1.bf16.xpose.msra.mxu0 0
      %1093 = vmatprep.subr.bf16.mxu0 0
      %1094 = vmatpush1.bf16.xpose.msra.mxu0 %v1077
      %1095 = vmatprep.subr.bf16.mxu0 0
      %1096 = vmatpush2.bf16.xpose.msra.mxu0 0
      %1097 = vmatprep.subr.bf16.mxu0 0
      %1098 = vmatpush2.bf16.xpose.msra.mxu0 0
      %1099 = vmatprep.subr.bf16.mxu0 0
      %1100 = vmatpush2.bf16.xpose.msra.mxu0 0
      %1101 = vmatprep.subr.bf16.mxu0 0
      %1102 = vmatpush2.bf16.xpose.msra.mxu0 0
      %1103 = vmatprep.subr.bf16.mxu0 0
      %1104 = vmatpush2.bf16.xpose.msra.mxu0 0
      %1105 = vmatprep.subr.bf16.mxu0 0
      %1106 = vmatpush2.bf16.xpose.msra.mxu0 0
      %1107 = vmatprep.subr.bf16.mxu0 0
      %1108 = vmatpush2.bf16.xpose.msra.mxu0 0
      %1109 = vmatprep.subr.bf16.mxu0 0
      %1110 = vmatpush2.bf16.xpose.msra.mxu0 0
      %1111 = vmatprep.mubr.bf16.mxu0 0
      %1112 = vmatmul.mubr.bf16.gmra.mxu0 %v1074
      %v1113 = vpop.f32.mrf.mxu0
      %v1114 = vadd.f32 0.0, %v1113
      %v1115 = vpop.f32.mrf.mxu0
      %v1116 = vpop.f32.mrf.mxu0
      %v1117 = vadd.f32 0.0, %v1116
      %v1118 = vpop.f32.mrf.mxu0
      %1119 = vdwg.mxu0
      %vm1120 = vcmask 130048
      %v1121 = vsel %vm1120, %v1114, -inf
      %1122 = vmax.xlane.f32.xlu0 %v1121
      %v1123 = vpop.xlane.xlu0 %1122
      %v1124 = vsel %vm1120, %v1117, -inf
      %1125 = vmax.xlane.f32.xlu0 %v1124
      %v1126 = vpop.xlane.xlu0 %1125
      %v1127 = vsub.f32 %v1114, %v1123
      %v1128 = vsub.f32 %v1117, %v1126
      %v1129 = vmul.f32 %v1127, 1.442695
      %v1130 = vpow.pop %v1129
      %v1131 = vmul.f32 %v1128, 1.442695
      %v1132 = vpow.pop %v1131
      %v1133 = vsel %vm1120, %v1130, 0.0
      %1134 = vadd.xlane.f32.xlu0 %v1133
      %v1135 = vpop.xlane.xlu0 %1134
      %v1136 = vsel %vm1120, %v1132, 0.0
      %1137 = vadd.xlane.f32.xlu0 %v1136
      %v1138 = vpop.xlane.xlu0 %1137
      %v1139 = vrcp.pop %v1135
      %v1140 = vrcp.pop %v1138
      %v1141 = vpack.c.bf16 %v1132, %v1130
      %1142 = vrot.lane.b32.xlu0 %v1068, 64
      %v1143 = vpop.permute.xlu0 %1142
      %v1146 = vsel %vm1120, %v1141, 0
      %1148 = vmatprep.subr.bf16.mxu0 0
      %1149 = vmatpush1.bf16.msra.mxu0 0
      %1150 = vmatprep.subr.bf16.mxu0 0
      %1151 = vmatpush1.bf16.msra.mxu0 0
      %1152 = vmatprep.subr.bf16.mxu0 0
      %1153 = vmatpush1.bf16.msra.mxu0 0
      %1154 = vmatprep.subr.bf16.mxu0 0
      %1155 = vmatpush1.bf16.msra.mxu0 0
      %1156 = vmatprep.subr.bf16.mxu0 0
      %1157 = vmatpush1.bf16.msra.mxu0 0
      %1158 = vmatprep.subr.bf16.mxu0 0
      %1159 = vmatpush1.bf16.msra.mxu0 0
      %1160 = vmatprep.subr.bf16.mxu0 0
      %1161 = vmatpush1.bf16.msra.mxu0 0
      %1162 = vmatprep.subr.bf16.mxu0 0
      %1163 = vmatpush1.bf16.msra.mxu0 %v1143
      %1164 = vmatprep.subr.bf16.mxu0 0
      %1165 = vmatpush2.bf16.msra.mxu0 0
      %1166 = vmatprep.subr.bf16.mxu0 0
      %1167 = vmatpush2.bf16.msra.mxu0 0
      %1168 = vmatprep.subr.bf16.mxu0 0
      %1169 = vmatpush2.bf16.msra.mxu0 0
      %1170 = vmatprep.subr.bf16.mxu0 0
      %1171 = vmatpush2.bf16.msra.mxu0 0
      %1172 = vmatprep.subr.bf16.mxu0 0
      %1173 = vmatpush2.bf16.msra.mxu0 0
      %1174 = vmatprep.subr.bf16.mxu0 0
      %1175 = vmatpush2.bf16.msra.mxu0 0
      %1176 = vmatprep.subr.bf16.mxu0 0
      %1177 = vmatpush2.bf16.msra.mxu0 0
      %1178 = vmatprep.subr.bf16.mxu0 0
      %1179 = vmatpush2.bf16.msra.mxu0 0
      %1180 = vmatprep.mubr.bf16.mxu0 0
      %1181 = vmatmul.mubr.bf16.gmra.mxu0 %v1146
      %v1182 = vpop.f32.mrf.mxu0
      %v1183 = vadd.f32 0.0, %v1182
      %v1184 = vpop.f32.mrf.mxu0
      %v1185 = vpop.f32.mrf.mxu0
      %v1186 = vadd.f32 0.0, %v1185
      %v1187 = vpop.f32.mrf.mxu0
      %1188 = vdwg.mxu0
      %v1189 = vmul.f32 %v1183, %v1139
      %v1190 = vmul.f32 %v1186, %v1140
      %1192 = vrot.lane.b32.xlu0 %v1067, 120
      %v1193 = vpop.permute.xlu0 %1192
      %1194 = vrot.lane.b32.xlu0 %v1068, 88
      %v1195 = vpop.permute.xlu0 %1194
      %v1197 = vsel %vm1072, %v1193, 0
      %v1200 = vsel %vm1072, %v1195, 0
      %1202 = vmatprep.subr.bf16.mxu0 0
      %1203 = vmatpush1.bf16.xpose.msra.mxu0 0
      %1204 = vmatprep.subr.bf16.mxu0 0
      %1205 = vmatpush1.bf16.xpose.msra.mxu0 0
      %1206 = vmatprep.subr.bf16.mxu0 0
      %1207 = vmatpush1.bf16.xpose.msra.mxu0 0
      %1208 = vmatprep.subr.bf16.mxu0 0
      %1209 = vmatpush1.bf16.xpose.msra.mxu0 0
      %1210 = vmatprep.subr.bf16.mxu0 0
      %1211 = vmatpush1.bf16.xpose.msra.mxu0 0
      %1212 = vmatprep.subr.bf16.mxu0 0
      %1213 = vmatpush1.bf16.xpose.msra.mxu0 0
      %1214 = vmatprep.subr.bf16.mxu0 0
      %1215 = vmatpush1.bf16.xpose.msra.mxu0 0
      %1216 = vmatprep.subr.bf16.mxu0 0
      %1217 = vmatpush1.bf16.xpose.msra.mxu0 %v1200
      %1218 = vmatprep.subr.bf16.mxu0 0
      %1219 = vmatpush2.bf16.xpose.msra.mxu0 0
      %1220 = vmatprep.subr.bf16.mxu0 0
      %1221 = vmatpush2.bf16.xpose.msra.mxu0 0
      %1222 = vmatprep.subr.bf16.mxu0 0
      %1223 = vmatpush2.bf16.xpose.msra.mxu0 0
      %1224 = vmatprep.subr.bf16.mxu0 0
      %1225 = vmatpush2.bf16.xpose.msra.mxu0 0
      %1226 = vmatprep.subr.bf16.mxu0 0
      %1227 = vmatpush2.bf16.xpose.msra.mxu0 0
      %1228 = vmatprep.subr.bf16.mxu0 0
      %1229 = vmatpush2.bf16.xpose.msra.mxu0 0
      %1230 = vmatprep.subr.bf16.mxu0 0
      %1231 = vmatpush2.bf16.xpose.msra.mxu0 0
      %1232 = vmatprep.subr.bf16.mxu0 0
      %1233 = vmatpush2.bf16.xpose.msra.mxu0 0
      %1234 = vmatprep.mubr.bf16.mxu0 0
      %1235 = vmatmul.mubr.bf16.gmra.mxu0 %v1197
      %v1236 = vpop.f32.mrf.mxu0
      %v1237 = vadd.f32 0.0, %v1236
      %v1238 = vpop.f32.mrf.mxu0
      %v1239 = vpop.f32.mrf.mxu0
      %v1240 = vadd.f32 0.0, %v1239
      %v1241 = vpop.f32.mrf.mxu0
      %1242 = vdwg.mxu0
      %v1243 = vsel %vm1120, %v1237, -inf
      %1244 = vmax.xlane.f32.xlu0 %v1243
      %v1245 = vpop.xlane.xlu0 %1244
      %v1246 = vsel %vm1120, %v1240, -inf
      %1247 = vmax.xlane.f32.xlu0 %v1246
      %v1248 = vpop.xlane.xlu0 %1247
      %v1249 = vsub.f32 %v1237, %v1245
      %v1250 = vsub.f32 %v1240, %v1248
      %v1251 = vmul.f32 %v1249, 1.442695
      %v1252 = vpow.pop %v1251
      %v1253 = vmul.f32 %v1250, 1.442695
      %v1254 = vpow.pop %v1253
      %v1255 = vsel %vm1120, %v1252, 0.0
      %1256 = vadd.xlane.f32.xlu0 %v1255
      %v1257 = vpop.xlane.xlu0 %1256
      %v1258 = vsel %vm1120, %v1254, 0.0
      %1259 = vadd.xlane.f32.xlu0 %v1258
      %v1260 = vpop.xlane.xlu0 %1259
      %v1261 = vrcp.pop %v1257
      %v1262 = vrcp.pop %v1260
      %v1263 = vpack.c.bf16 %v1254, %v1252
      %1264 = vrot.lane.b32.xlu0 %v1068, 56
      %v1265 = vpop.permute.xlu0 %1264
      %v1268 = vsel %vm1120, %v1263, 0
      %1270 = vmatprep.subr.bf16.mxu0 0
      %1271 = vmatpush1.bf16.msra.mxu0 0
      %1272 = vmatprep.subr.bf16.mxu0 0
      %1273 = vmatpush1.bf16.msra.mxu0 0
      %1274 = vmatprep.subr.bf16.mxu0 0
      %1275 = vmatpush1.bf16.msra.mxu0 0
      %1276 = vmatprep.subr.bf16.mxu0 0
      %1277 = vmatpush1.bf16.msra.mxu0 0
      %1278 = vmatprep.subr.bf16.mxu0 0
      %1279 = vmatpush1.bf16.msra.mxu0 0
      %1280 = vmatprep.subr.bf16.mxu0 0
      %1281 = vmatpush1.bf16.msra.mxu0 0
      %1282 = vmatprep.subr.bf16.mxu0 0
      %1283 = vmatpush1.bf16.msra.mxu0 0
      %1284 = vmatprep.subr.bf16.mxu0 0
      %1285 = vmatpush1.bf16.msra.mxu0 %v1265
      %1286 = vmatprep.subr.bf16.mxu0 0
      %1287 = vmatpush2.bf16.msra.mxu0 0
      %1288 = vmatprep.subr.bf16.mxu0 0
      %1289 = vmatpush2.bf16.msra.mxu0 0
      %1290 = vmatprep.subr.bf16.mxu0 0
      %1291 = vmatpush2.bf16.msra.mxu0 0
      %1292 = vmatprep.subr.bf16.mxu0 0
      %1293 = vmatpush2.bf16.msra.mxu0 0
      %1294 = vmatprep.subr.bf16.mxu0 0
      %1295 = vmatpush2.bf16.msra.mxu0 0
      %1296 = vmatprep.subr.bf16.mxu0 0
      %1297 = vmatpush2.bf16.msra.mxu0 0
      %1298 = vmatprep.subr.bf16.mxu0 0
      %1299 = vmatpush2.bf16.msra.mxu0 0
      %1300 = vmatprep.subr.bf16.mxu0 0
      %1301 = vmatpush2.bf16.msra.mxu0 0
      %1302 = vmatprep.mubr.bf16.mxu0 0
      %1303 = vmatmul.mubr.bf16.gmra.mxu0 %v1268
      %v1304 = vpop.f32.mrf.mxu0
      %v1305 = vadd.f32 0.0, %v1304
      %v1306 = vpop.f32.mrf.mxu0
      %v1307 = vpop.f32.mrf.mxu0
      %v1308 = vadd.f32 0.0, %v1307
      %v1309 = vpop.f32.mrf.mxu0
      %1310 = vdwg.mxu0
      %v1311 = vmul.f32 %v1305, %v1261
      %v1312 = vmul.f32 %v1308, %v1262
      %1313 = vrot.lane.b32.xlu0 %v1067, 112
      %v1314 = vpop.permute.xlu0 %1313
      %1315 = vrot.lane.b32.xlu0 %v1068, 80
      %v1316 = vpop.permute.xlu0 %1315
      %v1318 = vsel %vm1072, %v1314, 0
      %v1321 = vsel %vm1072, %v1316, 0
      %1323 = vmatprep.subr.bf16.mxu0 0
      %1324 = vmatpush1.bf16.xpose.msra.mxu0 0
      %1325 = vmatprep.subr.bf16.mxu0 0
      %1326 = vmatpush1.bf16.xpose.msra.mxu0 0
      %1327 = vmatprep.subr.bf16.mxu0 0
      %1328 = vmatpush1.bf16.xpose.msra.mxu0 0
      %1329 = vmatprep.subr.bf16.mxu0 0
      %1330 = vmatpush1.bf16.xpose.msra.mxu0 0
      %1331 = vmatprep.subr.bf16.mxu0 0
      %1332 = vmatpush1.bf16.xpose.msra.mxu0 0
      %1333 = vmatprep.subr.bf16.mxu0 0
      %1334 = vmatpush1.bf16.xpose.msra.mxu0 0
      %1335 = vmatprep.subr.bf16.mxu0 0
      %1336 = vmatpush1.bf16.xpose.msra.mxu0 0
      %1337 = vmatprep.subr.bf16.mxu0 0
      %1338 = vmatpush1.bf16.xpose.msra.mxu0 %v1321
      %1339 = vmatprep.subr.bf16.mxu0 0
      %1340 = vmatpush2.bf16.xpose.msra.mxu0 0
      %1341 = vmatprep.subr.bf16.mxu0 0
      %1342 = vmatpush2.bf16.xpose.msra.mxu0 0
      %1343 = vmatprep.subr.bf16.mxu0 0
      %1344 = vmatpush2.bf16.xpose.msra.mxu0 0
      %1345 = vmatprep.subr.bf16.mxu0 0
      %1346 = vmatpush2.bf16.xpose.msra.mxu0 0
      %1347 = vmatprep.subr.bf16.mxu0 0
      %1348 = vmatpush2.bf16.xpose.msra.mxu0 0
      %1349 = vmatprep.subr.bf16.mxu0 0
      %1350 = vmatpush2.bf16.xpose.msra.mxu0 0
      %1351 = vmatprep.subr.bf16.mxu0 0
      %1352 = vmatpush2.bf16.xpose.msra.mxu0 0
      %1353 = vmatprep.subr.bf16.mxu0 0
      %1354 = vmatpush2.bf16.xpose.msra.mxu0 0
      %1355 = vmatprep.mubr.bf16.mxu0 0
      %1356 = vmatmul.mubr.bf16.gmra.mxu0 %v1318
      %v1357 = vpop.f32.mrf.mxu0
      %v1358 = vadd.f32 0.0, %v1357
      %v1359 = vpop.f32.mrf.mxu0
      %v1360 = vpop.f32.mrf.mxu0
      %v1361 = vadd.f32 0.0, %v1360
      %v1362 = vpop.f32.mrf.mxu0
      %1363 = vdwg.mxu0
      %v1364 = vsel %vm1120, %v1358, -inf
      %1365 = vmax.xlane.f32.xlu0 %v1364
      %v1366 = vpop.xlane.xlu0 %1365
      %v1367 = vsel %vm1120, %v1361, -inf
      %1368 = vmax.xlane.f32.xlu0 %v1367
      %v1369 = vpop.xlane.xlu0 %1368
      %v1370 = vsub.f32 %v1358, %v1366
      %v1371 = vsub.f32 %v1361, %v1369
      %v1372 = vmul.f32 %v1370, 1.442695
      %v1373 = vpow.pop %v1372
      %v1374 = vmul.f32 %v1371, 1.442695
      %v1375 = vpow.pop %v1374
      %v1376 = vsel %vm1120, %v1373, 0.0
      %1377 = vadd.xlane.f32.xlu0 %v1376
      %v1378 = vpop.xlane.xlu0 %1377
      %v1379 = vsel %vm1120, %v1375, 0.0
      %1380 = vadd.xlane.f32.xlu0 %v1379
      %v1381 = vpop.xlane.xlu0 %1380
      %v1382 = vrcp.pop %v1378
      %v1383 = vrcp.pop %v1381
      %v1384 = vpack.c.bf16 %v1375, %v1373
      %1385 = vrot.lane.b32.xlu0 %v1068, 48
      %v1386 = vpop.permute.xlu0 %1385
      %v1389 = vsel %vm1120, %v1384, 0
      %1391 = vmatprep.subr.bf16.mxu0 0
      %1392 = vmatpush1.bf16.msra.mxu0 0
      %1393 = vmatprep.subr.bf16.mxu0 0
      %1394 = vmatpush1.bf16.msra.mxu0 0
      %1395 = vmatprep.subr.bf16.mxu0 0
      %1396 = vmatpush1.bf16.msra.mxu0 0
      %1397 = vmatprep.subr.bf16.mxu0 0
      %1398 = vmatpush1.bf16.msra.mxu0 0
      %1399 = vmatprep.subr.bf16.mxu0 0
      %1400 = vmatpush1.bf16.msra.mxu0 0
      %1401 = vmatprep.subr.bf16.mxu0 0
      %1402 = vmatpush1.bf16.msra.mxu0 0
      %1403 = vmatprep.subr.bf16.mxu0 0
      %1404 = vmatpush1.bf16.msra.mxu0 0
      %1405 = vmatprep.subr.bf16.mxu0 0
      %1406 = vmatpush1.bf16.msra.mxu0 %v1386
      %1407 = vmatprep.subr.bf16.mxu0 0
      %1408 = vmatpush2.bf16.msra.mxu0 0
      %1409 = vmatprep.subr.bf16.mxu0 0
      %1410 = vmatpush2.bf16.msra.mxu0 0
      %1411 = vmatprep.subr.bf16.mxu0 0
      %1412 = vmatpush2.bf16.msra.mxu0 0
      %1413 = vmatprep.subr.bf16.mxu0 0
      %1414 = vmatpush2.bf16.msra.mxu0 0
      %1415 = vmatprep.subr.bf16.mxu0 0
      %1416 = vmatpush2.bf16.msra.mxu0 0
      %1417 = vmatprep.subr.bf16.mxu0 0
      %1418 = vmatpush2.bf16.msra.mxu0 0
      %1419 = vmatprep.subr.bf16.mxu0 0
      %1420 = vmatpush2.bf16.msra.mxu0 0
      %1421 = vmatprep.subr.bf16.mxu0 0
      %1422 = vmatpush2.bf16.msra.mxu0 0
      %1423 = vmatprep.mubr.bf16.mxu0 0
      %1424 = vmatmul.mubr.bf16.gmra.mxu0 %v1389
      %v1425 = vpop.f32.mrf.mxu0
      %v1426 = vadd.f32 0.0, %v1425
      %v1427 = vpop.f32.mrf.mxu0
      %v1428 = vpop.f32.mrf.mxu0
      %v1429 = vadd.f32 0.0, %v1428
      %v1430 = vpop.f32.mrf.mxu0
      %1431 = vdwg.mxu0
      %v1432 = vmul.f32 %v1426, %v1382
      %v1433 = vmul.f32 %v1429, %v1383
      %1434 = vrot.lane.b32.xlu0 %v1067, 104
      %v1435 = vpop.permute.xlu0 %1434
      %1436 = vrot.lane.b32.xlu0 %v1068, 72
      %v1437 = vpop.permute.xlu0 %1436
      %v1439 = vsel %vm1072, %v1435, 0
      %v1442 = vsel %vm1072, %v1437, 0
      %1444 = vmatprep.subr.bf16.mxu0 0
      %1445 = vmatpush1.bf16.xpose.msra.mxu0 0
      %1446 = vmatprep.subr.bf16.mxu0 0
      %1447 = vmatpush1.bf16.xpose.msra.mxu0 0
      %1448 = vmatprep.subr.bf16.mxu0 0
      %1449 = vmatpush1.bf16.xpose.msra.mxu0 0
      %1450 = vmatprep.subr.bf16.mxu0 0
      %1451 = vmatpush1.bf16.xpose.msra.mxu0 0
      %1452 = vmatprep.subr.bf16.mxu0 0
      %1453 = vmatpush1.bf16.xpose.msra.mxu0 0
      %1454 = vmatprep.subr.bf16.mxu0 0
      %1455 = vmatpush1.bf16.xpose.msra.mxu0 0
      %1456 = vmatprep.subr.bf16.mxu0 0
      %1457 = vmatpush1.bf16.xpose.msra.mxu0 0
      %1458 = vmatprep.subr.bf16.mxu0 0
      %1459 = vmatpush1.bf16.xpose.msra.mxu0 %v1442
      %1460 = vmatprep.subr.bf16.mxu0 0
      %1461 = vmatpush2.bf16.xpose.msra.mxu0 0
      %1462 = vmatprep.subr.bf16.mxu0 0
      %1463 = vmatpush2.bf16.xpose.msra.mxu0 0
      %1464 = vmatprep.subr.bf16.mxu0 0
      %1465 = vmatpush2.bf16.xpose.msra.mxu0 0
      %1466 = vmatprep.subr.bf16.mxu0 0
      %1467 = vmatpush2.bf16.xpose.msra.mxu0 0
      %1468 = vmatprep.subr.bf16.mxu0 0
      %1469 = vmatpush2.bf16.xpose.msra.mxu0 0
      %1470 = vmatprep.subr.bf16.mxu0 0
      %1471 = vmatpush2.bf16.xpose.msra.mxu0 0
      %1472 = vmatprep.subr.bf16.mxu0 0
      %1473 = vmatpush2.bf16.xpose.msra.mxu0 0
      %1474 = vmatprep.subr.bf16.mxu0 0
      %1475 = vmatpush2.bf16.xpose.msra.mxu0 0
      %1476 = vmatprep.mubr.bf16.mxu0 0
      %1477 = vmatmul.mubr.bf16.gmra.mxu0 %v1439
      %v1478 = vpop.f32.mrf.mxu0
      %v1479 = vadd.f32 0.0, %v1478
      %v1480 = vpop.f32.mrf.mxu0
      %v1481 = vpop.f32.mrf.mxu0
      %v1482 = vadd.f32 0.0, %v1481
      %v1483 = vpop.f32.mrf.mxu0
      %1484 = vdwg.mxu0
      %v1485 = vsel %vm1120, %v1479, -inf
      %1486 = vmax.xlane.f32.xlu0 %v1485
      %v1487 = vpop.xlane.xlu0 %1486
      %v1488 = vsel %vm1120, %v1482, -inf
      %1489 = vmax.xlane.f32.xlu0 %v1488
      %v1490 = vpop.xlane.xlu0 %1489
      %v1491 = vsub.f32 %v1479, %v1487
      %v1492 = vsub.f32 %v1482, %v1490
      %v1493 = vmul.f32 %v1491, 1.442695
      %v1494 = vpow.pop %v1493
      %v1495 = vmul.f32 %v1492, 1.442695
      %v1496 = vpow.pop %v1495
      %v1497 = vsel %vm1120, %v1494, 0.0
      %1498 = vadd.xlane.f32.xlu0 %v1497
      %v1499 = vpop.xlane.xlu0 %1498
      %v1500 = vsel %vm1120, %v1496, 0.0
      %1501 = vadd.xlane.f32.xlu0 %v1500
      %v1502 = vpop.xlane.xlu0 %1501
      %v1503 = vrcp.pop %v1499
      %v1504 = vrcp.pop %v1502
      %v1505 = vpack.c.bf16 %v1496, %v1494
      %1506 = vrot.lane.b32.xlu0 %v1068, 40
      %v1507 = vpop.permute.xlu0 %1506
      %v1510 = vsel %vm1120, %v1505, 0
      %1512 = vmatprep.subr.bf16.mxu0 0
      %1513 = vmatpush1.bf16.msra.mxu0 0
      %1514 = vmatprep.subr.bf16.mxu0 0
      %1515 = vmatpush1.bf16.msra.mxu0 0
      %1516 = vmatprep.subr.bf16.mxu0 0
      %1517 = vmatpush1.bf16.msra.mxu0 0
      %1518 = vmatprep.subr.bf16.mxu0 0
      %1519 = vmatpush1.bf16.msra.mxu0 0
      %1520 = vmatprep.subr.bf16.mxu0 0
      %1521 = vmatpush1.bf16.msra.mxu0 0
      %1522 = vmatprep.subr.bf16.mxu0 0
      %1523 = vmatpush1.bf16.msra.mxu0 0
      %1524 = vmatprep.subr.bf16.mxu0 0
      %1525 = vmatpush1.bf16.msra.mxu0 0
      %1526 = vmatprep.subr.bf16.mxu0 0
      %1527 = vmatpush1.bf16.msra.mxu0 %v1507
      %1528 = vmatprep.subr.bf16.mxu0 0
      %1529 = vmatpush2.bf16.msra.mxu0 0
      %1530 = vmatprep.subr.bf16.mxu0 0
      %1531 = vmatpush2.bf16.msra.mxu0 0
      %1532 = vmatprep.subr.bf16.mxu0 0
      %1533 = vmatpush2.bf16.msra.mxu0 0
      %1534 = vmatprep.subr.bf16.mxu0 0
      %1535 = vmatpush2.bf16.msra.mxu0 0
      %1536 = vmatprep.subr.bf16.mxu0 0
      %1537 = vmatpush2.bf16.msra.mxu0 0
      %1538 = vmatprep.subr.bf16.mxu0 0
      %1539 = vmatpush2.bf16.msra.mxu0 0
      %1540 = vmatprep.subr.bf16.mxu0 0
      %1541 = vmatpush2.bf16.msra.mxu0 0
      %1542 = vmatprep.subr.bf16.mxu0 0
      %1543 = vmatpush2.bf16.msra.mxu0 0
      %1544 = vmatprep.mubr.bf16.mxu0 0
      %1545 = vmatmul.mubr.bf16.gmra.mxu0 %v1510
      %v1546 = vpop.f32.mrf.mxu0
      %v1547 = vadd.f32 0.0, %v1546
      %v1548 = vpop.f32.mrf.mxu0
      %v1549 = vpop.f32.mrf.mxu0
      %v1550 = vadd.f32 0.0, %v1549
      %v1551 = vpop.f32.mrf.mxu0
      %1552 = vdwg.mxu0
      %v1553 = vmul.f32 %v1547, %v1503
      %v1554 = vmul.f32 %v1550, %v1504
      %1557 = vrot.lane.b32.xlu0 %v1311, 8
      %v1558 = vpop.permute.xlu0 %1557
      %1559 = vrot.lane.b32.xlu0 %v1312, 8
      %v1560 = vpop.permute.xlu0 %1559
      %1565 = vrot.lane.b32.xlu0 %v1432, 16
      %v1566 = vpop.permute.xlu0 %1565
      %1567 = vrot.lane.b32.xlu0 %v1433, 16
      %v1568 = vpop.permute.xlu0 %1567
      %1573 = vrot.lane.b32.xlu0 %v1553, 24
      %v1574 = vpop.permute.xlu0 %1573
      %1575 = vrot.lane.b32.xlu0 %v1554, 24
      %v1576 = vpop.permute.xlu0 %1575
      %v1579 = vsel %vm1072, %v1189, %v1558
      %v1580 = vsel %vm1072, %v1190, %v1560
      %v1581 = vsel %vm1120, %v1579, %v1566
      %v1582 = vsel %vm1120, %v1580, %v1568
      %vm1583 = vcmask 195584
      %v1584 = vsel %vm1583, %v1581, %v1574
      %v1585 = vsel %vm1583, %v1582, %v1576
      %v1586 = vpack.c.bf16 %v1585, %v1584
      %v1587 = vld [vmem:[%s8] sm:$0xf]
      %v1588 = vld [vmem:[%s8 + $0x4] sm:$0xf]
      %v1589 = vld [vmem:[%s8 + $0x8] sm:$0xf]
      %v1590 = vld [vmem:[%s8 + $0xc] sm:$0xf]
      %v1591 = vld [vmem:[%s9] sm:$0x1]
      %v1593 = vlaneseq
      %v1594 = vshrl.u32 %v1593, 7
      %v1595 = vsub.s32 0, %v1594
      %v1596 = vrot.slane %v1591, %v1595
      %v1602 = vunpack.c.l.b16 %v1587
      %v1603 = vunpack.c.l.b16 %v1588
      %v1604 = vunpack.c.l.b16 %v1589
      %v1605 = vunpack.c.l.b16 %v1590
      %v1606 = vpack.c.b16 %v1603, %v1602
      %v1607 = vpack.c.b16 %v1605, %v1604
      %v1611 = vsel %vm951, %v1586, 0
      %1613 = vmatprep.subr.bf16.mxu0 0
      %1614 = vmatpush1.bf16.msra.mxu0 0
      %1615 = vmatprep.subr.bf16.mxu0 0
      %1616 = vmatpush1.bf16.msra.mxu0 0
      %1617 = vmatprep.subr.bf16.mxu0 0
      %1618 = vmatpush1.bf16.msra.mxu0 0
      %1619 = vmatprep.subr.bf16.mxu0 0
      %1620 = vmatpush1.bf16.msra.mxu0 0
      %1621 = vmatprep.subr.bf16.mxu0 0
      %1622 = vmatpush1.bf16.msra.mxu0 0
      %1623 = vmatprep.subr.bf16.mxu0 0
      %1624 = vmatpush1.bf16.msra.mxu0 0
      %1625 = vmatprep.subr.bf16.mxu0 0
      %1626 = vmatpush1.bf16.msra.mxu0 %v1607
      %1627 = vmatprep.subr.bf16.mxu0 0
      %1628 = vmatpush1.bf16.msra.mxu0 %v1606
      %1629 = vmatprep.subr.bf16.mxu0 0
      %1630 = vmatpush2.bf16.msra.mxu0 0
      %1631 = vmatprep.subr.bf16.mxu0 0
      %1632 = vmatpush2.bf16.msra.mxu0 0
      %1633 = vmatprep.subr.bf16.mxu0 0
      %1634 = vmatpush2.bf16.msra.mxu0 0
      %1635 = vmatprep.subr.bf16.mxu0 0
      %1636 = vmatpush2.bf16.msra.mxu0 0
      %1637 = vmatprep.subr.bf16.mxu0 0
      %1638 = vmatpush2.bf16.msra.mxu0 0
      %1639 = vmatprep.subr.bf16.mxu0 0
      %1640 = vmatpush2.bf16.msra.mxu0 0
      %1641 = vmatprep.subr.bf16.mxu0 0
      %1642 = vmatpush2.bf16.msra.mxu0 0
      %1643 = vmatprep.subr.bf16.mxu0 0
      %1644 = vmatpush2.bf16.msra.mxu0 0
      %1645 = vmatprep.mubr.bf16.mxu0 0
      %1646 = vmatmul.mubr.bf16.gmra.mxu0 %v1611
      %v1647 = vpop.f32.mrf.mxu0
      %v1648 = vadd.f32 %v1596, %v1647
      %v1649 = vpop.f32.mrf.mxu0
      %v1650 = vpop.f32.mrf.mxu0
      %v1651 = vadd.f32 %v1596, %v1650
      %v1652 = vpop.f32.mrf.mxu0
      %1653 = vdwg.mxu0
      %v1654 = vadd.f32 %v949, %v1648
      %v1655 = vadd.f32 %v950, %v1651
      %v1656 = vsel %vm951, %v1654, 0.0
      %1657 = vadd.xlane.f32.xlu0 %v1656
      %v1658 = vpop.xlane.xlu0 %1657
      %v1659 = vsel %vm951, %v1655, 0.0
      %1660 = vadd.xlane.f32.xlu0 %v1659
      %v1661 = vpop.xlane.xlu0 %1660
      %v1662 = vmul.f32 %v1658, %v958
      %v1663 = vmul.f32 %v1661, %v958
      %v1664 = vsub.f32 %v1654, %v1662
      %v1665 = vsub.f32 %v1655, %v1663
      %v1666 = vmul.f32 %v1664, %v1664
      %v1667 = vmul.f32 %v1665, %v1665
      %v1668 = vsel %vm951, %v1666, 0.0
      %1669 = vadd.xlane.f32.xlu0 %v1668
      %v1670 = vpop.xlane.xlu0 %1669
      %v1671 = vsel %vm951, %v1667, 0.0
      %1672 = vadd.xlane.f32.xlu0 %v1671
      %v1673 = vpop.xlane.xlu0 %1672
      %v1674 = vmul.f32 %v1670, %v958
      %v1675 = vmul.f32 %v1673, %v958
      %v1676 = vadd.f32 %v1674, 1e-06
      %v1677 = vadd.f32 %v1675, 1e-06
      %v1678 = vrsqrt.pop %v1676
      %v1679 = vrsqrt.pop %v1677
      %v1680 = vmul.f32 %v1664, %v1678
      %v1681 = vmul.f32 %v1665, %v1679
      %v1682 = vld [vmem:[%s10] sm:$0x1]
      %v1684 = vlaneseq
      %v1685 = vshrl.u32 %v1684, 7
      %v1686 = vsub.s32 0, %v1685
      %v1687 = vrot.slane %v1682, %v1686
      %v1689 = vmul.f32 %v1680, %v1687
      %v1690 = vmul.f32 %v1681, %v1687
      %v1691 = vld [vmem:[%s11] sm:$0x1]
      %v1693 = vlaneseq
      %v1694 = vshrl.u32 %v1693, 7
      %v1695 = vsub.s32 0, %v1694
      %v1696 = vrot.slane %v1691, %v1695
      %v1698 = vadd.f32 %v1689, %v1696
      %v1699 = vadd.f32 %v1690, %v1696
      %v1700 = vpack.c.bf16 %v1699, %v1698
      %v1701 = vld [vmem:[%s12] sm:$0xf]
      %v1702 = vld [vmem:[%s12 + $0x4] sm:$0xf]
      %v1703 = vld [vmem:[%s12 + $0x8] sm:$0xf]
      %v1704 = vld [vmem:[%s12 + $0xc] sm:$0xf]
      %v1705 = vld [vmem:[%s13] sm:$0x1]
      %v1707 = vlaneseq
      %v1708 = vshrl.u32 %v1707, 7
      %v1709 = vsub.s32 0, %v1708
      %v1710 = vrot.slane %v1705, %v1709
      %v1716 = vunpack.c.l.b16 %v1701
      %v1717 = vunpack.c.l.b16 %v1702
      %v1718 = vunpack.c.l.b16 %v1703
      %v1719 = vunpack.c.l.b16 %v1704
      %v1720 = vpack.c.b16 %v1717, %v1716
      %v1721 = vpack.c.b16 %v1719, %v1718
      %v1725 = vsel %vm951, %v1700, 0
      %1727 = vmatprep.subr.bf16.mxu0 0
      %1728 = vmatpush1.bf16.msra.mxu0 0
      %1729 = vmatprep.subr.bf16.mxu0 0
      %1730 = vmatpush1.bf16.msra.mxu0 0
      %1731 = vmatprep.subr.bf16.mxu0 0
      %1732 = vmatpush1.bf16.msra.mxu0 0
      %1733 = vmatprep.subr.bf16.mxu0 0
      %1734 = vmatpush1.bf16.msra.mxu0 0
      %1735 = vmatprep.subr.bf16.mxu0 0
      %1736 = vmatpush1.bf16.msra.mxu0 0
      %1737 = vmatprep.subr.bf16.mxu0 0
      %1738 = vmatpush1.bf16.msra.mxu0 0
      %1739 = vmatprep.subr.bf16.mxu0 0
      %1740 = vmatpush1.bf16.msra.mxu0 %v1721
      %1741 = vmatprep.subr.bf16.mxu0 0
      %1742 = vmatpush1.bf16.msra.mxu0 %v1720
      %1743 = vmatprep.subr.bf16.mxu0 0
      %1744 = vmatpush2.bf16.msra.mxu0 0
      %1745 = vmatprep.subr.bf16.mxu0 0
      %1746 = vmatpush2.bf16.msra.mxu0 0
      %1747 = vmatprep.subr.bf16.mxu0 0
      %1748 = vmatpush2.bf16.msra.mxu0 0
      %1749 = vmatprep.subr.bf16.mxu0 0
      %1750 = vmatpush2.bf16.msra.mxu0 0
      %1751 = vmatprep.subr.bf16.mxu0 0
      %1752 = vmatpush2.bf16.msra.mxu0 0
      %1753 = vmatprep.subr.bf16.mxu0 0
      %1754 = vmatpush2.bf16.msra.mxu0 0
      %1755 = vmatprep.subr.bf16.mxu0 0
      %1756 = vmatpush2.bf16.msra.mxu0 0
      %1757 = vmatprep.subr.bf16.mxu0 0
      %1758 = vmatpush2.bf16.msra.mxu0 0
      %1759 = vmatprep.mubr.bf16.mxu0 0
      %1760 = vmatmul.mubr.bf16.gmra.mxu0 %v1725
      %v1761 = vpop.f32.mrf.mxu0
      %v1762 = vadd.f32 %v1710, %v1761
      %v1763 = vpop.f32.mrf.mxu0
      %v1764 = vpop.f32.mrf.mxu0
      %v1765 = vadd.f32 %v1710, %v1764
      %v1766 = vpop.f32.mrf.mxu0
      %1767 = vdwg.mxu0
      %v1768 = vmul.f32 %v1762, %v1762
      %v1769 = vmul.f32 %v1765, %v1765
      %v1770 = vmul.f32 %v1762, %v1768
      %v1771 = vmul.f32 %v1765, %v1769
      %v1772 = vmul.f32 %v1770, 0.044715
      %v1773 = vmul.f32 %v1771, 0.044715
      %v1774 = vadd.f32 %v1762, %v1772
      %v1775 = vadd.f32 %v1765, %v1773
      %v1776 = vmul.f32 %v1774, 0.7978846
      %v1777 = vmul.f32 %v1775, 0.7978846
      %v1778 = vtanh.pop %v1776
      %v1779 = vtanh.pop %v1777
      %v1780 = vadd.f32 %v1778, 1.0
      %v1781 = vadd.f32 %v1779, 1.0
      %v1782 = vmul.f32 %v1780, 0.5
      %v1783 = vmul.f32 %v1781, 0.5
      %v1784 = vmul.f32 %v1762, %v1782
      %v1785 = vmul.f32 %v1765, %v1783
      %v1786 = vpack.c.bf16 %v1785, %v1784
      %v1787 = vld [vmem:[%s14] sm:$0xf]
      %v1788 = vld [vmem:[%s14 + $0x4] sm:$0xf]
      %v1789 = vld [vmem:[%s14 + $0x8] sm:$0xf]
      %v1790 = vld [vmem:[%s14 + $0xc] sm:$0xf]
      %v1791 = vld [vmem:[%s14 + $0x10] sm:$0xf]
      %v1792 = vld [vmem:[%s14 + $0x14] sm:$0xf]
      %v1793 = vld [vmem:[%s14 + $0x18] sm:$0xf]
      %v1794 = vld [vmem:[%s14 + $0x1c] sm:$0xf]
      %v1795 = vld [vmem:[%s15] sm:$0x1]
      %v1797 = vlaneseq
      %v1798 = vshrl.u32 %v1797, 7
      %v1799 = vsub.s32 0, %v1798
      %v1800 = vrot.slane %v1795, %v1799
      %v1810 = vunpack.c.l.b16 %v1787
      %v1811 = vunpack.c.l.b16 %v1788
      %v1812 = vunpack.c.l.b16 %v1789
      %v1813 = vunpack.c.l.b16 %v1790
      %v1814 = vunpack.c.l.b16 %v1791
      %v1815 = vunpack.c.l.b16 %v1792
      %v1816 = vunpack.c.l.b16 %v1793
      %v1817 = vunpack.c.l.b16 %v1794
      %v1818 = vpack.c.b16 %v1811, %v1810
      %v1819 = vpack.c.b16 %v1813, %v1812
      %v1820 = vpack.c.b16 %v1815, %v1814
      %v1821 = vpack.c.b16 %v1817, %v1816
      %v1827 = vsel %vm902, %v1786, 0
      %1829 = vmatprep.subr.bf16.mxu0 0
      %1830 = vmatpush1.bf16.msra.mxu0 0
      %1831 = vmatprep.subr.bf16.mxu0 0
      %1832 = vmatpush1.bf16.msra.mxu0 0
      %1833 = vmatprep.subr.bf16.mxu0 0
      %1834 = vmatpush1.bf16.msra.mxu0 0
      %1835 = vmatprep.subr.bf16.mxu0 0
      %1836 = vmatpush1.bf16.msra.mxu0 0
      %1837 = vmatprep.subr.bf16.mxu0 0
      %1838 = vmatpush1.bf16.msra.mxu0 %v1821
      %1839 = vmatprep.subr.bf16.mxu0 0
      %1840 = vmatpush1.bf16.msra.mxu0 %v1820
      %1841 = vmatprep.subr.bf16.mxu0 0
      %1842 = vmatpush1.bf16.msra.mxu0 %v1819
      %1843 = vmatprep.subr.bf16.mxu0 0
      %1844 = vmatpush1.bf16.msra.mxu0 %v1818
      %1845 = vmatprep.subr.bf16.mxu0 0
      %1846 = vmatpush2.bf16.msra.mxu0 0
      %1847 = vmatprep.subr.bf16.mxu0 0
      %1848 = vmatpush2.bf16.msra.mxu0 0
      %1849 = vmatprep.subr.bf16.mxu0 0
      %1850 = vmatpush2.bf16.msra.mxu0 0
      %1851 = vmatprep.subr.bf16.mxu0 0
      %1852 = vmatpush2.bf16.msra.mxu0 0
      %1853 = vmatprep.subr.bf16.mxu0 0
      %1854 = vmatpush2.bf16.msra.mxu0 0
      %1855 = vmatprep.subr.bf16.mxu0 0
      %1856 = vmatpush2.bf16.msra.mxu0 0
      %1857 = vmatprep.subr.bf16.mxu0 0
      %1858 = vmatpush2.bf16.msra.mxu0 0
      %1859 = vmatprep.subr.bf16.mxu0 0
      %1860 = vmatpush2.bf16.msra.mxu0 0
      %1861 = vmatprep.mubr.bf16.mxu0 0
      %1862 = vmatmul.mubr.bf16.gmra.mxu0 %v1827
      %v1863 = vpop.f32.mrf.mxu0
      %v1864 = vadd.f32 %v1800, %v1863
      %v1865 = vpop.f32.mrf.mxu0
      %v1866 = vpop.f32.mrf.mxu0
      %v1867 = vadd.f32 %v1800, %v1866
      %v1868 = vpop.f32.mrf.mxu0
      %1869 = vdwg.mxu0
      %v1870 = vadd.f32 %v1654, %v1864
      %v1871 = vadd.f32 %v1655, %v1867
      %v1872 = vpack.c.bf16 %v1871, %v1870
      %v1873 = vld [vmem:[%s16] sm:$0xff]
      %v1874 = vld [vmem:[%s16 + $0x8] sm:$0xff]
      %v1875 = vld [vmem:[%s16 + $0x10] sm:$0xff]
      %v1876 = vld [vmem:[%s16 + $0x18] sm:$0xff]
      %v1881 = vunpack.c.l.b16 %v1873
      %v1882 = vunpack.c.h.b16 %v1873
      %v1883 = vunpack.c.l.b16 %v1874
      %v1884 = vunpack.c.h.b16 %v1874
      %v1885 = vunpack.c.l.b16 %v1875
      %v1886 = vunpack.c.h.b16 %v1875
      %v1887 = vunpack.c.l.b16 %v1876
      %v1888 = vunpack.c.h.b16 %v1876
      %v1889 = vpack.c.b16 %v1883, %v1881
      %v1890 = vpack.c.b16 %v1884, %v1882
      %v1891 = vpack.c.b16 %v1887, %v1885
      %v1892 = vpack.c.b16 %v1888, %v1886
      %v1898 = vsel %vm951, %v1872, 0
      %1900 = vmatprep.subr.bf16.mxu0 0
      %1901 = vmatpush1.bf16.msra.mxu0 0
      %1902 = vmatprep.subr.bf16.mxu0 0
      %1903 = vmatpush1.bf16.msra.mxu0 0
      %1904 = vmatprep.subr.bf16.mxu0 0
      %1905 = vmatpush1.bf16.msra.mxu0 0
      %1906 = vmatprep.subr.bf16.mxu0 0
      %1907 = vmatpush1.bf16.msra.mxu0 0
      %1908 = vmatprep.subr.bf16.mxu0 0
      %1909 = vmatpush1.bf16.msra.mxu0 0
      %1910 = vmatprep.subr.bf16.mxu0 0
      %1911 = vmatpush1.bf16.msra.mxu0 0
      %1912 = vmatprep.subr.bf16.mxu0 %v1892
      %1913 = vmatpush1.bf16.msra.mxu0 %v1891
      %1914 = vmatprep.subr.bf16.mxu0 %v1890
      %1915 = vmatpush1.bf16.msra.mxu0 %v1889
      %1916 = vmatprep.subr.bf16.mxu0 0
      %1917 = vmatpush2.bf16.msra.mxu0 0
      %1918 = vmatprep.subr.bf16.mxu0 0
      %1919 = vmatpush2.bf16.msra.mxu0 0
      %1920 = vmatprep.subr.bf16.mxu0 0
      %1921 = vmatpush2.bf16.msra.mxu0 0
      %1922 = vmatprep.subr.bf16.mxu0 0
      %1923 = vmatpush2.bf16.msra.mxu0 0
      %1924 = vmatprep.subr.bf16.mxu0 0
      %1925 = vmatpush2.bf16.msra.mxu0 0
      %1926 = vmatprep.subr.bf16.mxu0 0
      %1927 = vmatpush2.bf16.msra.mxu0 0
      %1928 = vmatprep.subr.bf16.mxu0 0
      %1929 = vmatpush2.bf16.msra.mxu0 0
      %1930 = vmatprep.subr.bf16.mxu0 0
      %1931 = vmatpush2.bf16.msra.mxu0 0
      %1932 = vmatprep.mubr.bf16.mxu0 0
      %1933 = vmatmul.mubr.bf16.gmra.mxu0 %v1898
      %v1934 = vpop.f32.mrf.mxu0
      %v1935 = vadd.f32 0.0, %v1934
      %v1936 = vpop.f32.mrf.mxu0
      %v1937 = vadd.f32 0.0, %v1936
      %v1938 = vpop.f32.mrf.mxu0
      %v1939 = vadd.f32 0.0, %v1938
      %v1940 = vpop.f32.mrf.mxu0
      %v1941 = vadd.f32 0.0, %v1940
      %1942 = vdwg.mxu0
      %v1943 = vadd.f32 %v1935, %v1937
      %1944 = vadd.xlane.f32.xlu0 %v1943
      %v1945 = vpop.xlane.xlu0 %1944
      %v1946 = vadd.f32 %v1939, %v1941
      %1947 = vadd.xlane.f32.xlu0 %v1946
      %v1948 = vpop.xlane.xlu0 %1947
      %v1949 = vrcp.pop 256.0
      %v1950 = vmul.f32 %v1945, %v1949
      %v1951 = vmul.f32 %v1948, %v1949
      %v1952 = vsub.f32 %v1935, %v1950
      %v1953 = vsub.f32 %v1937, %v1950
      %v1954 = vsub.f32 %v1939, %v1951
      %v1955 = vsub.f32 %v1941, %v1951
      %v1956 = vmul.f32 %v1952, %v1952
      %v1957 = vmul.f32 %v1953, %v1953
      %v1958 = vmul.f32 %v1954, %v1954
      %v1959 = vmul.f32 %v1955, %v1955
      %v1960 = vadd.f32 %v1956, %v1957
      %1961 = vadd.xlane.f32.xlu0 %v1960
      %v1962 = vpop.xlane.xlu0 %1961
      %v1963 = vadd.f32 %v1958, %v1959
      %1964 = vadd.xlane.f32.xlu0 %v1963
      %v1965 = vpop.xlane.xlu0 %1964
      %v1966 = vmul.f32 %v1962, %v1949
      %v1967 = vmul.f32 %v1965, %v1949
      %v1968 = vadd.f32 %v1966, 1e-06
      %v1969 = vadd.f32 %v1967, 1e-06
      %v1970 = vrsqrt.pop %v1968
      %v1971 = vrsqrt.pop %v1969
      %v1972 = vmul.f32 %v1952, %v1970
      %v1973 = vmul.f32 %v1953, %v1970
      %v1974 = vmul.f32 %v1954, %v1971
      %v1975 = vmul.f32 %v1955, %v1971
      %v1976 = vld [vmem:[%s17] sm:$0x3]
      %v1978 = vlaneseq
      %v1979 = vshrl.u32 %v1978, 7
      %v1980 = vsub.s32 0, %v1979
      %v1981 = vrot.slane %v1976, %v1980
      %v1982 = vlaneseq
      %v1983 = vshrl.u32 %v1982, 7
      %v1984 = vsub.s32 1, %v1983
      %v1985 = vrot.slane %v1976, %v1984
      %v1988 = vmul.f32 %v1972, %v1981
      %v1989 = vmul.f32 %v1973, %v1985
      %v1990 = vmul.f32 %v1974, %v1981
      %v1991 = vmul.f32 %v1975, %v1985
      %v1992 = vld [vmem:[%s18] sm:$0x3]
      %v1994 = vlaneseq
      %v1995 = vshrl.u32 %v1994, 7
      %v1996 = vsub.s32 0, %v1995
      %v1997 = vrot.slane %v1992, %v1996
      %v1998 = vlaneseq
      %v1999 = vshrl.u32 %v1998, 7
      %v2000 = vsub.s32 1, %v1999
      %v2001 = vrot.slane %v1992, %v2000
      %v2004 = vadd.f32 %v1988, %v1997
      %v2005 = vadd.f32 %v1989, %v2001
      %v2006 = vadd.f32 %v1990, %v1997
      %v2007 = vadd.f32 %v1991, %v2001
      %2008 = vst [vmem:[#allocation2] sm:$0x3f] 0.0
      %2009 = vst [vmem:[#allocation2 + $0x8] sm:$0x3f] 0.0
      %2010 = vst [vmem:[#allocation2 + $0x10] sm:$0x3f] 0.0
      %2011 = vst [vmem:[#allocation2 + $0x18] sm:$0x3f] 0.0
      %2012 = vst [vmem:[#allocation2 + $0x20] sm:$0x3f] 0.0
      %2013 = vst [vmem:[#allocation2 + $0x28] sm:$0x3f] 0.0
      %2014 = vst [vmem:[#allocation2 + $0x30] sm:$0x3f] 0.0
      %2015 = vst [vmem:[#allocation2 + $0x38] sm:$0x3f] 0.0
      %2016 = vst [vmem:[#allocation2 + $0x40] sm:$0x3f] 0.0
      %2017 = vst [vmem:[#allocation2 + $0x48] sm:$0x3f] 0.0
      %2018 = vst [vmem:[#allocation2 + $0x50] sm:$0x3f] 0.0
      %2019 = vst [vmem:[#allocation2 + $0x58] sm:$0x3f] 0.0
      %v2022 = vrot.slane %v2004, 7
      %v2023 = vrot.slane %v2005, 7
      %s2026 = scalar_lea.vmem [#allocation2], 16
      %2027 = vst [vmem:[%s2026] sm:$0x1e] %v2022
      %2028 = vst [vmem:[%s2026 + $0x8] sm:$0x1e] %v2023
      %v2029 = vrot.slane %v2004, 3
      %v2030 = vrot.slane %v2005, 3
      %s2033 = scalar_lea.vmem [#allocation2], 32
      %2034 = vst [vmem:[%s2033] sm:$0x1e] %v2029
      %2035 = vst [vmem:[%s2033 + $0x8] sm:$0x1e] %v2030
      %v2038 = vrot.slane %v2006, 7
      %v2039 = vrot.slane %v2007, 7
      %s2042 = scalar_lea.vmem [#allocation2], 48
      %2043 = vst [vmem:[%s2042] sm:$0x1e] %v2038
      %2044 = vst [vmem:[%s2042 + $0x8] sm:$0x1e] %v2039
      %v2045 = vrot.slane %v2006, 3
      %v2046 = vrot.slane %v2007, 3
      %s2049 = scalar_lea.vmem [#allocation2], 64
      %2050 = vst [vmem:[%s2049] sm:$0x1e] %v2045
      %2051 = vst [vmem:[%s2049 + $0x8] sm:$0x1e] %v2046
      %v2052 = vld [vmem:[#allocation2] sm:$0xf]
      %v2053 = vld [vmem:[#allocation2 + $0x8] sm:$0xf]
      %v2054 = vld [vmem:[%s2026] sm:$0xf]
      %v2055 = vld [vmem:[%s2026 + $0x8] sm:$0xf]
      %v2056 = vld [vmem:[%s2033] sm:$0xf]
      %v2057 = vld [vmem:[%s2033 + $0x8] sm:$0xf]
      %v2058 = vld [vmem:[%s2042] sm:$0xf]
      %v2059 = vld [vmem:[%s2042 + $0x8] sm:$0xf]
      %v2062 = vrot.slane %v2054, 4
      %v2063 = vrot.slane %v2055, 4
      %v2068 = vrot.slane %v2058, 4
      %v2069 = vrot.slane %v2059, 4
      %vm2072 = vcmask 1043456
      %v2073 = vsel %vm2072, %v2052, %v2062
      %v2074 = vsel %vm2072, %v2053, %v2063
      %v2075 = vsel %vm2072, %v2056, %v2068
      %v2076 = vsel %vm2072, %v2057, %v2069
      %v2077 = vpack.c.bf16 %v2075, %v2073
      %v2078 = vpack.c.bf16 %v2076, %v2074
      %v2079 = vld [vmem:[%s19] sm:$0xff]
      %v2080 = vld [vmem:[%s19 + $0x8] sm:$0xff]
      %v2081 = vld [vmem:[%s19 + $0x10] sm:$0xff]
      %v2082 = vld [vmem:[%s19 + $0x18] sm:$0xff]
      %v2083 = vld [vmem:[%s19 + $0x20] sm:$0xff]
      %v2084 = vld [vmem:[%s19 + $0x28] sm:$0xff]
      %v2085 = vld [vmem:[%s19 + $0x30] sm:$0xff]
      %v2086 = vld [vmem:[%s19 + $0x38] sm:$0xff]
      %v2087 = vld [vmem:[%s19 + $0x40] sm:$0xff]
      %v2088 = vld [vmem:[%s19 + $0x48] sm:$0xff]
      %v2089 = vld [vmem:[%s19 + $0x50] sm:$0xff]
      %v2090 = vld [vmem:[%s19 + $0x58] sm:$0xff]
      %v2091 = vld [vmem:[%s19 + $0x60] sm:$0xff]
      %v2092 = vld [vmem:[%s19 + $0x68] sm:$0xff]
      %v2093 = vld [vmem:[%s19 + $0x70] sm:$0xff]
      %v2094 = vld [vmem:[%s19 + $0x78] sm:$0xff]
      %v2095 = vld [vmem:[%s19 + $0x80] sm:$0xff]
      %v2096 = vld [vmem:[%s19 + $0x88] sm:$0xff]
      %v2097 = vld [vmem:[%s19 + $0x90] sm:$0xff]
      %v2098 = vld [vmem:[%s19 + $0x98] sm:$0xff]
      %v2099 = vld [vmem:[%s19 + $0xa0] sm:$0xff]
      %v2100 = vld [vmem:[%s19 + $0xa8] sm:$0xff]
      %v2101 = vld [vmem:[%s19 + $0xb0] sm:$0xff]
      %v2102 = vld [vmem:[%s19 + $0xb8] sm:$0xff]
      %v2103 = vld [vmem:[%s19 + $0xc0] sm:$0xff]
      %v2104 = vld [vmem:[%s19 + $0xc8] sm:$0xff]
      %v2105 = vld [vmem:[%s19 + $0xd0] sm:$0xff]
      %v2106 = vld [vmem:[%s19 + $0xd8] sm:$0xff]
      %v2107 = vld [vmem:[%s19 + $0xe0] sm:$0xff]
      %v2108 = vld [vmem:[%s19 + $0xe8] sm:$0xff]
      %v2109 = vld [vmem:[%s19 + $0xf0] sm:$0xff]
      %v2110 = vld [vmem:[%s19 + $0xf8] sm:$0xff]
      %v2111 = vld [vmem:[#allocation2] sm:$0x1e]
      %v2112 = vld [vmem:[#allocation2 + $0x8] sm:$0x1e]
      %v2113 = vld [vmem:[%s2026] sm:$0x1e]
      %v2114 = vld [vmem:[%s2026 + $0x8] sm:$0x1e]
      %v2115 = vld [vmem:[%s2033] sm:$0x1e]
      %v2116 = vld [vmem:[%s2033 + $0x8] sm:$0x1e]
      %v2117 = vld [vmem:[%s2042] sm:$0x1e]
      %v2118 = vld [vmem:[%s2042 + $0x8] sm:$0x1e]
      %v2121 = vrot.slane %v2111, 1
      %v2122 = vrot.slane %v2112, 1
      %v2127 = vrot.slane %v2113, 5
      %v2128 = vrot.slane %v2114, 5
      %v2133 = vrot.slane %v2115, 1
      %v2134 = vrot.slane %v2116, 1
      %v2139 = vrot.slane %v2117, 5
      %v2140 = vrot.slane %v2118, 5
      %v2143 = vsel %vm2072, %v2121, %v2127
      %v2144 = vsel %vm2072, %v2122, %v2128
      %v2145 = vsel %vm2072, %v2133, %v2139
      %v2146 = vsel %vm2072, %v2134, %v2140
      %v2147 = vpack.c.bf16 %v2145, %v2143
      %v2148 = vpack.c.bf16 %v2146, %v2144
      %s2149 = scalar_lea.vmem %s19, 256
      %v2150 = vld [vmem:[%s2149] sm:$0xff]
      %v2151 = vld [vmem:[%s2149 + $0x8] sm:$0xff]
      %v2152 = vld [vmem:[%s2149 + $0x10] sm:$0xff]
      %v2153 = vld [vmem:[%s2149 + $0x18] sm:$0xff]
      %v2154 = vld [vmem:[%s2149 + $0x20] sm:$0xff]
      %v2155 = vld [vmem:[%s2149 + $0x28] sm:$0xff]
      %v2156 = vld [vmem:[%s2149 + $0x30] sm:$0xff]
      %v2157 = vld [vmem:[%s2149 + $0x38] sm:$0xff]
      %v2158 = vld [vmem:[%s2149 + $0x40] sm:$0xff]
      %v2159 = vld [vmem:[%s2149 + $0x48] sm:$0xff]
      %v2160 = vld [vmem:[%s2149 + $0x50] sm:$0xff]
      %v2161 = vld [vmem:[%s2149 + $0x58] sm:$0xff]
      %v2162 = vld [vmem:[%s2149 + $0x60] sm:$0xff]
      %v2163 = vld [vmem:[%s2149 + $0x68] sm:$0xff]
      %v2164 = vld [vmem:[%s2149 + $0x70] sm:$0xff]
      %v2165 = vld [vmem:[%s2149 + $0x78] sm:$0xff]
      %v2166 = vld [vmem:[%s2149 + $0x80] sm:$0xff]
      %v2167 = vld [vmem:[%s2149 + $0x88] sm:$0xff]
      %v2168 = vld [vmem:[%s2149 + $0x90] sm:$0xff]
      %v2169 = vld [vmem:[%s2149 + $0x98] sm:$0xff]
      %v2170 = vld [vmem:[%s2149 + $0xa0] sm:$0xff]
      %v2171 = vld [vmem:[%s2149 + $0xa8] sm:$0xff]
      %v2172 = vld [vmem:[%s2149 + $0xb0] sm:$0xff]
      %v2173 = vld [vmem:[%s2149 + $0xb8] sm:$0xff]
      %v2174 = vld [vmem:[%s2149 + $0xc0] sm:$0xff]
      %v2175 = vld [vmem:[%s2149 + $0xc8] sm:$0xff]
      %v2176 = vld [vmem:[%s2149 + $0xd0] sm:$0xff]
      %v2177 = vld [vmem:[%s2149 + $0xd8] sm:$0xff]
      %v2178 = vld [vmem:[%s2149 + $0xe0] sm:$0xff]
      %v2179 = vld [vmem:[%s2149 + $0xe8] sm:$0xff]
      %v2180 = vld [vmem:[%s2149 + $0xf0] sm:$0xff]
      %v2181 = vld [vmem:[%s2149 + $0xf8] sm:$0xff]
      %v2214 = vunpack.c.l.b16 %v2150
      %v2215 = vunpack.c.h.b16 %v2150
      %v2216 = vunpack.c.l.b16 %v2151
      %v2217 = vunpack.c.h.b16 %v2151
      %v2218 = vunpack.c.l.b16 %v2152
      %v2219 = vunpack.c.h.b16 %v2152
      %v2220 = vunpack.c.l.b16 %v2153
      %v2221 = vunpack.c.h.b16 %v2153
      %v2222 = vunpack.c.l.b16 %v2154
      %v2223 = vunpack.c.h.b16 %v2154
      %v2224 = vunpack.c.l.b16 %v2155
      %v2225 = vunpack.c.h.b16 %v2155
      %v2226 = vunpack.c.l.b16 %v2156
      %v2227 = vunpack.c.h.b16 %v2156
      %v2228 = vunpack.c.l.b16 %v2157
      %v2229 = vunpack.c.h.b16 %v2157
      %v2230 = vunpack.c.l.b16 %v2158
      %v2231 = vunpack.c.h.b16 %v2158
      %v2232 = vunpack.c.l.b16 %v2159
      %v2233 = vunpack.c.h.b16 %v2159
      %v2234 = vunpack.c.l.b16 %v2160
      %v2235 = vunpack.c.h.b16 %v2160
      %v2236 = vunpack.c.l.b16 %v2161
      %v2237 = vunpack.c.h.b16 %v2161
      %v2238 = vunpack.c.l.b16 %v2162
      %v2239 = vunpack.c.h.b16 %v2162
      %v2240 = vunpack.c.l.b16 %v2163
      %v2241 = vunpack.c.h.b16 %v2163
      %v2242 = vunpack.c.l.b16 %v2164
      %v2243 = vunpack.c.h.b16 %v2164
      %v2244 = vunpack.c.l.b16 %v2165
      %v2245 = vunpack.c.h.b16 %v2165
      %v2246 = vunpack.c.l.b16 %v2166
      %v2247 = vunpack.c.h.b16 %v2166
      %v2248 = vunpack.c.l.b16 %v2167
      %v2249 = vunpack.c.h.b16 %v2167
      %v2250 = vunpack.c.l.b16 %v2168
      %v2251 = vunpack.c.h.b16 %v2168
      %v2252 = vunpack.c.l.b16 %v2169
      %v2253 = vunpack.c.h.b16 %v2169
      %v2254 = vunpack.c.l.b16 %v2170
      %v2255 = vunpack.c.h.b16 %v2170
      %v2256 = vunpack.c.l.b16 %v2171
      %v2257 = vunpack.c.h.b16 %v2171
      %v2258 = vunpack.c.l.b16 %v2172
      %v2259 = vunpack.c.h.b16 %v2172
      %v2260 = vunpack.c.l.b16 %v2173
      %v2261 = vunpack.c.h.b16 %v2173
      %v2262 = vunpack.c.l.b16 %v2174
      %v2263 = vunpack.c.h.b16 %v2174
      %v2264 = vunpack.c.l.b16 %v2175
      %v2265 = vunpack.c.h.b16 %v2175
      %v2266 = vunpack.c.l.b16 %v2176
      %v2267 = vunpack.c.h.b16 %v2176
      %v2268 = vunpack.c.l.b16 %v2177
      %v2269 = vunpack.c.h.b16 %v2177
      %v2270 = vunpack.c.l.b16 %v2178
      %v2271 = vunpack.c.h.b16 %v2178
      %v2272 = vunpack.c.l.b16 %v2179
      %v2273 = vunpack.c.h.b16 %v2179
      %v2274 = vunpack.c.l.b16 %v2180
      %v2275 = vunpack.c.h.b16 %v2180
      %v2276 = vunpack.c.l.b16 %v2181
      %v2277 = vunpack.c.h.b16 %v2181
      %v2278 = vpack.c.b16 %v2216, %v2214
      %v2279 = vpack.c.b16 %v2217, %v2215
      %v2280 = vpack.c.b16 %v2220, %v2218
      %v2281 = vpack.c.b16 %v2221, %v2219
      %v2282 = vpack.c.b16 %v2224, %v2222
      %v2283 = vpack.c.b16 %v2225, %v2223
      %v2284 = vpack.c.b16 %v2228, %v2226
      %v2285 = vpack.c.b16 %v2229, %v2227
      %v2286 = vpack.c.b16 %v2232, %v2230
      %v2287 = vpack.c.b16 %v2233, %v2231
      %v2288 = vpack.c.b16 %v2236, %v2234
      %v2289 = vpack.c.b16 %v2237, %v2235
      %v2290 = vpack.c.b16 %v2240, %v2238
      %v2291 = vpack.c.b16 %v2241, %v2239
      %v2292 = vpack.c.b16 %v2244, %v2242
      %v2293 = vpack.c.b16 %v2245, %v2243
      %v2294 = vpack.c.b16 %v2248, %v2246
      %v2295 = vpack.c.b16 %v2249, %v2247
      %v2296 = vpack.c.b16 %v2252, %v2250
      %v2297 = vpack.c.b16 %v2253, %v2251
      %v2298 = vpack.c.b16 %v2256, %v2254
      %v2299 = vpack.c.b16 %v2257, %v2255
      %v2300 = vpack.c.b16 %v2260, %v2258
      %v2301 = vpack.c.b16 %v2261, %v2259
      %v2302 = vpack.c.b16 %v2264, %v2262
      %v2303 = vpack.c.b16 %v2265, %v2263
      %v2304 = vpack.c.b16 %v2268, %v2266
      %v2305 = vpack.c.b16 %v2269, %v2267
      %v2306 = vpack.c.b16 %v2272, %v2270
      %v2307 = vpack.c.b16 %v2273, %v2271
      %v2308 = vpack.c.b16 %v2276, %v2274
      %v2309 = vpack.c.b16 %v2277, %v2275
      %2342 = vmatprep.subr.bf16.mxu0 %v2293
      %2343 = vmatpush1.bf16.msra.mxu0 %v2292
      %2344 = vmatprep.subr.bf16.mxu0 %v2291
      %2345 = vmatpush1.bf16.msra.mxu0 %v2290
      %2346 = vmatprep.subr.bf16.mxu0 %v2289
      %2347 = vmatpush1.bf16.msra.mxu0 %v2288
      %2348 = vmatprep.subr.bf16.mxu0 %v2287
      %2349 = vmatpush1.bf16.msra.mxu0 %v2286
      %2350 = vmatprep.subr.bf16.mxu0 %v2285
      %2351 = vmatpush1.bf16.msra.mxu0 %v2284
      %2352 = vmatprep.subr.bf16.mxu0 %v2283
      %2353 = vmatpush1.bf16.msra.mxu0 %v2282
      %2354 = vmatprep.subr.bf16.mxu0 %v2281
      %2355 = vmatpush1.bf16.msra.mxu0 %v2280
      %2356 = vmatprep.subr.bf16.mxu0 %v2279
      %2357 = vmatpush1.bf16.msra.mxu0 %v2278
      %2358 = vmatprep.subr.bf16.mxu0 %v2309
      %2359 = vmatpush2.bf16.msra.mxu0 %v2308
      %2360 = vmatprep.subr.bf16.mxu0 %v2307
      %2361 = vmatpush2.bf16.msra.mxu0 %v2306
      %2362 = vmatprep.subr.bf16.mxu0 %v2305
      %2363 = vmatpush2.bf16.msra.mxu0 %v2304
      %2364 = vmatprep.subr.bf16.mxu0 %v2303
      %2365 = vmatpush2.bf16.msra.mxu0 %v2302
      %2366 = vmatprep.subr.bf16.mxu0 %v2301
      %2367 = vmatpush2.bf16.msra.mxu0 %v2300
      %2368 = vmatprep.subr.bf16.mxu0 %v2299
      %2369 = vmatpush2.bf16.msra.mxu0 %v2298
      %2370 = vmatprep.subr.bf16.mxu0 %v2297
      %2371 = vmatpush2.bf16.msra.mxu0 %v2296
      %2372 = vmatprep.subr.bf16.mxu0 %v2295
      %2373 = vmatpush2.bf16.msra.mxu0 %v2294
      %2374 = vmatprep.mubr.bf16.mxu0 %v2148
      %2375 = vmatmul.mubr.bf16.gmra.mxu0 %v2147
      %v2376 = vpop.f32.mrf.mxu0
      %v2377 = vadd.f32 0.0, %v2376
      %v2378 = vpop.f32.mrf.mxu0
      %v2379 = vadd.f32 0.0, %v2378
      %v2380 = vpop.f32.mrf.mxu0
      %v2381 = vadd.f32 0.0, %v2380
      %v2382 = vpop.f32.mrf.mxu0
      %v2383 = vadd.f32 0.0, %v2382
      %2384 = vdwg.mxu0
      %v2417 = vunpack.c.l.b16 %v2079
      %v2418 = vunpack.c.h.b16 %v2079
      %v2419 = vunpack.c.l.b16 %v2080
      %v2420 = vunpack.c.h.b16 %v2080
      %v2421 = vunpack.c.l.b16 %v2081
      %v2422 = vunpack.c.h.b16 %v2081
      %v2423 = vunpack.c.l.b16 %v2082
      %v2424 = vunpack.c.h.b16 %v2082
      %v2425 = vunpack.c.l.b16 %v2083
      %v2426 = vunpack.c.h.b16 %v2083
      %v2427 = vunpack.c.l.b16 %v2084
      %v2428 = vunpack.c.h.b16 %v2084
      %v2429 = vunpack.c.l.b16 %v2085
      %v2430 = vunpack.c.h.b16 %v2085
      %v2431 = vunpack.c.l.b16 %v2086
      %v2432 = vunpack.c.h.b16 %v2086
      %v2433 = vunpack.c.l.b16 %v2087
      %v2434 = vunpack.c.h.b16 %v2087
      %v2435 = vunpack.c.l.b16 %v2088
      %v2436 = vunpack.c.h.b16 %v2088
      %v2437 = vunpack.c.l.b16 %v2089
      %v2438 = vunpack.c.h.b16 %v2089
      %v2439 = vunpack.c.l.b16 %v2090
      %v2440 = vunpack.c.h.b16 %v2090
      %v2441 = vunpack.c.l.b16 %v2091
      %v2442 = vunpack.c.h.b16 %v2091
      %v2443 = vunpack.c.l.b16 %v2092
      %v2444 = vunpack.c.h.b16 %v2092
      %v2445 = vunpack.c.l.b16 %v2093
      %v2446 = vunpack.c.h.b16 %v2093
      %v2447 = vunpack.c.l.b16 %v2094
      %v2448 = vunpack.c.h.b16 %v2094
      %v2449 = vunpack.c.l.b16 %v2095
      %v2450 = vunpack.c.h.b16 %v2095
      %v2451 = vunpack.c.l.b16 %v2096
      %v2452 = vunpack.c.h.b16 %v2096
      %v2453 = vunpack.c.l.b16 %v2097
      %v2454 = vunpack.c.h.b16 %v2097
      %v2455 = vunpack.c.l.b16 %v2098
      %v2456 = vunpack.c.h.b16 %v2098
      %v2457 = vunpack.c.l.b16 %v2099
      %v2458 = vunpack.c.h.b16 %v2099
      %v2459 = vunpack.c.l.b16 %v2100
      %v2460 = vunpack.c.h.b16 %v2100
      %v2461 = vunpack.c.l.b16 %v2101
      %v2462 = vunpack.c.h.b16 %v2101
      %v2463 = vunpack.c.l.b16 %v2102
      %v2464 = vunpack.c.h.b16 %v2102
      %v2465 = vunpack.c.l.b16 %v2103
      %v2466 = vunpack.c.h.b16 %v2103
      %v2467 = vunpack.c.l.b16 %v2104
      %v2468 = vunpack.c.h.b16 %v2104
      %v2469 = vunpack.c.l.b16 %v2105
      %v2470 = vunpack.c.h.b16 %v2105
      %v2471 = vunpack.c.l.b16 %v2106
      %v2472 = vunpack.c.h.b16 %v2106
      %v2473 = vunpack.c.l.b16 %v2107
      %v2474 = vunpack.c.h.b16 %v2107
      %v2475 = vunpack.c.l.b16 %v2108
      %v2476 = vunpack.c.h.b16 %v2108
      %v2477 = vunpack.c.l.b16 %v2109
      %v2478 = vunpack.c.h.b16 %v2109
      %v2479 = vunpack.c.l.b16 %v2110
      %v2480 = vunpack.c.h.b16 %v2110
      %v2481 = vpack.c.b16 %v2419, %v2417
      %v2482 = vpack.c.b16 %v2420, %v2418
      %v2483 = vpack.c.b16 %v2423, %v2421
      %v2484 = vpack.c.b16 %v2424, %v2422
      %v2485 = vpack.c.b16 %v2427, %v2425
      %v2486 = vpack.c.b16 %v2428, %v2426
      %v2487 = vpack.c.b16 %v2431, %v2429
      %v2488 = vpack.c.b16 %v2432, %v2430
      %v2489 = vpack.c.b16 %v2435, %v2433
      %v2490 = vpack.c.b16 %v2436, %v2434
      %v2491 = vpack.c.b16 %v2439, %v2437
      %v2492 = vpack.c.b16 %v2440, %v2438
      %v2493 = vpack.c.b16 %v2443, %v2441
      %v2494 = vpack.c.b16 %v2444, %v2442
      %v2495 = vpack.c.b16 %v2447, %v2445
      %v2496 = vpack.c.b16 %v2448, %v2446
      %v2497 = vpack.c.b16 %v2451, %v2449
      %v2498 = vpack.c.b16 %v2452, %v2450
      %v2499 = vpack.c.b16 %v2455, %v2453
      %v2500 = vpack.c.b16 %v2456, %v2454
      %v2501 = vpack.c.b16 %v2459, %v2457
      %v2502 = vpack.c.b16 %v2460, %v2458
      %v2503 = vpack.c.b16 %v2463, %v2461
      %v2504 = vpack.c.b16 %v2464, %v2462
      %v2505 = vpack.c.b16 %v2467, %v2465
      %v2506 = vpack.c.b16 %v2468, %v2466
      %v2507 = vpack.c.b16 %v2471, %v2469
      %v2508 = vpack.c.b16 %v2472, %v2470
      %v2509 = vpack.c.b16 %v2475, %v2473
      %v2510 = vpack.c.b16 %v2476, %v2474
      %v2511 = vpack.c.b16 %v2479, %v2477
      %v2512 = vpack.c.b16 %v2480, %v2478
      %2545 = vmatprep.subr.bf16.mxu0 %v2496
      %2546 = vmatpush1.bf16.msra.mxu0 %v2495
      %2547 = vmatprep.subr.bf16.mxu0 %v2494
      %2548 = vmatpush1.bf16.msra.mxu0 %v2493
      %2549 = vmatprep.subr.bf16.mxu0 %v2492
      %2550 = vmatpush1.bf16.msra.mxu0 %v2491
      %2551 = vmatprep.subr.bf16.mxu0 %v2490
      %2552 = vmatpush1.bf16.msra.mxu0 %v2489
      %2553 = vmatprep.subr.bf16.mxu0 %v2488
      %2554 = vmatpush1.bf16.msra.mxu0 %v2487
      %2555 = vmatprep.subr.bf16.mxu0 %v2486
      %2556 = vmatpush1.bf16.msra.mxu0 %v2485
      %2557 = vmatprep.subr.bf16.mxu0 %v2484
      %2558 = vmatpush1.bf16.msra.mxu0 %v2483
      %2559 = vmatprep.subr.bf16.mxu0 %v2482
      %2560 = vmatpush1.bf16.msra.mxu0 %v2481
      %2561 = vmatprep.subr.bf16.mxu0 %v2512
      %2562 = vmatpush2.bf16.msra.mxu0 %v2511
      %2563 = vmatprep.subr.bf16.mxu0 %v2510
      %2564 = vmatpush2.bf16.msra.mxu0 %v2509
      %2565 = vmatprep.subr.bf16.mxu0 %v2508
      %2566 = vmatpush2.bf16.msra.mxu0 %v2507
      %2567 = vmatprep.subr.bf16.mxu0 %v2506
      %2568 = vmatpush2.bf16.msra.mxu0 %v2505
      %2569 = vmatprep.subr.bf16.mxu0 %v2504
      %2570 = vmatpush2.bf16.msra.mxu0 %v2503
      %2571 = vmatprep.subr.bf16.mxu0 %v2502
      %2572 = vmatpush2.bf16.msra.mxu0 %v2501
      %2573 = vmatprep.subr.bf16.mxu0 %v2500
      %2574 = vmatpush2.bf16.msra.mxu0 %v2499
      %2575 = vmatprep.subr.bf16.mxu0 %v2498
      %2576 = vmatpush2.bf16.msra.mxu0 %v2497
      %2577 = vmatprep.mubr.bf16.mxu0 %v2078
      %2578 = vmatmul.mubr.bf16.gmra.mxu0 %v2077
      %v2579 = vpop.f32.mrf.mxu0
      %v2580 = vadd.f32 %v2377, %v2579
      %v2581 = vpop.f32.mrf.mxu0
      %v2582 = vadd.f32 %v2379, %v2581
      %v2583 = vpop.f32.mrf.mxu0
      %v2584 = vadd.f32 %v2381, %v2583
      %v2585 = vpop.f32.mrf.mxu0
      %v2586 = vadd.f32 %v2383, %v2585
      %2587 = vdwg.mxu0
      %v2588 = vld [vmem:[#allocation2] sm:$0x3c]
      %v2589 = vld [vmem:[#allocation2 + $0x8] sm:$0x3c]
      %v2590 = vld [vmem:[%s2026] sm:$0x3c]
      %v2591 = vld [vmem:[%s2026 + $0x8] sm:$0x3c]
      %v2592 = vld [vmem:[%s2033] sm:$0x3c]
      %v2593 = vld [vmem:[%s2033 + $0x8] sm:$0x3c]
      %v2594 = vld [vmem:[%s2042] sm:$0x3c]
      %v2595 = vld [vmem:[%s2042 + $0x8] sm:$0x3c]
      %v2598 = vrot.slane %v2588, 2
      %v2599 = vrot.slane %v2589, 2
      %v2604 = vrot.slane %v2590, 6
      %v2605 = vrot.slane %v2591, 6
      %v2610 = vrot.slane %v2592, 2
      %v2611 = vrot.slane %v2593, 2
      %v2616 = vrot.slane %v2594, 6
      %v2617 = vrot.slane %v2595, 6
      %v2620 = vsel %vm2072, %v2598, %v2604
      %v2621 = vsel %vm2072, %v2599, %v2605
      %v2622 = vsel %vm2072, %v2610, %v2616
      %v2623 = vsel %vm2072, %v2611, %v2617
      %v2624 = vpack.c.bf16 %v2622, %v2620
      %v2625 = vpack.c.bf16 %v2623, %v2621
      %s2626 = scalar_lea.vmem %s19, 512
      %v2627 = vld [vmem:[%s2626] sm:$0xff]
      %v2628 = vld [vmem:[%s2626 + $0x8] sm:$0xff]
      %v2629 = vld [vmem:[%s2626 + $0x10] sm:$0xff]
      %v2630 = vld [vmem:[%s2626 + $0x18] sm:$0xff]
      %v2631 = vld [vmem:[%s2626 + $0x20] sm:$0xff]
      %v2632 = vld [vmem:[%s2626 + $0x28] sm:$0xff]
      %v2633 = vld [vmem:[%s2626 + $0x30] sm:$0xff]
      %v2634 = vld [vmem:[%s2626 + $0x38] sm:$0xff]
      %v2635 = vld [vmem:[%s2626 + $0x40] sm:$0xff]
      %v2636 = vld [vmem:[%s2626 + $0x48] sm:$0xff]
      %v2637 = vld [vmem:[%s2626 + $0x50] sm:$0xff]
      %v2638 = vld [vmem:[%s2626 + $0x58] sm:$0xff]
      %v2639 = vld [vmem:[%s2626 + $0x60] sm:$0xff]
      %v2640 = vld [vmem:[%s2626 + $0x68] sm:$0xff]
      %v2641 = vld [vmem:[%s2626 + $0x70] sm:$0xff]
      %v2642 = vld [vmem:[%s2626 + $0x78] sm:$0xff]
      %v2643 = vld [vmem:[%s2626 + $0x80] sm:$0xff]
      %v2644 = vld [vmem:[%s2626 + $0x88] sm:$0xff]
      %v2645 = vld [vmem:[%s2626 + $0x90] sm:$0xff]
      %v2646 = vld [vmem:[%s2626 + $0x98] sm:$0xff]
      %v2647 = vld [vmem:[%s2626 + $0xa0] sm:$0xff]
      %v2648 = vld [vmem:[%s2626 + $0xa8] sm:$0xff]
      %v2649 = vld [vmem:[%s2626 + $0xb0] sm:$0xff]
      %v2650 = vld [vmem:[%s2626 + $0xb8] sm:$0xff]
      %v2651 = vld [vmem:[%s2626 + $0xc0] sm:$0xff]
      %v2652 = vld [vmem:[%s2626 + $0xc8] sm:$0xff]
      %v2653 = vld [vmem:[%s2626 + $0xd0] sm:$0xff]
      %v2654 = vld [vmem:[%s2626 + $0xd8] sm:$0xff]
      %v2655 = vld [vmem:[%s2626 + $0xe0] sm:$0xff]
      %v2656 = vld [vmem:[%s2626 + $0xe8] sm:$0xff]
      %v2657 = vld [vmem:[%s2626 + $0xf0] sm:$0xff]
      %v2658 = vld [vmem:[%s2626 + $0xf8] sm:$0xff]
      %v2691 = vunpack.c.l.b16 %v2627
      %v2692 = vunpack.c.h.b16 %v2627
      %v2693 = vunpack.c.l.b16 %v2628
      %v2694 = vunpack.c.h.b16 %v2628
      %v2695 = vunpack.c.l.b16 %v2629
      %v2696 = vunpack.c.h.b16 %v2629
      %v2697 = vunpack.c.l.b16 %v2630
      %v2698 = vunpack.c.h.b16 %v2630
      %v2699 = vunpack.c.l.b16 %v2631
      %v2700 = vunpack.c.h.b16 %v2631
      %v2701 = vunpack.c.l.b16 %v2632
      %v2702 = vunpack.c.h.b16 %v2632
      %v2703 = vunpack.c.l.b16 %v2633
      %v2704 = vunpack.c.h.b16 %v2633
      %v2705 = vunpack.c.l.b16 %v2634
      %v2706 = vunpack.c.h.b16 %v2634
      %v2707 = vunpack.c.l.b16 %v2635
      %v2708 = vunpack.c.h.b16 %v2635
      %v2709 = vunpack.c.l.b16 %v2636
      %v2710 = vunpack.c.h.b16 %v2636
      %v2711 = vunpack.c.l.b16 %v2637
      %v2712 = vunpack.c.h.b16 %v2637
      %v2713 = vunpack.c.l.b16 %v2638
      %v2714 = vunpack.c.h.b16 %v2638
      %v2715 = vunpack.c.l.b16 %v2639
      %v2716 = vunpack.c.h.b16 %v2639
      %v2717 = vunpack.c.l.b16 %v2640
      %v2718 = vunpack.c.h.b16 %v2640
      %v2719 = vunpack.c.l.b16 %v2641
      %v2720 = vunpack.c.h.b16 %v2641
      %v2721 = vunpack.c.l.b16 %v2642
      %v2722 = vunpack.c.h.b16 %v2642
      %v2723 = vunpack.c.l.b16 %v2643
      %v2724 = vunpack.c.h.b16 %v2643
      %v2725 = vunpack.c.l.b16 %v2644
      %v2726 = vunpack.c.h.b16 %v2644
      %v2727 = vunpack.c.l.b16 %v2645
      %v2728 = vunpack.c.h.b16 %v2645
      %v2729 = vunpack.c.l.b16 %v2646
      %v2730 = vunpack.c.h.b16 %v2646
      %v2731 = vunpack.c.l.b16 %v2647
      %v2732 = vunpack.c.h.b16 %v2647
      %v2733 = vunpack.c.l.b16 %v2648
      %v2734 = vunpack.c.h.b16 %v2648
      %v2735 = vunpack.c.l.b16 %v2649
      %v2736 = vunpack.c.h.b16 %v2649
      %v2737 = vunpack.c.l.b16 %v2650
      %v2738 = vunpack.c.h.b16 %v2650
      %v2739 = vunpack.c.l.b16 %v2651
      %v2740 = vunpack.c.h.b16 %v2651
      %v2741 = vunpack.c.l.b16 %v2652
      %v2742 = vunpack.c.h.b16 %v2652
      %v2743 = vunpack.c.l.b16 %v2653
      %v2744 = vunpack.c.h.b16 %v2653
      %v2745 = vunpack.c.l.b16 %v2654
      %v2746 = vunpack.c.h.b16 %v2654
      %v2747 = vunpack.c.l.b16 %v2655
      %v2748 = vunpack.c.h.b16 %v2655
      %v2749 = vunpack.c.l.b16 %v2656
      %v2750 = vunpack.c.h.b16 %v2656
      %v2751 = vunpack.c.l.b16 %v2657
      %v2752 = vunpack.c.h.b16 %v2657
      %v2753 = vunpack.c.l.b16 %v2658
      %v2754 = vunpack.c.h.b16 %v2658
      %v2755 = vpack.c.b16 %v2693, %v2691
      %v2756 = vpack.c.b16 %v2694, %v2692
      %v2757 = vpack.c.b16 %v2697, %v2695
      %v2758 = vpack.c.b16 %v2698, %v2696
      %v2759 = vpack.c.b16 %v2701, %v2699
      %v2760 = vpack.c.b16 %v2702, %v2700
      %v2761 = vpack.c.b16 %v2705, %v2703
      %v2762 = vpack.c.b16 %v2706, %v2704
      %v2763 = vpack.c.b16 %v2709, %v2707
      %v2764 = vpack.c.b16 %v2710, %v2708
      %v2765 = vpack.c.b16 %v2713, %v2711
      %v2766 = vpack.c.b16 %v2714, %v2712
      %v2767 = vpack.c.b16 %v2717, %v2715
      %v2768 = vpack.c.b16 %v2718, %v2716
      %v2769 = vpack.c.b16 %v2721, %v2719
      %v2770 = vpack.c.b16 %v2722, %v2720
      %v2771 = vpack.c.b16 %v2725, %v2723
      %v2772 = vpack.c.b16 %v2726, %v2724
      %v2773 = vpack.c.b16 %v2729, %v2727
      %v2774 = vpack.c.b16 %v2730, %v2728
      %v2775 = vpack.c.b16 %v2733, %v2731
      %v2776 = vpack.c.b16 %v2734, %v2732
      %v2777 = vpack.c.b16 %v2737, %v2735
      %v2778 = vpack.c.b16 %v2738, %v2736
      %v2779 = vpack.c.b16 %v2741, %v2739
      %v2780 = vpack.c.b16 %v2742, %v2740
      %v2781 = vpack.c.b16 %v2745, %v2743
      %v2782 = vpack.c.b16 %v2746, %v2744
      %v2783 = vpack.c.b16 %v2749, %v2747
      %v2784 = vpack.c.b16 %v2750, %v2748
      %v2785 = vpack.c.b16 %v2753, %v2751
      %v2786 = vpack.c.b16 %v2754, %v2752
      %2819 = vmatprep.subr.bf16.mxu0 %v2770
      %2820 = vmatpush1.bf16.msra.mxu0 %v2769
      %2821 = vmatprep.subr.bf16.mxu0 %v2768
      %2822 = vmatpush1.bf16.msra.mxu0 %v2767
      %2823 = vmatprep.subr.bf16.mxu0 %v2766
      %2824 = vmatpush1.bf16.msra.mxu0 %v2765
      %2825 = vmatprep.subr.bf16.mxu0 %v2764
      %2826 = vmatpush1.bf16.msra.mxu0 %v2763
      %2827 = vmatprep.subr.bf16.mxu0 %v2762
      %2828 = vmatpush1.bf16.msra.mxu0 %v2761
      %2829 = vmatprep.subr.bf16.mxu0 %v2760
      %2830 = vmatpush1.bf16.msra.mxu0 %v2759
      %2831 = vmatprep.subr.bf16.mxu0 %v2758
      %2832 = vmatpush1.bf16.msra.mxu0 %v2757
      %2833 = vmatprep.subr.bf16.mxu0 %v2756
      %2834 = vmatpush1.bf16.msra.mxu0 %v2755
      %2835 = vmatprep.subr.bf16.mxu0 %v2786
      %2836 = vmatpush2.bf16.msra.mxu0 %v2785
      %2837 = vmatprep.subr.bf16.mxu0 %v2784
      %2838 = vmatpush2.bf16.msra.mxu0 %v2783
      %2839 = vmatprep.subr.bf16.mxu0 %v2782
      %2840 = vmatpush2.bf16.msra.mxu0 %v2781
      %2841 = vmatprep.subr.bf16.mxu0 %v2780
      %2842 = vmatpush2.bf16.msra.mxu0 %v2779
      %2843 = vmatprep.subr.bf16.mxu0 %v2778
      %2844 = vmatpush2.bf16.msra.mxu0 %v2777
      %2845 = vmatprep.subr.bf16.mxu0 %v2776
      %2846 = vmatpush2.bf16.msra.mxu0 %v2775
      %2847 = vmatprep.subr.bf16.mxu0 %v2774
      %2848 = vmatpush2.bf16.msra.mxu0 %v2773
      %2849 = vmatprep.subr.bf16.mxu0 %v2772
      %2850 = vmatpush2.bf16.msra.mxu0 %v2771
      %2851 = vmatprep.mubr.bf16.mxu0 %v2625
      %2852 = vmatmul.mubr.bf16.gmra.mxu0 %v2624
      %v2853 = vpop.f32.mrf.mxu0
      %v2854 = vadd.f32 0.0, %v2853
      %v2855 = vpop.f32.mrf.mxu0
      %v2856 = vadd.f32 0.0, %v2855
      %v2857 = vpop.f32.mrf.mxu0
      %v2858 = vadd.f32 0.0, %v2857
      %v2859 = vpop.f32.mrf.mxu0
      %v2860 = vadd.f32 0.0, %v2859
      %2861 = vdwg.mxu0
      %v2862 = vadd.f32 %v2580, %v2854
      %v2863 = vadd.f32 %v2582, %v2856
      %v2864 = vadd.f32 %v2584, %v2858
      %v2865 = vadd.f32 %v2586, %v2860
      %v2866 = vld [vmem:[%s2049] sm:$0xf]
      %v2867 = vld [vmem:[%s2049 + $0x8] sm:$0xf]
      %v2870 = vrot.slane %v2056, 4
      %v2871 = vrot.slane %v2057, 4
      %v2876 = vrot.slane %v2866, 4
      %v2877 = vrot.slane %v2867, 4
      %v2880 = vsel %vm2072, %v2054, %v2870
      %v2881 = vsel %vm2072, %v2055, %v2871
      %v2882 = vsel %vm2072, %v2058, %v2876
      %v2883 = vsel %vm2072, %v2059, %v2877
      %v2884 = vpack.c.bf16 %v2882, %v2880
      %v2885 = vpack.c.bf16 %v2883, %v2881
      %s2886 = scalar_lea.vmem %s19, 768
      %v2887 = vld [vmem:[%s2886] sm:$0xff]
      %v2888 = vld [vmem:[%s2886 + $0x8] sm:$0xff]
      %v2889 = vld [vmem:[%s2886 + $0x10] sm:$0xff]
      %v2890 = vld [vmem:[%s2886 + $0x18] sm:$0xff]
      %v2891 = vld [vmem:[%s2886 + $0x20] sm:$0xff]
      %v2892 = vld [vmem:[%s2886 + $0x28] sm:$0xff]
      %v2893 = vld [vmem:[%s2886 + $0x30] sm:$0xff]
      %v2894 = vld [vmem:[%s2886 + $0x38] sm:$0xff]
      %v2895 = vld [vmem:[%s2886 + $0x40] sm:$0xff]
      %v2896 = vld [vmem:[%s2886 + $0x48] sm:$0xff]
      %v2897 = vld [vmem:[%s2886 + $0x50] sm:$0xff]
      %v2898 = vld [vmem:[%s2886 + $0x58] sm:$0xff]
      %v2899 = vld [vmem:[%s2886 + $0x60] sm:$0xff]
      %v2900 = vld [vmem:[%s2886 + $0x68] sm:$0xff]
      %v2901 = vld [vmem:[%s2886 + $0x70] sm:$0xff]
      %v2902 = vld [vmem:[%s2886 + $0x78] sm:$0xff]
      %v2903 = vld [vmem:[%s2886 + $0x80] sm:$0xff]
      %v2904 = vld [vmem:[%s2886 + $0x88] sm:$0xff]
      %v2905 = vld [vmem:[%s2886 + $0x90] sm:$0xff]
      %v2906 = vld [vmem:[%s2886 + $0x98] sm:$0xff]
      %v2907 = vld [vmem:[%s2886 + $0xa0] sm:$0xff]
      %v2908 = vld [vmem:[%s2886 + $0xa8] sm:$0xff]
      %v2909 = vld [vmem:[%s2886 + $0xb0] sm:$0xff]
      %v2910 = vld [vmem:[%s2886 + $0xb8] sm:$0xff]
      %v2911 = vld [vmem:[%s2886 + $0xc0] sm:$0xff]
      %v2912 = vld [vmem:[%s2886 + $0xc8] sm:$0xff]
      %v2913 = vld [vmem:[%s2886 + $0xd0] sm:$0xff]
      %v2914 = vld [vmem:[%s2886 + $0xd8] sm:$0xff]
      %v2915 = vld [vmem:[%s2886 + $0xe0] sm:$0xff]
      %v2916 = vld [vmem:[%s2886 + $0xe8] sm:$0xff]
      %v2917 = vld [vmem:[%s2886 + $0xf0] sm:$0xff]
      %v2918 = vld [vmem:[%s2886 + $0xf8] sm:$0xff]
      %v2951 = vunpack.c.l.b16 %v2887
      %v2952 = vunpack.c.h.b16 %v2887
      %v2953 = vunpack.c.l.b16 %v2888
      %v2954 = vunpack.c.h.b16 %v2888
      %v2955 = vunpack.c.l.b16 %v2889
      %v2956 = vunpack.c.h.b16 %v2889
      %v2957 = vunpack.c.l.b16 %v2890
      %v2958 = vunpack.c.h.b16 %v2890
      %v2959 = vunpack.c.l.b16 %v2891
      %v2960 = vunpack.c.h.b16 %v2891
      %v2961 = vunpack.c.l.b16 %v2892
      %v2962 = vunpack.c.h.b16 %v2892
      %v2963 = vunpack.c.l.b16 %v2893
      %v2964 = vunpack.c.h.b16 %v2893
      %v2965 = vunpack.c.l.b16 %v2894
      %v2966 = vunpack.c.h.b16 %v2894
      %v2967 = vunpack.c.l.b16 %v2895
      %v2968 = vunpack.c.h.b16 %v2895
      %v2969 = vunpack.c.l.b16 %v2896
      %v2970 = vunpack.c.h.b16 %v2896
      %v2971 = vunpack.c.l.b16 %v2897
      %v2972 = vunpack.c.h.b16 %v2897
      %v2973 = vunpack.c.l.b16 %v2898
      %v2974 = vunpack.c.h.b16 %v2898
      %v2975 = vunpack.c.l.b16 %v2899
      %v2976 = vunpack.c.h.b16 %v2899
      %v2977 = vunpack.c.l.b16 %v2900
      %v2978 = vunpack.c.h.b16 %v2900
      %v2979 = vunpack.c.l.b16 %v2901
      %v2980 = vunpack.c.h.b16 %v2901
      %v2981 = vunpack.c.l.b16 %v2902
      %v2982 = vunpack.c.h.b16 %v2902
      %v2983 = vunpack.c.l.b16 %v2903
      %v2984 = vunpack.c.h.b16 %v2903
      %v2985 = vunpack.c.l.b16 %v2904
      %v2986 = vunpack.c.h.b16 %v2904
      %v2987 = vunpack.c.l.b16 %v2905
      %v2988 = vunpack.c.h.b16 %v2905
      %v2989 = vunpack.c.l.b16 %v2906
      %v2990 = vunpack.c.h.b16 %v2906
      %v2991 = vunpack.c.l.b16 %v2907
      %v2992 = vunpack.c.h.b16 %v2907
      %v2993 = vunpack.c.l.b16 %v2908
      %v2994 = vunpack.c.h.b16 %v2908
      %v2995 = vunpack.c.l.b16 %v2909
      %v2996 = vunpack.c.h.b16 %v2909
      %v2997 = vunpack.c.l.b16 %v2910
      %v2998 = vunpack.c.h.b16 %v2910
      %v2999 = vunpack.c.l.b16 %v2911
      %v3000 = vunpack.c.h.b16 %v2911
      %v3001 = vunpack.c.l.b16 %v2912
      %v3002 = vunpack.c.h.b16 %v2912
      %v3003 = vunpack.c.l.b16 %v2913
      %v3004 = vunpack.c.h.b16 %v2913
      %v3005 = vunpack.c.l.b16 %v2914
      %v3006 = vunpack.c.h.b16 %v2914
      %v3007 = vunpack.c.l.b16 %v2915
      %v3008 = vunpack.c.h.b16 %v2915
      %v3009 = vunpack.c.l.b16 %v2916
      %v3010 = vunpack.c.h.b16 %v2916
      %v3011 = vunpack.c.l.b16 %v2917
      %v3012 = vunpack.c.h.b16 %v2917
      %v3013 = vunpack.c.l.b16 %v2918
      %v3014 = vunpack.c.h.b16 %v2918
      %v3015 = vpack.c.b16 %v2953, %v2951
      %v3016 = vpack.c.b16 %v2954, %v2952
      %v3017 = vpack.c.b16 %v2957, %v2955
      %v3018 = vpack.c.b16 %v2958, %v2956
      %v3019 = vpack.c.b16 %v2961, %v2959
      %v3020 = vpack.c.b16 %v2962, %v2960
      %v3021 = vpack.c.b16 %v2965, %v2963
      %v3022 = vpack.c.b16 %v2966, %v2964
      %v3023 = vpack.c.b16 %v2969, %v2967
      %v3024 = vpack.c.b16 %v2970, %v2968
      %v3025 = vpack.c.b16 %v2973, %v2971
      %v3026 = vpack.c.b16 %v2974, %v2972
      %v3027 = vpack.c.b16 %v2977, %v2975
      %v3028 = vpack.c.b16 %v2978, %v2976
      %v3029 = vpack.c.b16 %v2981, %v2979
      %v3030 = vpack.c.b16 %v2982, %v2980
      %v3031 = vpack.c.b16 %v2985, %v2983
      %v3032 = vpack.c.b16 %v2986, %v2984
      %v3033 = vpack.c.b16 %v2989, %v2987
      %v3034 = vpack.c.b16 %v2990, %v2988
      %v3035 = vpack.c.b16 %v2993, %v2991
      %v3036 = vpack.c.b16 %v2994, %v2992
      %v3037 = vpack.c.b16 %v2997, %v2995
      %v3038 = vpack.c.b16 %v2998, %v2996
      %v3039 = vpack.c.b16 %v3001, %v2999
      %v3040 = vpack.c.b16 %v3002, %v3000
      %v3041 = vpack.c.b16 %v3005, %v3003
      %v3042 = vpack.c.b16 %v3006, %v3004
      %v3043 = vpack.c.b16 %v3009, %v3007
      %v3044 = vpack.c.b16 %v3010, %v3008
      %v3045 = vpack.c.b16 %v3013, %v3011
      %v3046 = vpack.c.b16 %v3014, %v3012
      %3079 = vmatprep.subr.bf16.mxu0 %v3030
      %3080 = vmatpush1.bf16.msra.mxu0 %v3029
      %3081 = vmatprep.subr.bf16.mxu0 %v3028
      %3082 = vmatpush1.bf16.msra.mxu0 %v3027
      %3083 = vmatprep.subr.bf16.mxu0 %v3026
      %3084 = vmatpush1.bf16.msra.mxu0 %v3025
      %3085 = vmatprep.subr.bf16.mxu0 %v3024
      %3086 = vmatpush1.bf16.msra.mxu0 %v3023
      %3087 = vmatprep.subr.bf16.mxu0 %v3022
      %3088 = vmatpush1.bf16.msra.mxu0 %v3021
      %3089 = vmatprep.subr.bf16.mxu0 %v3020
      %3090 = vmatpush1.bf16.msra.mxu0 %v3019
      %3091 = vmatprep.subr.bf16.mxu0 %v3018
      %3092 = vmatpush1.bf16.msra.mxu0 %v3017
      %3093 = vmatprep.subr.bf16.mxu0 %v3016
      %3094 = vmatpush1.bf16.msra.mxu0 %v3015
      %3095 = vmatprep.subr.bf16.mxu0 %v3046
      %3096 = vmatpush2.bf16.msra.mxu0 %v3045
      %3097 = vmatprep.subr.bf16.mxu0 %v3044
      %3098 = vmatpush2.bf16.msra.mxu0 %v3043
      %3099 = vmatprep.subr.bf16.mxu0 %v3042
      %3100 = vmatpush2.bf16.msra.mxu0 %v3041
      %3101 = vmatprep.subr.bf16.mxu0 %v3040
      %3102 = vmatpush2.bf16.msra.mxu0 %v3039
      %3103 = vmatprep.subr.bf16.mxu0 %v3038
      %3104 = vmatpush2.bf16.msra.mxu0 %v3037
      %3105 = vmatprep.subr.bf16.mxu0 %v3036
      %3106 = vmatpush2.bf16.msra.mxu0 %v3035
      %3107 = vmatprep.subr.bf16.mxu0 %v3034
      %3108 = vmatpush2.bf16.msra.mxu0 %v3033
      %3109 = vmatprep.subr.bf16.mxu0 %v3032
      %3110 = vmatpush2.bf16.msra.mxu0 %v3031
      %3111 = vmatprep.mubr.bf16.mxu0 %v2885
      %3112 = vmatmul.mubr.bf16.gmra.mxu0 %v2884
      %v3113 = vpop.f32.mrf.mxu0
      %v3114 = vadd.f32 0.0, %v3113
      %v3115 = vpop.f32.mrf.mxu0
      %v3116 = vadd.f32 0.0, %v3115
      %v3117 = vpop.f32.mrf.mxu0
      %v3118 = vadd.f32 0.0, %v3117
      %v3119 = vpop.f32.mrf.mxu0
      %v3120 = vadd.f32 0.0, %v3119
      %3121 = vdwg.mxu0
      %v3122 = vadd.f32 %v2862, %v3114
      %v3123 = vadd.f32 %v2863, %v3116
      %v3124 = vadd.f32 %v2864, %v3118
      %v3125 = vadd.f32 %v2865, %v3120
      %v3126 = vld [vmem:[%s2049] sm:$0x1e]
      %v3127 = vld [vmem:[%s2049 + $0x8] sm:$0x1e]
      %v3128 = vrot.slane %v2113, 1
      %v3129 = vrot.slane %v2114, 1
      %v3132 = vrot.slane %v2115, 5
      %v3133 = vrot.slane %v2116, 5
      %v3136 = vrot.slane %v2117, 1
      %v3137 = vrot.slane %v2118, 1
      %v3142 = vrot.slane %v3126, 5
      %v3143 = vrot.slane %v3127, 5
      %v3146 = vsel %vm2072, %v3128, %v3132
      %v3147 = vsel %vm2072, %v3129, %v3133
      %v3148 = vsel %vm2072, %v3136, %v3142
      %v3149 = vsel %vm2072, %v3137, %v3143
      %v3150 = vpack.c.bf16 %v3148, %v3146
      %v3151 = vpack.c.bf16 %v3149, %v3147
      %s3152 = scalar_lea.vmem %s19, 1024
      %v3153 = vld [vmem:[%s3152] sm:$0xff]
      %v3154 = vld [vmem:[%s3152 + $0x8] sm:$0xff]
      %v3155 = vld [vmem:[%s3152 + $0x10] sm:$0xff]
      %v3156 = vld [vmem:[%s3152 + $0x18] sm:$0xff]
      %v3157 = vld [vmem:[%s3152 + $0x20] sm:$0xff]
      %v3158 = vld [vmem:[%s3152 + $0x28] sm:$0xff]
      %v3159 = vld [vmem:[%s3152 + $0x30] sm:$0xff]
      %v3160 = vld [vmem:[%s3152 + $0x38] sm:$0xff]
      %v3161 = vld [vmem:[%s3152 + $0x40] sm:$0xff]
      %v3162 = vld [vmem:[%s3152 + $0x48] sm:$0xff]
      %v3163 = vld [vmem:[%s3152 + $0x50] sm:$0xff]
      %v3164 = vld [vmem:[%s3152 + $0x58] sm:$0xff]
      %v3165 = vld [vmem:[%s3152 + $0x60] sm:$0xff]
      %v3166 = vld [vmem:[%s3152 + $0x68] sm:$0xff]
      %v3167 = vld [vmem:[%s3152 + $0x70] sm:$0xff]
      %v3168 = vld [vmem:[%s3152 + $0x78] sm:$0xff]
      %v3169 = vld [vmem:[%s3152 + $0x80] sm:$0xff]
      %v3170 = vld [vmem:[%s3152 + $0x88] sm:$0xff]
      %v3171 = vld [vmem:[%s3152 + $0x90] sm:$0xff]
      %v3172 = vld [vmem:[%s3152 + $0x98] sm:$0xff]
      %v3173 = vld [vmem:[%s3152 + $0xa0] sm:$0xff]
      %v3174 = vld [vmem:[%s3152 + $0xa8] sm:$0xff]
      %v3175 = vld [vmem:[%s3152 + $0xb0] sm:$0xff]
      %v3176 = vld [vmem:[%s3152 + $0xb8] sm:$0xff]
      %v3177 = vld [vmem:[%s3152 + $0xc0] sm:$0xff]
      %v3178 = vld [vmem:[%s3152 + $0xc8] sm:$0xff]
      %v3179 = vld [vmem:[%s3152 + $0xd0] sm:$0xff]
      %v3180 = vld [vmem:[%s3152 + $0xd8] sm:$0xff]
      %v3181 = vld [vmem:[%s3152 + $0xe0] sm:$0xff]
      %v3182 = vld [vmem:[%s3152 + $0xe8] sm:$0xff]
      %v3183 = vld [vmem:[%s3152 + $0xf0] sm:$0xff]
      %v3184 = vld [vmem:[%s3152 + $0xf8] sm:$0xff]
      %v3217 = vunpack.c.l.b16 %v3153
      %v3218 = vunpack.c.h.b16 %v3153
      %v3219 = vunpack.c.l.b16 %v3154
      %v3220 = vunpack.c.h.b16 %v3154
      %v3221 = vunpack.c.l.b16 %v3155
      %v3222 = vunpack.c.h.b16 %v3155
      %v3223 = vunpack.c.l.b16 %v3156
      %v3224 = vunpack.c.h.b16 %v3156
      %v3225 = vunpack.c.l.b16 %v3157
      %v3226 = vunpack.c.h.b16 %v3157
      %v3227 = vunpack.c.l.b16 %v3158
      %v3228 = vunpack.c.h.b16 %v3158
      %v3229 = vunpack.c.l.b16 %v3159
      %v3230 = vunpack.c.h.b16 %v3159
      %v3231 = vunpack.c.l.b16 %v3160
      %v3232 = vunpack.c.h.b16 %v3160
      %v3233 = vunpack.c.l.b16 %v3161
      %v3234 = vunpack.c.h.b16 %v3161
      %v3235 = vunpack.c.l.b16 %v3162
      %v3236 = vunpack.c.h.b16 %v3162
      %v3237 = vunpack.c.l.b16 %v3163
      %v3238 = vunpack.c.h.b16 %v3163
      %v3239 = vunpack.c.l.b16 %v3164
      %v3240 = vunpack.c.h.b16 %v3164
      %v3241 = vunpack.c.l.b16 %v3165
      %v3242 = vunpack.c.h.b16 %v3165
      %v3243 = vunpack.c.l.b16 %v3166
      %v3244 = vunpack.c.h.b16 %v3166
      %v3245 = vunpack.c.l.b16 %v3167
      %v3246 = vunpack.c.h.b16 %v3167
      %v3247 = vunpack.c.l.b16 %v3168
      %v3248 = vunpack.c.h.b16 %v3168
      %v3249 = vunpack.c.l.b16 %v3169
      %v3250 = vunpack.c.h.b16 %v3169
      %v3251 = vunpack.c.l.b16 %v3170
      %v3252 = vunpack.c.h.b16 %v3170
      %v3253 = vunpack.c.l.b16 %v3171
      %v3254 = vunpack.c.h.b16 %v3171
      %v3255 = vunpack.c.l.b16 %v3172
      %v3256 = vunpack.c.h.b16 %v3172
      %v3257 = vunpack.c.l.b16 %v3173
      %v3258 = vunpack.c.h.b16 %v3173
      %v3259 = vunpack.c.l.b16 %v3174
      %v3260 = vunpack.c.h.b16 %v3174
      %v3261 = vunpack.c.l.b16 %v3175
      %v3262 = vunpack.c.h.b16 %v3175
      %v3263 = vunpack.c.l.b16 %v3176
      %v3264 = vunpack.c.h.b16 %v3176
      %v3265 = vunpack.c.l.b16 %v3177
      %v3266 = vunpack.c.h.b16 %v3177
      %v3267 = vunpack.c.l.b16 %v3178
      %v3268 = vunpack.c.h.b16 %v3178
      %v3269 = vunpack.c.l.b16 %v3179
      %v3270 = vunpack.c.h.b16 %v3179
      %v3271 = vunpack.c.l.b16 %v3180
      %v3272 = vunpack.c.h.b16 %v3180
      %v3273 = vunpack.c.l.b16 %v3181
      %v3274 = vunpack.c.h.b16 %v3181
      %v3275 = vunpack.c.l.b16 %v3182
      %v3276 = vunpack.c.h.b16 %v3182
      %v3277 = vunpack.c.l.b16 %v3183
      %v3278 = vunpack.c.h.b16 %v3183
      %v3279 = vunpack.c.l.b16 %v3184
      %v3280 = vunpack.c.h.b16 %v3184
      %v3281 = vpack.c.b16 %v3219, %v3217
      %v3282 = vpack.c.b16 %v3220, %v3218
      %v3283 = vpack.c.b16 %v3223, %v3221
      %v3284 = vpack.c.b16 %v3224, %v3222
      %v3285 = vpack.c.b16 %v3227, %v3225
      %v3286 = vpack.c.b16 %v3228, %v3226
      %v3287 = vpack.c.b16 %v3231, %v3229
      %v3288 = vpack.c.b16 %v3232, %v3230
      %v3289 = vpack.c.b16 %v3235, %v3233
      %v3290 = vpack.c.b16 %v3236, %v3234
      %v3291 = vpack.c.b16 %v3239, %v3237
      %v3292 = vpack.c.b16 %v3240, %v3238
      %v3293 = vpack.c.b16 %v3243, %v3241
      %v3294 = vpack.c.b16 %v3244, %v3242
      %v3295 = vpack.c.b16 %v3247, %v3245
      %v3296 = vpack.c.b16 %v3248, %v3246
      %v3297 = vpack.c.b16 %v3251, %v3249
      %v3298 = vpack.c.b16 %v3252, %v3250
      %v3299 = vpack.c.b16 %v3255, %v3253
      %v3300 = vpack.c.b16 %v3256, %v3254
      %v3301 = vpack.c.b16 %v3259, %v3257
      %v3302 = vpack.c.b16 %v3260, %v3258
      %v3303 = vpack.c.b16 %v3263, %v3261
      %v3304 = vpack.c.b16 %v3264, %v3262
      %v3305 = vpack.c.b16 %v3267, %v3265
      %v3306 = vpack.c.b16 %v3268, %v3266
      %v3307 = vpack.c.b16 %v3271, %v3269
      %v3308 = vpack.c.b16 %v3272, %v3270
      %v3309 = vpack.c.b16 %v3275, %v3273
      %v3310 = vpack.c.b16 %v3276, %v3274
      %v3311 = vpack.c.b16 %v3279, %v3277
      %v3312 = vpack.c.b16 %v3280, %v3278
      %3345 = vmatprep.subr.bf16.mxu0 %v3296
      %3346 = vmatpush1.bf16.msra.mxu0 %v3295
      %3347 = vmatprep.subr.bf16.mxu0 %v3294
      %3348 = vmatpush1.bf16.msra.mxu0 %v3293
      %3349 = vmatprep.subr.bf16.mxu0 %v3292
      %3350 = vmatpush1.bf16.msra.mxu0 %v3291
      %3351 = vmatprep.subr.bf16.mxu0 %v3290
      %3352 = vmatpush1.bf16.msra.mxu0 %v3289
      %3353 = vmatprep.subr.bf16.mxu0 %v3288
      %3354 = vmatpush1.bf16.msra.mxu0 %v3287
      %3355 = vmatprep.subr.bf16.mxu0 %v3286
      %3356 = vmatpush1.bf16.msra.mxu0 %v3285
      %3357 = vmatprep.subr.bf16.mxu0 %v3284
      %3358 = vmatpush1.bf16.msra.mxu0 %v3283
      %3359 = vmatprep.subr.bf16.mxu0 %v3282
      %3360 = vmatpush1.bf16.msra.mxu0 %v3281
      %3361 = vmatprep.subr.bf16.mxu0 %v3312
      %3362 = vmatpush2.bf16.msra.mxu0 %v3311
      %3363 = vmatprep.subr.bf16.mxu0 %v3310
      %3364 = vmatpush2.bf16.msra.mxu0 %v3309
      %3365 = vmatprep.subr.bf16.mxu0 %v3308
      %3366 = vmatpush2.bf16.msra.mxu0 %v3307
      %3367 = vmatprep.subr.bf16.mxu0 %v3306
      %3368 = vmatpush2.bf16.msra.mxu0 %v3305
      %3369 = vmatprep.subr.bf16.mxu0 %v3304
      %3370 = vmatpush2.bf16.msra.mxu0 %v3303
      %3371 = vmatprep.subr.bf16.mxu0 %v3302
      %3372 = vmatpush2.bf16.msra.mxu0 %v3301
      %3373 = vmatprep.subr.bf16.mxu0 %v3300
      %3374 = vmatpush2.bf16.msra.mxu0 %v3299
      %3375 = vmatprep.subr.bf16.mxu0 %v3298
      %3376 = vmatpush2.bf16.msra.mxu0 %v3297
      %3377 = vmatprep.mubr.bf16.mxu0 %v3151
      %3378 = vmatmul.mubr.bf16.gmra.mxu0 %v3150
      %v3379 = vpop.f32.mrf.mxu0
      %v3380 = vadd.f32 0.0, %v3379
      %v3381 = vpop.f32.mrf.mxu0
      %v3382 = vadd.f32 0.0, %v3381
      %v3383 = vpop.f32.mrf.mxu0
      %v3384 = vadd.f32 0.0, %v3383
      %v3385 = vpop.f32.mrf.mxu0
      %v3386 = vadd.f32 0.0, %v3385
      %3387 = vdwg.mxu0
      %v3388 = vadd.f32 %v3122, %v3380
      %v3389 = vadd.f32 %v3123, %v3382
      %v3390 = vadd.f32 %v3124, %v3384
      %v3391 = vadd.f32 %v3125, %v3386
      %v3392 = vld [vmem:[%s2049] sm:$0x3c]
      %v3393 = vld [vmem:[%s2049 + $0x8] sm:$0x3c]
      %v3394 = vrot.slane %v2590, 2
      %v3395 = vrot.slane %v2591, 2
      %v3398 = vrot.slane %v2592, 6
      %v3399 = vrot.slane %v2593, 6
      %v3402 = vrot.slane %v2594, 2
      %v3403 = vrot.slane %v2595, 2
      %v3408 = vrot.slane %v3392, 6
      %v3409 = vrot.slane %v3393, 6
      %v3412 = vsel %vm2072, %v3394, %v3398
      %v3413 = vsel %vm2072, %v3395, %v3399
      %v3414 = vsel %vm2072, %v3402, %v3408
      %v3415 = vsel %vm2072, %v3403, %v3409
      %v3416 = vpack.c.bf16 %v3414, %v3412
      %v3417 = vpack.c.bf16 %v3415, %v3413
      %s3418 = scalar_lea.vmem %s19, 1280
      %v3419 = vld [vmem:[%s3418] sm:$0xff]
      %v3420 = vld [vmem:[%s3418 + $0x8] sm:$0xff]
      %v3421 = vld [vmem:[%s3418 + $0x10] sm:$0xff]
      %v3422 = vld [vmem:[%s3418 + $0x18] sm:$0xff]
      %v3423 = vld [vmem:[%s3418 + $0x20] sm:$0xff]
      %v3424 = vld [vmem:[%s3418 + $0x28] sm:$0xff]
      %v3425 = vld [vmem:[%s3418 + $0x30] sm:$0xff]
      %v3426 = vld [vmem:[%s3418 + $0x38] sm:$0xff]
      %v3427 = vld [vmem:[%s3418 + $0x40] sm:$0xff]
      %v3428 = vld [vmem:[%s3418 + $0x48] sm:$0xff]
      %v3429 = vld [vmem:[%s3418 + $0x50] sm:$0xff]
      %v3430 = vld [vmem:[%s3418 + $0x58] sm:$0xff]
      %v3431 = vld [vmem:[%s3418 + $0x60] sm:$0xff]
      %v3432 = vld [vmem:[%s3418 + $0x68] sm:$0xff]
      %v3433 = vld [vmem:[%s3418 + $0x70] sm:$0xff]
      %v3434 = vld [vmem:[%s3418 + $0x78] sm:$0xff]
      %v3435 = vld [vmem:[%s3418 + $0x80] sm:$0xff]
      %v3436 = vld [vmem:[%s3418 + $0x88] sm:$0xff]
      %v3437 = vld [vmem:[%s3418 + $0x90] sm:$0xff]
      %v3438 = vld [vmem:[%s3418 + $0x98] sm:$0xff]
      %v3439 = vld [vmem:[%s3418 + $0xa0] sm:$0xff]
      %v3440 = vld [vmem:[%s3418 + $0xa8] sm:$0xff]
      %v3441 = vld [vmem:[%s3418 + $0xb0] sm:$0xff]
      %v3442 = vld [vmem:[%s3418 + $0xb8] sm:$0xff]
      %v3443 = vld [vmem:[%s3418 + $0xc0] sm:$0xff]
      %v3444 = vld [vmem:[%s3418 + $0xc8] sm:$0xff]
      %v3445 = vld [vmem:[%s3418 + $0xd0] sm:$0xff]
      %v3446 = vld [vmem:[%s3418 + $0xd8] sm:$0xff]
      %v3447 = vld [vmem:[%s3418 + $0xe0] sm:$0xff]
      %v3448 = vld [vmem:[%s3418 + $0xe8] sm:$0xff]
      %v3449 = vld [vmem:[%s3418 + $0xf0] sm:$0xff]
      %v3450 = vld [vmem:[%s3418 + $0xf8] sm:$0xff]
      %v3483 = vunpack.c.l.b16 %v3419
      %v3484 = vunpack.c.h.b16 %v3419
      %v3485 = vunpack.c.l.b16 %v3420
      %v3486 = vunpack.c.h.b16 %v3420
      %v3487 = vunpack.c.l.b16 %v3421
      %v3488 = vunpack.c.h.b16 %v3421
      %v3489 = vunpack.c.l.b16 %v3422
      %v3490 = vunpack.c.h.b16 %v3422
      %v3491 = vunpack.c.l.b16 %v3423
      %v3492 = vunpack.c.h.b16 %v3423
      %v3493 = vunpack.c.l.b16 %v3424
      %v3494 = vunpack.c.h.b16 %v3424
      %v3495 = vunpack.c.l.b16 %v3425
      %v3496 = vunpack.c.h.b16 %v3425
      %v3497 = vunpack.c.l.b16 %v3426
      %v3498 = vunpack.c.h.b16 %v3426
      %v3499 = vunpack.c.l.b16 %v3427
      %v3500 = vunpack.c.h.b16 %v3427
      %v3501 = vunpack.c.l.b16 %v3428
      %v3502 = vunpack.c.h.b16 %v3428
      %v3503 = vunpack.c.l.b16 %v3429
      %v3504 = vunpack.c.h.b16 %v3429
      %v3505 = vunpack.c.l.b16 %v3430
      %v3506 = vunpack.c.h.b16 %v3430
      %v3507 = vunpack.c.l.b16 %v3431
      %v3508 = vunpack.c.h.b16 %v3431
      %v3509 = vunpack.c.l.b16 %v3432
      %v3510 = vunpack.c.h.b16 %v3432
      %v3511 = vunpack.c.l.b16 %v3433
      %v3512 = vunpack.c.h.b16 %v3433
      %v3513 = vunpack.c.l.b16 %v3434
      %v3514 = vunpack.c.h.b16 %v3434
      %v3515 = vunpack.c.l.b16 %v3435
      %v3516 = vunpack.c.h.b16 %v3435
      %v3517 = vunpack.c.l.b16 %v3436
      %v3518 = vunpack.c.h.b16 %v3436
      %v3519 = vunpack.c.l.b16 %v3437
      %v3520 = vunpack.c.h.b16 %v3437
      %v3521 = vunpack.c.l.b16 %v3438
      %v3522 = vunpack.c.h.b16 %v3438
      %v3523 = vunpack.c.l.b16 %v3439
      %v3524 = vunpack.c.h.b16 %v3439
      %v3525 = vunpack.c.l.b16 %v3440
      %v3526 = vunpack.c.h.b16 %v3440
      %v3527 = vunpack.c.l.b16 %v3441
      %v3528 = vunpack.c.h.b16 %v3441
      %v3529 = vunpack.c.l.b16 %v3442
      %v3530 = vunpack.c.h.b16 %v3442
      %v3531 = vunpack.c.l.b16 %v3443
      %v3532 = vunpack.c.h.b16 %v3443
      %v3533 = vunpack.c.l.b16 %v3444
      %v3534 = vunpack.c.h.b16 %v3444
      %v3535 = vunpack.c.l.b16 %v3445
      %v3536 = vunpack.c.h.b16 %v3445
      %v3537 = vunpack.c.l.b16 %v3446
      %v3538 = vunpack.c.h.b16 %v3446
      %v3539 = vunpack.c.l.b16 %v3447
      %v3540 = vunpack.c.h.b16 %v3447
      %v3541 = vunpack.c.l.b16 %v3448
      %v3542 = vunpack.c.h.b16 %v3448
      %v3543 = vunpack.c.l.b16 %v3449
      %v3544 = vunpack.c.h.b16 %v3449
      %v3545 = vunpack.c.l.b16 %v3450
      %v3546 = vunpack.c.h.b16 %v3450
      %v3547 = vpack.c.b16 %v3485, %v3483
      %v3548 = vpack.c.b16 %v3486, %v3484
      %v3549 = vpack.c.b16 %v3489, %v3487
      %v3550 = vpack.c.b16 %v3490, %v3488
      %v3551 = vpack.c.b16 %v3493, %v3491
      %v3552 = vpack.c.b16 %v3494, %v3492
      %v3553 = vpack.c.b16 %v3497, %v3495
      %v3554 = vpack.c.b16 %v3498, %v3496
      %v3555 = vpack.c.b16 %v3501, %v3499
      %v3556 = vpack.c.b16 %v3502, %v3500
      %v3557 = vpack.c.b16 %v3505, %v3503
      %v3558 = vpack.c.b16 %v3506, %v3504
      %v3559 = vpack.c.b16 %v3509, %v3507
      %v3560 = vpack.c.b16 %v3510, %v3508
      %v3561 = vpack.c.b16 %v3513, %v3511
      %v3562 = vpack.c.b16 %v3514, %v3512
      %v3563 = vpack.c.b16 %v3517, %v3515
      %v3564 = vpack.c.b16 %v3518, %v3516
      %v3565 = vpack.c.b16 %v3521, %v3519
      %v3566 = vpack.c.b16 %v3522, %v3520
      %v3567 = vpack.c.b16 %v3525, %v3523
      %v3568 = vpack.c.b16 %v3526, %v3524
      %v3569 = vpack.c.b16 %v3529, %v3527
      %v3570 = vpack.c.b16 %v3530, %v3528
      %v3571 = vpack.c.b16 %v3533, %v3531
      %v3572 = vpack.c.b16 %v3534, %v3532
      %v3573 = vpack.c.b16 %v3537, %v3535
      %v3574 = vpack.c.b16 %v3538, %v3536
      %v3575 = vpack.c.b16 %v3541, %v3539
      %v3576 = vpack.c.b16 %v3542, %v3540
      %v3577 = vpack.c.b16 %v3545, %v3543
      %v3578 = vpack.c.b16 %v3546, %v3544
      %3611 = vmatprep.subr.bf16.mxu0 %v3562
      %3612 = vmatpush1.bf16.msra.mxu0 %v3561
      %3613 = vmatprep.subr.bf16.mxu0 %v3560
      %3614 = vmatpush1.bf16.msra.mxu0 %v3559
      %3615 = vmatprep.subr.bf16.mxu0 %v3558
      %3616 = vmatpush1.bf16.msra.mxu0 %v3557
      %3617 = vmatprep.subr.bf16.mxu0 %v3556
      %3618 = vmatpush1.bf16.msra.mxu0 %v3555
      %3619 = vmatprep.subr.bf16.mxu0 %v3554
      %3620 = vmatpush1.bf16.msra.mxu0 %v3553
      %3621 = vmatprep.subr.bf16.mxu0 %v3552
      %3622 = vmatpush1.bf16.msra.mxu0 %v3551
      %3623 = vmatprep.subr.bf16.mxu0 %v3550
      %3624 = vmatpush1.bf16.msra.mxu0 %v3549
      %3625 = vmatprep.subr.bf16.mxu0 %v3548
      %3626 = vmatpush1.bf16.msra.mxu0 %v3547
      %3627 = vmatprep.subr.bf16.mxu0 %v3578
      %3628 = vmatpush2.bf16.msra.mxu0 %v3577
      %3629 = vmatprep.subr.bf16.mxu0 %v3576
      %3630 = vmatpush2.bf16.msra.mxu0 %v3575
      %3631 = vmatprep.subr.bf16.mxu0 %v3574
      %3632 = vmatpush2.bf16.msra.mxu0 %v3573
      %3633 = vmatprep.subr.bf16.mxu0 %v3572
      %3634 = vmatpush2.bf16.msra.mxu0 %v3571
      %3635 = vmatprep.subr.bf16.mxu0 %v3570
      %3636 = vmatpush2.bf16.msra.mxu0 %v3569
      %3637 = vmatprep.subr.bf16.mxu0 %v3568
      %3638 = vmatpush2.bf16.msra.mxu0 %v3567
      %3639 = vmatprep.subr.bf16.mxu0 %v3566
      %3640 = vmatpush2.bf16.msra.mxu0 %v3565
      %3641 = vmatprep.subr.bf16.mxu0 %v3564
      %3642 = vmatpush2.bf16.msra.mxu0 %v3563
      %3643 = vmatprep.mubr.bf16.mxu0 %v3417
      %3644 = vmatmul.mubr.bf16.gmra.mxu0 %v3416
      %v3645 = vpop.f32.mrf.mxu0
      %v3646 = vadd.f32 0.0, %v3645
      %v3647 = vpop.f32.mrf.mxu0
      %v3648 = vadd.f32 0.0, %v3647
      %v3649 = vpop.f32.mrf.mxu0
      %v3650 = vadd.f32 0.0, %v3649
      %v3651 = vpop.f32.mrf.mxu0
      %v3652 = vadd.f32 0.0, %v3651
      %3653 = vdwg.mxu0
      %v3654 = vadd.f32 %v3388, %v3646
      %v3655 = vadd.f32 %v3389, %v3648
      %v3656 = vadd.f32 %v3390, %v3650
      %v3657 = vadd.f32 %v3391, %v3652
      %s3658 = scalar_lea.vmem [#allocation2], 80
      %v3659 = vld [vmem:[%s3658] sm:$0xf]
      %v3660 = vld [vmem:[%s3658 + $0x8] sm:$0xf]
      %v3663 = vrot.slane %v3659, 4
      %v3664 = vrot.slane %v3660, 4
      %v3667 = vsel %vm2072, %v2866, %v3663
      %v3668 = vsel %vm2072, %v2867, %v3664
      %v3669 = vpack.c.bf16 %v3667, %v2075
      %v3670 = vpack.c.bf16 %v3668, %v2076
      %s3671 = scalar_lea.vmem %s19, 1536
      %v3672 = vld [vmem:[%s3671] sm:$0xff]
      %v3673 = vld [vmem:[%s3671 + $0x8] sm:$0xff]
      %v3674 = vld [vmem:[%s3671 + $0x10] sm:$0xff]
      %v3675 = vld [vmem:[%s3671 + $0x18] sm:$0xff]
      %v3676 = vld [vmem:[%s3671 + $0x20] sm:$0xff]
      %v3677 = vld [vmem:[%s3671 + $0x28] sm:$0xff]
      %v3678 = vld [vmem:[%s3671 + $0x30] sm:$0xff]
      %v3679 = vld [vmem:[%s3671 + $0x38] sm:$0xff]
      %v3680 = vld [vmem:[%s3671 + $0x40] sm:$0xff]
      %v3681 = vld [vmem:[%s3671 + $0x48] sm:$0xff]
      %v3682 = vld [vmem:[%s3671 + $0x50] sm:$0xff]
      %v3683 = vld [vmem:[%s3671 + $0x58] sm:$0xff]
      %v3684 = vld [vmem:[%s3671 + $0x60] sm:$0xff]
      %v3685 = vld [vmem:[%s3671 + $0x68] sm:$0xff]
      %v3686 = vld [vmem:[%s3671 + $0x70] sm:$0xff]
      %v3687 = vld [vmem:[%s3671 + $0x78] sm:$0xff]
      %v3688 = vld [vmem:[%s3671 + $0x80] sm:$0xff]
      %v3689 = vld [vmem:[%s3671 + $0x88] sm:$0xff]
      %v3690 = vld [vmem:[%s3671 + $0x90] sm:$0xff]
      %v3691 = vld [vmem:[%s3671 + $0x98] sm:$0xff]
      %v3692 = vld [vmem:[%s3671 + $0xa0] sm:$0xff]
      %v3693 = vld [vmem:[%s3671 + $0xa8] sm:$0xff]
      %v3694 = vld [vmem:[%s3671 + $0xb0] sm:$0xff]
      %v3695 = vld [vmem:[%s3671 + $0xb8] sm:$0xff]
      %v3696 = vld [vmem:[%s3671 + $0xc0] sm:$0xff]
      %v3697 = vld [vmem:[%s3671 + $0xc8] sm:$0xff]
      %v3698 = vld [vmem:[%s3671 + $0xd0] sm:$0xff]
      %v3699 = vld [vmem:[%s3671 + $0xd8] sm:$0xff]
      %v3700 = vld [vmem:[%s3671 + $0xe0] sm:$0xff]
      %v3701 = vld [vmem:[%s3671 + $0xe8] sm:$0xff]
      %v3702 = vld [vmem:[%s3671 + $0xf0] sm:$0xff]
      %v3703 = vld [vmem:[%s3671 + $0xf8] sm:$0xff]
      %v3736 = vunpack.c.l.b16 %v3672
      %v3737 = vunpack.c.h.b16 %v3672
      %v3738 = vunpack.c.l.b16 %v3673
      %v3739 = vunpack.c.h.b16 %v3673
      %v3740 = vunpack.c.l.b16 %v3674
      %v3741 = vunpack.c.h.b16 %v3674
      %v3742 = vunpack.c.l.b16 %v3675
      %v3743 = vunpack.c.h.b16 %v3675
      %v3744 = vunpack.c.l.b16 %v3676
      %v3745 = vunpack.c.h.b16 %v3676
      %v3746 = vunpack.c.l.b16 %v3677
      %v3747 = vunpack.c.h.b16 %v3677
      %v3748 = vunpack.c.l.b16 %v3678
      %v3749 = vunpack.c.h.b16 %v3678
      %v3750 = vunpack.c.l.b16 %v3679
      %v3751 = vunpack.c.h.b16 %v3679
      %v3752 = vunpack.c.l.b16 %v3680
      %v3753 = vunpack.c.h.b16 %v3680
      %v3754 = vunpack.c.l.b16 %v3681
      %v3755 = vunpack.c.h.b16 %v3681
      %v3756 = vunpack.c.l.b16 %v3682
      %v3757 = vunpack.c.h.b16 %v3682
      %v3758 = vunpack.c.l.b16 %v3683
      %v3759 = vunpack.c.h.b16 %v3683
      %v3760 = vunpack.c.l.b16 %v3684
      %v3761 = vunpack.c.h.b16 %v3684
      %v3762 = vunpack.c.l.b16 %v3685
      %v3763 = vunpack.c.h.b16 %v3685
      %v3764 = vunpack.c.l.b16 %v3686
      %v3765 = vunpack.c.h.b16 %v3686
      %v3766 = vunpack.c.l.b16 %v3687
      %v3767 = vunpack.c.h.b16 %v3687
      %v3768 = vunpack.c.l.b16 %v3688
      %v3769 = vunpack.c.h.b16 %v3688
      %v3770 = vunpack.c.l.b16 %v3689
      %v3771 = vunpack.c.h.b16 %v3689
      %v3772 = vunpack.c.l.b16 %v3690
      %v3773 = vunpack.c.h.b16 %v3690
      %v3774 = vunpack.c.l.b16 %v3691
      %v3775 = vunpack.c.h.b16 %v3691
      %v3776 = vunpack.c.l.b16 %v3692
      %v3777 = vunpack.c.h.b16 %v3692
      %v3778 = vunpack.c.l.b16 %v3693
      %v3779 = vunpack.c.h.b16 %v3693
      %v3780 = vunpack.c.l.b16 %v3694
      %v3781 = vunpack.c.h.b16 %v3694
      %v3782 = vunpack.c.l.b16 %v3695
      %v3783 = vunpack.c.h.b16 %v3695
      %v3784 = vunpack.c.l.b16 %v3696
      %v3785 = vunpack.c.h.b16 %v3696
      %v3786 = vunpack.c.l.b16 %v3697
      %v3787 = vunpack.c.h.b16 %v3697
      %v3788 = vunpack.c.l.b16 %v3698
      %v3789 = vunpack.c.h.b16 %v3698
      %v3790 = vunpack.c.l.b16 %v3699
      %v3791 = vunpack.c.h.b16 %v3699
      %v3792 = vunpack.c.l.b16 %v3700
      %v3793 = vunpack.c.h.b16 %v3700
      %v3794 = vunpack.c.l.b16 %v3701
      %v3795 = vunpack.c.h.b16 %v3701
      %v3796 = vunpack.c.l.b16 %v3702
      %v3797 = vunpack.c.h.b16 %v3702
      %v3798 = vunpack.c.l.b16 %v3703
      %v3799 = vunpack.c.h.b16 %v3703
      %v3800 = vpack.c.b16 %v3738, %v3736
      %v3801 = vpack.c.b16 %v3739, %v3737
      %v3802 = vpack.c.b16 %v3742, %v3740
      %v3803 = vpack.c.b16 %v3743, %v3741
      %v3804 = vpack.c.b16 %v3746, %v3744
      %v3805 = vpack.c.b16 %v3747, %v3745
      %v3806 = vpack.c.b16 %v3750, %v3748
      %v3807 = vpack.c.b16 %v3751, %v3749
      %v3808 = vpack.c.b16 %v3754, %v3752
      %v3809 = vpack.c.b16 %v3755, %v3753
      %v3810 = vpack.c.b16 %v3758, %v3756
      %v3811 = vpack.c.b16 %v3759, %v3757
      %v3812 = vpack.c.b16 %v3762, %v3760
      %v3813 = vpack.c.b16 %v3763, %v3761
      %v3814 = vpack.c.b16 %v3766, %v3764
      %v3815 = vpack.c.b16 %v3767, %v3765
      %v3816 = vpack.c.b16 %v3770, %v3768
      %v3817 = vpack.c.b16 %v3771, %v3769
      %v3818 = vpack.c.b16 %v3774, %v3772
      %v3819 = vpack.c.b16 %v3775, %v3773
      %v3820 = vpack.c.b16 %v3778, %v3776
      %v3821 = vpack.c.b16 %v3779, %v3777
      %v3822 = vpack.c.b16 %v3782, %v3780
      %v3823 = vpack.c.b16 %v3783, %v3781
      %v3824 = vpack.c.b16 %v3786, %v3784
      %v3825 = vpack.c.b16 %v3787, %v3785
      %v3826 = vpack.c.b16 %v3790, %v3788
      %v3827 = vpack.c.b16 %v3791, %v3789
      %v3828 = vpack.c.b16 %v3794, %v3792
      %v3829 = vpack.c.b16 %v3795, %v3793
      %v3830 = vpack.c.b16 %v3798, %v3796
      %v3831 = vpack.c.b16 %v3799, %v3797
      %3864 = vmatprep.subr.bf16.mxu0 %v3815
      %3865 = vmatpush1.bf16.msra.mxu0 %v3814
      %3866 = vmatprep.subr.bf16.mxu0 %v3813
      %3867 = vmatpush1.bf16.msra.mxu0 %v3812
      %3868 = vmatprep.subr.bf16.mxu0 %v3811
      %3869 = vmatpush1.bf16.msra.mxu0 %v3810
      %3870 = vmatprep.subr.bf16.mxu0 %v3809
      %3871 = vmatpush1.bf16.msra.mxu0 %v3808
      %3872 = vmatprep.subr.bf16.mxu0 %v3807
      %3873 = vmatpush1.bf16.msra.mxu0 %v3806
      %3874 = vmatprep.subr.bf16.mxu0 %v3805
      %3875 = vmatpush1.bf16.msra.mxu0 %v3804
      %3876 = vmatprep.subr.bf16.mxu0 %v3803
      %3877 = vmatpush1.bf16.msra.mxu0 %v3802
      %3878 = vmatprep.subr.bf16.mxu0 %v3801
      %3879 = vmatpush1.bf16.msra.mxu0 %v3800
      %3880 = vmatprep.subr.bf16.mxu0 %v3831
      %3881 = vmatpush2.bf16.msra.mxu0 %v3830
      %3882 = vmatprep.subr.bf16.mxu0 %v3829
      %3883 = vmatpush2.bf16.msra.mxu0 %v3828
      %3884 = vmatprep.subr.bf16.mxu0 %v3827
      %3885 = vmatpush2.bf16.msra.mxu0 %v3826
      %3886 = vmatprep.subr.bf16.mxu0 %v3825
      %3887 = vmatpush2.bf16.msra.mxu0 %v3824
      %3888 = vmatprep.subr.bf16.mxu0 %v3823
      %3889 = vmatpush2.bf16.msra.mxu0 %v3822
      %3890 = vmatprep.subr.bf16.mxu0 %v3821
      %3891 = vmatpush2.bf16.msra.mxu0 %v3820
      %3892 = vmatprep.subr.bf16.mxu0 %v3819
      %3893 = vmatpush2.bf16.msra.mxu0 %v3818
      %3894 = vmatprep.subr.bf16.mxu0 %v3817
      %3895 = vmatpush2.bf16.msra.mxu0 %v3816
      %3896 = vmatprep.mubr.bf16.mxu0 %v3670
      %3897 = vmatmul.mubr.bf16.gmra.mxu0 %v3669
      %v3898 = vpop.f32.mrf.mxu0
      %v3899 = vadd.f32 0.0, %v3898
      %v3900 = vpop.f32.mrf.mxu0
      %v3901 = vadd.f32 0.0, %v3900
      %v3902 = vpop.f32.mrf.mxu0
      %v3903 = vadd.f32 0.0, %v3902
      %v3904 = vpop.f32.mrf.mxu0
      %v3905 = vadd.f32 0.0, %v3904
      %3906 = vdwg.mxu0
      %v3907 = vadd.f32 %v3654, %v3899
      %v3908 = vadd.f32 %v3655, %v3901
      %v3909 = vadd.f32 %v3656, %v3903
      %v3910 = vadd.f32 %v3657, %v3905
      %v3911 = vld [vmem:[%s3658] sm:$0x1e]
      %v3912 = vld [vmem:[%s3658 + $0x8] sm:$0x1e]
      %v3913 = vrot.slane %v3126, 1
      %v3914 = vrot.slane %v3127, 1
      %v3919 = vrot.slane %v3911, 5
      %v3920 = vrot.slane %v3912, 5
      %v3923 = vsel %vm2072, %v3913, %v3919
      %v3924 = vsel %vm2072, %v3914, %v3920
      %v3925 = vpack.c.bf16 %v3923, %v2145
      %v3926 = vpack.c.bf16 %v3924, %v2146
      %s3927 = scalar_lea.vmem %s19, 1792
      %v3928 = vld [vmem:[%s3927] sm:$0xff]
      %v3929 = vld [vmem:[%s3927 + $0x8] sm:$0xff]
      %v3930 = vld [vmem:[%s3927 + $0x10] sm:$0xff]
      %v3931 = vld [vmem:[%s3927 + $0x18] sm:$0xff]
      %v3932 = vld [vmem:[%s3927 + $0x20] sm:$0xff]
      %v3933 = vld [vmem:[%s3927 + $0x28] sm:$0xff]
      %v3934 = vld [vmem:[%s3927 + $0x30] sm:$0xff]
      %v3935 = vld [vmem:[%s3927 + $0x38] sm:$0xff]
      %v3936 = vld [vmem:[%s3927 + $0x40] sm:$0xff]
      %v3937 = vld [vmem:[%s3927 + $0x48] sm:$0xff]
      %v3938 = vld [vmem:[%s3927 + $0x50] sm:$0xff]
      %v3939 = vld [vmem:[%s3927 + $0x58] sm:$0xff]
      %v3940 = vld [vmem:[%s3927 + $0x60] sm:$0xff]
      %v3941 = vld [vmem:[%s3927 + $0x68] sm:$0xff]
      %v3942 = vld [vmem:[%s3927 + $0x70] sm:$0xff]
      %v3943 = vld [vmem:[%s3927 + $0x78] sm:$0xff]
      %v3944 = vld [vmem:[%s3927 + $0x80] sm:$0xff]
      %v3945 = vld [vmem:[%s3927 + $0x88] sm:$0xff]
      %v3946 = vld [vmem:[%s3927 + $0x90] sm:$0xff]
      %v3947 = vld [vmem:[%s3927 + $0x98] sm:$0xff]
      %v3948 = vld [vmem:[%s3927 + $0xa0] sm:$0xff]
      %v3949 = vld [vmem:[%s3927 + $0xa8] sm:$0xff]
      %v3950 = vld [vmem:[%s3927 + $0xb0] sm:$0xff]
      %v3951 = vld [vmem:[%s3927 + $0xb8] sm:$0xff]
      %v3952 = vld [vmem:[%s3927 + $0xc0] sm:$0xff]
      %v3953 = vld [vmem:[%s3927 + $0xc8] sm:$0xff]
      %v3954 = vld [vmem:[%s3927 + $0xd0] sm:$0xff]
      %v3955 = vld [vmem:[%s3927 + $0xd8] sm:$0xff]
      %v3956 = vld [vmem:[%s3927 + $0xe0] sm:$0xff]
      %v3957 = vld [vmem:[%s3927 + $0xe8] sm:$0xff]
      %v3958 = vld [vmem:[%s3927 + $0xf0] sm:$0xff]
      %v3959 = vld [vmem:[%s3927 + $0xf8] sm:$0xff]
      %v3992 = vunpack.c.l.b16 %v3928
      %v3993 = vunpack.c.h.b16 %v3928
      %v3994 = vunpack.c.l.b16 %v3929
      %v3995 = vunpack.c.h.b16 %v3929
      %v3996 = vunpack.c.l.b16 %v3930
      %v3997 = vunpack.c.h.b16 %v3930
      %v3998 = vunpack.c.l.b16 %v3931
      %v3999 = vunpack.c.h.b16 %v3931
      %v4000 = vunpack.c.l.b16 %v3932
      %v4001 = vunpack.c.h.b16 %v3932
      %v4002 = vunpack.c.l.b16 %v3933
      %v4003 = vunpack.c.h.b16 %v3933
      %v4004 = vunpack.c.l.b16 %v3934
      %v4005 = vunpack.c.h.b16 %v3934
      %v4006 = vunpack.c.l.b16 %v3935
      %v4007 = vunpack.c.h.b16 %v3935
      %v4008 = vunpack.c.l.b16 %v3936
      %v4009 = vunpack.c.h.b16 %v3936
      %v4010 = vunpack.c.l.b16 %v3937
      %v4011 = vunpack.c.h.b16 %v3937
      %v4012 = vunpack.c.l.b16 %v3938
      %v4013 = vunpack.c.h.b16 %v3938
      %v4014 = vunpack.c.l.b16 %v3939
      %v4015 = vunpack.c.h.b16 %v3939
      %v4016 = vunpack.c.l.b16 %v3940
      %v4017 = vunpack.c.h.b16 %v3940
      %v4018 = vunpack.c.l.b16 %v3941
      %v4019 = vunpack.c.h.b16 %v3941
      %v4020 = vunpack.c.l.b16 %v3942
      %v4021 = vunpack.c.h.b16 %v3942
      %v4022 = vunpack.c.l.b16 %v3943
      %v4023 = vunpack.c.h.b16 %v3943
      %v4024 = vunpack.c.l.b16 %v3944
      %v4025 = vunpack.c.h.b16 %v3944
      %v4026 = vunpack.c.l.b16 %v3945
      %v4027 = vunpack.c.h.b16 %v3945
      %v4028 = vunpack.c.l.b16 %v3946
      %v4029 = vunpack.c.h.b16 %v3946
      %v4030 = vunpack.c.l.b16 %v3947
      %v4031 = vunpack.c.h.b16 %v3947
      %v4032 = vunpack.c.l.b16 %v3948
      %v4033 = vunpack.c.h.b16 %v3948
      %v4034 = vunpack.c.l.b16 %v3949
      %v4035 = vunpack.c.h.b16 %v3949
      %v4036 = vunpack.c.l.b16 %v3950
      %v4037 = vunpack.c.h.b16 %v3950
      %v4038 = vunpack.c.l.b16 %v3951
      %v4039 = vunpack.c.h.b16 %v3951
      %v4040 = vunpack.c.l.b16 %v3952
      %v4041 = vunpack.c.h.b16 %v3952
      %v4042 = vunpack.c.l.b16 %v3953
      %v4043 = vunpack.c.h.b16 %v3953
      %v4044 = vunpack.c.l.b16 %v3954
      %v4045 = vunpack.c.h.b16 %v3954
      %v4046 = vunpack.c.l.b16 %v3955
      %v4047 = vunpack.c.h.b16 %v3955
      %v4048 = vunpack.c.l.b16 %v3956
      %v4049 = vunpack.c.h.b16 %v3956
      %v4050 = vunpack.c.l.b16 %v3957
      %v4051 = vunpack.c.h.b16 %v3957
      %v4052 = vunpack.c.l.b16 %v3958
      %v4053 = vunpack.c.h.b16 %v3958
      %v4054 = vunpack.c.l.b16 %v3959
      %v4055 = vunpack.c.h.b16 %v3959
      %v4056 = vpack.c.b16 %v3994, %v3992
      %v4057 = vpack.c.b16 %v3995, %v3993
      %v4058 = vpack.c.b16 %v3998, %v3996
      %v4059 = vpack.c.b16 %v3999, %v3997
      %v4060 = vpack.c.b16 %v4002, %v4000
      %v4061 = vpack.c.b16 %v4003, %v4001
      %v4062 = vpack.c.b16 %v4006, %v4004
      %v4063 = vpack.c.b16 %v4007, %v4005
      %v4064 = vpack.c.b16 %v4010, %v4008
      %v4065 = vpack.c.b16 %v4011, %v4009
      %v4066 = vpack.c.b16 %v4014, %v4012
      %v4067 = vpack.c.b16 %v4015, %v4013
      %v4068 = vpack.c.b16 %v4018, %v4016
      %v4069 = vpack.c.b16 %v4019, %v4017
      %v4070 = vpack.c.b16 %v4022, %v4020
      %v4071 = vpack.c.b16 %v4023, %v4021
      %v4072 = vpack.c.b16 %v4026, %v4024
      %v4073 = vpack.c.b16 %v4027, %v4025
      %v4074 = vpack.c.b16 %v4030, %v4028
      %v4075 = vpack.c.b16 %v4031, %v4029
      %v4076 = vpack.c.b16 %v4034, %v4032
      %v4077 = vpack.c.b16 %v4035, %v4033
      %v4078 = vpack.c.b16 %v4038, %v4036
      %v4079 = vpack.c.b16 %v4039, %v4037
      %v4080 = vpack.c.b16 %v4042, %v4040
      %v4081 = vpack.c.b16 %v4043, %v4041
      %v4082 = vpack.c.b16 %v4046, %v4044
      %v4083 = vpack.c.b16 %v4047, %v4045
      %v4084 = vpack.c.b16 %v4050, %v4048
      %v4085 = vpack.c.b16 %v4051, %v4049
      %v4086 = vpack.c.b16 %v4054, %v4052
      %v4087 = vpack.c.b16 %v4055, %v4053
      %4120 = vmatprep.subr.bf16.mxu0 %v4071
      %4121 = vmatpush1.bf16.msra.mxu0 %v4070
      %4122 = vmatprep.subr.bf16.mxu0 %v4069
      %4123 = vmatpush1.bf16.msra.mxu0 %v4068
      %4124 = vmatprep.subr.bf16.mxu0 %v4067
      %4125 = vmatpush1.bf16.msra.mxu0 %v4066
      %4126 = vmatprep.subr.bf16.mxu0 %v4065
      %4127 = vmatpush1.bf16.msra.mxu0 %v4064
      %4128 = vmatprep.subr.bf16.mxu0 %v4063
      %4129 = vmatpush1.bf16.msra.mxu0 %v4062
      %4130 = vmatprep.subr.bf16.mxu0 %v4061
      %4131 = vmatpush1.bf16.msra.mxu0 %v4060
      %4132 = vmatprep.subr.bf16.mxu0 %v4059
      %4133 = vmatpush1.bf16.msra.mxu0 %v4058
      %4134 = vmatprep.subr.bf16.mxu0 %v4057
      %4135 = vmatpush1.bf16.msra.mxu0 %v4056
      %4136 = vmatprep.subr.bf16.mxu0 %v4087
      %4137 = vmatpush2.bf16.msra.mxu0 %v4086
      %4138 = vmatprep.subr.bf16.mxu0 %v4085
      %4139 = vmatpush2.bf16.msra.mxu0 %v4084
      %4140 = vmatprep.subr.bf16.mxu0 %v4083
      %4141 = vmatpush2.bf16.msra.mxu0 %v4082
      %4142 = vmatprep.subr.bf16.mxu0 %v4081
      %4143 = vmatpush2.bf16.msra.mxu0 %v4080
      %4144 = vmatprep.subr.bf16.mxu0 %v4079
      %4145 = vmatpush2.bf16.msra.mxu0 %v4078
      %4146 = vmatprep.subr.bf16.mxu0 %v4077
      %4147 = vmatpush2.bf16.msra.mxu0 %v4076
      %4148 = vmatprep.subr.bf16.mxu0 %v4075
      %4149 = vmatpush2.bf16.msra.mxu0 %v4074
      %4150 = vmatprep.subr.bf16.mxu0 %v4073
      %4151 = vmatpush2.bf16.msra.mxu0 %v4072
      %4152 = vmatprep.mubr.bf16.mxu0 %v3926
      %4153 = vmatmul.mubr.bf16.gmra.mxu0 %v3925
      %v4154 = vpop.f32.mrf.mxu0
      %v4155 = vadd.f32 0.0, %v4154
      %v4156 = vpop.f32.mrf.mxu0
      %v4157 = vadd.f32 0.0, %v4156
      %v4158 = vpop.f32.mrf.mxu0
      %v4159 = vadd.f32 0.0, %v4158
      %v4160 = vpop.f32.mrf.mxu0
      %v4161 = vadd.f32 0.0, %v4160
      %4162 = vdwg.mxu0
      %v4163 = vadd.f32 %v3907, %v4155
      %v4164 = vadd.f32 %v3908, %v4157
      %v4165 = vadd.f32 %v3909, %v4159
      %v4166 = vadd.f32 %v3910, %v4161
      %v4167 = vld [vmem:[%s3658] sm:$0x3c]
      %v4168 = vld [vmem:[%s3658 + $0x8] sm:$0x3c]
      %v4169 = vrot.slane %v3392, 2
      %v4170 = vrot.slane %v3393, 2
      %v4175 = vrot.slane %v4167, 6
      %v4176 = vrot.slane %v4168, 6
      %v4179 = vsel %vm2072, %v4169, %v4175
      %v4180 = vsel %vm2072, %v4170, %v4176
      %v4181 = vpack.c.bf16 %v4179, %v2622
      %v4182 = vpack.c.bf16 %v4180, %v2623
      %s4183 = scalar_lea.vmem %s19, 2048
      %v4184 = vld [vmem:[%s4183] sm:$0xff]
      %v4185 = vld [vmem:[%s4183 + $0x8] sm:$0xff]
      %v4186 = vld [vmem:[%s4183 + $0x10] sm:$0xff]
      %v4187 = vld [vmem:[%s4183 + $0x18] sm:$0xff]
      %v4188 = vld [vmem:[%s4183 + $0x20] sm:$0xff]
      %v4189 = vld [vmem:[%s4183 + $0x28] sm:$0xff]
      %v4190 = vld [vmem:[%s4183 + $0x30] sm:$0xff]
      %v4191 = vld [vmem:[%s4183 + $0x38] sm:$0xff]
      %v4192 = vld [vmem:[%s4183 + $0x40] sm:$0xff]
      %v4193 = vld [vmem:[%s4183 + $0x48] sm:$0xff]
      %v4194 = vld [vmem:[%s4183 + $0x50] sm:$0xff]
      %v4195 = vld [vmem:[%s4183 + $0x58] sm:$0xff]
      %v4196 = vld [vmem:[%s4183 + $0x60] sm:$0xff]
      %v4197 = vld [vmem:[%s4183 + $0x68] sm:$0xff]
      %v4198 = vld [vmem:[%s4183 + $0x70] sm:$0xff]
      %v4199 = vld [vmem:[%s4183 + $0x78] sm:$0xff]
      %v4200 = vld [vmem:[%s4183 + $0x80] sm:$0xff]
      %v4201 = vld [vmem:[%s4183 + $0x88] sm:$0xff]
      %v4202 = vld [vmem:[%s4183 + $0x90] sm:$0xff]
      %v4203 = vld [vmem:[%s4183 + $0x98] sm:$0xff]
      %v4204 = vld [vmem:[%s4183 + $0xa0] sm:$0xff]
      %v4205 = vld [vmem:[%s4183 + $0xa8] sm:$0xff]
      %v4206 = vld [vmem:[%s4183 + $0xb0] sm:$0xff]
      %v4207 = vld [vmem:[%s4183 + $0xb8] sm:$0xff]
      %v4208 = vld [vmem:[%s4183 + $0xc0] sm:$0xff]
      %v4209 = vld [vmem:[%s4183 + $0xc8] sm:$0xff]
      %v4210 = vld [vmem:[%s4183 + $0xd0] sm:$0xff]
      %v4211 = vld [vmem:[%s4183 + $0xd8] sm:$0xff]
      %v4212 = vld [vmem:[%s4183 + $0xe0] sm:$0xff]
      %v4213 = vld [vmem:[%s4183 + $0xe8] sm:$0xff]
      %v4214 = vld [vmem:[%s4183 + $0xf0] sm:$0xff]
      %v4215 = vld [vmem:[%s4183 + $0xf8] sm:$0xff]
      %v4248 = vunpack.c.l.b16 %v4184
      %v4249 = vunpack.c.h.b16 %v4184
      %v4250 = vunpack.c.l.b16 %v4185
      %v4251 = vunpack.c.h.b16 %v4185
      %v4252 = vunpack.c.l.b16 %v4186
      %v4253 = vunpack.c.h.b16 %v4186
      %v4254 = vunpack.c.l.b16 %v4187
      %v4255 = vunpack.c.h.b16 %v4187
      %v4256 = vunpack.c.l.b16 %v4188
      %v4257 = vunpack.c.h.b16 %v4188
      %v4258 = vunpack.c.l.b16 %v4189
      %v4259 = vunpack.c.h.b16 %v4189
      %v4260 = vunpack.c.l.b16 %v4190
      %v4261 = vunpack.c.h.b16 %v4190
      %v4262 = vunpack.c.l.b16 %v4191
      %v4263 = vunpack.c.h.b16 %v4191
      %v4264 = vunpack.c.l.b16 %v4192
      %v4265 = vunpack.c.h.b16 %v4192
      %v4266 = vunpack.c.l.b16 %v4193
      %v4267 = vunpack.c.h.b16 %v4193
      %v4268 = vunpack.c.l.b16 %v4194
      %v4269 = vunpack.c.h.b16 %v4194
      %v4270 = vunpack.c.l.b16 %v4195
      %v4271 = vunpack.c.h.b16 %v4195
      %v4272 = vunpack.c.l.b16 %v4196
      %v4273 = vunpack.c.h.b16 %v4196
      %v4274 = vunpack.c.l.b16 %v4197
      %v4275 = vunpack.c.h.b16 %v4197
      %v4276 = vunpack.c.l.b16 %v4198
      %v4277 = vunpack.c.h.b16 %v4198
      %v4278 = vunpack.c.l.b16 %v4199
      %v4279 = vunpack.c.h.b16 %v4199
      %v4280 = vunpack.c.l.b16 %v4200
      %v4281 = vunpack.c.h.b16 %v4200
      %v4282 = vunpack.c.l.b16 %v4201
      %v4283 = vunpack.c.h.b16 %v4201
      %v4284 = vunpack.c.l.b16 %v4202
      %v4285 = vunpack.c.h.b16 %v4202
      %v4286 = vunpack.c.l.b16 %v4203
      %v4287 = vunpack.c.h.b16 %v4203
      %v4288 = vunpack.c.l.b16 %v4204
      %v4289 = vunpack.c.h.b16 %v4204
      %v4290 = vunpack.c.l.b16 %v4205
      %v4291 = vunpack.c.h.b16 %v4205
      %v4292 = vunpack.c.l.b16 %v4206
      %v4293 = vunpack.c.h.b16 %v4206
      %v4294 = vunpack.c.l.b16 %v4207
      %v4295 = vunpack.c.h.b16 %v4207
      %v4296 = vunpack.c.l.b16 %v4208
      %v4297 = vunpack.c.h.b16 %v4208
      %v4298 = vunpack.c.l.b16 %v4209
      %v4299 = vunpack.c.h.b16 %v4209
      %v4300 = vunpack.c.l.b16 %v4210
      %v4301 = vunpack.c.h.b16 %v4210
      %v4302 = vunpack.c.l.b16 %v4211
      %v4303 = vunpack.c.h.b16 %v4211
      %v4304 = vunpack.c.l.b16 %v4212
      %v4305 = vunpack.c.h.b16 %v4212
      %v4306 = vunpack.c.l.b16 %v4213
      %v4307 = vunpack.c.h.b16 %v4213
      %v4308 = vunpack.c.l.b16 %v4214
      %v4309 = vunpack.c.h.b16 %v4214
      %v4310 = vunpack.c.l.b16 %v4215
      %v4311 = vunpack.c.h.b16 %v4215
      %v4312 = vpack.c.b16 %v4250, %v4248
      %v4313 = vpack.c.b16 %v4251, %v4249
      %v4314 = vpack.c.b16 %v4254, %v4252
      %v4315 = vpack.c.b16 %v4255, %v4253
      %v4316 = vpack.c.b16 %v4258, %v4256
      %v4317 = vpack.c.b16 %v4259, %v4257
      %v4318 = vpack.c.b16 %v4262, %v4260
      %v4319 = vpack.c.b16 %v4263, %v4261
      %v4320 = vpack.c.b16 %v4266, %v4264
      %v4321 = vpack.c.b16 %v4267, %v4265
      %v4322 = vpack.c.b16 %v4270, %v4268
      %v4323 = vpack.c.b16 %v4271, %v4269
      %v4324 = vpack.c.b16 %v4274, %v4272
      %v4325 = vpack.c.b16 %v4275, %v4273
      %v4326 = vpack.c.b16 %v4278, %v4276
      %v4327 = vpack.c.b16 %v4279, %v4277
      %v4328 = vpack.c.b16 %v4282, %v4280
      %v4329 = vpack.c.b16 %v4283, %v4281
      %v4330 = vpack.c.b16 %v4286, %v4284
      %v4331 = vpack.c.b16 %v4287, %v4285
      %v4332 = vpack.c.b16 %v4290, %v4288
      %v4333 = vpack.c.b16 %v4291, %v4289
      %v4334 = vpack.c.b16 %v4294, %v4292
      %v4335 = vpack.c.b16 %v4295, %v4293
      %v4336 = vpack.c.b16 %v4298, %v4296
      %v4337 = vpack.c.b16 %v4299, %v4297
      %v4338 = vpack.c.b16 %v4302, %v4300
      %v4339 = vpack.c.b16 %v4303, %v4301
      %v4340 = vpack.c.b16 %v4306, %v4304
      %v4341 = vpack.c.b16 %v4307, %v4305
      %v4342 = vpack.c.b16 %v4310, %v4308
      %v4343 = vpack.c.b16 %v4311, %v4309
      %4376 = vmatprep.subr.bf16.mxu0 %v4327
      %4377 = vmatpush1.bf16.msra.mxu0 %v4326
      %4378 = vmatprep.subr.bf16.mxu0 %v4325
      %4379 = vmatpush1.bf16.msra.mxu0 %v4324
      %4380 = vmatprep.subr.bf16.mxu0 %v4323
      %4381 = vmatpush1.bf16.msra.mxu0 %v4322
      %4382 = vmatprep.subr.bf16.mxu0 %v4321
      %4383 = vmatpush1.bf16.msra.mxu0 %v4320
      %4384 = vmatprep.subr.bf16.mxu0 %v4319
      %4385 = vmatpush1.bf16.msra.mxu0 %v4318
      %4386 = vmatprep.subr.bf16.mxu0 %v4317
      %4387 = vmatpush1.bf16.msra.mxu0 %v4316
      %4388 = vmatprep.subr.bf16.mxu0 %v4315
      %4389 = vmatpush1.bf16.msra.mxu0 %v4314
      %4390 = vmatprep.subr.bf16.mxu0 %v4313
      %4391 = vmatpush1.bf16.msra.mxu0 %v4312
      %4392 = vmatprep.subr.bf16.mxu0 %v4343
      %4393 = vmatpush2.bf16.msra.mxu0 %v4342
      %4394 = vmatprep.subr.bf16.mxu0 %v4341
      %4395 = vmatpush2.bf16.msra.mxu0 %v4340
      %4396 = vmatprep.subr.bf16.mxu0 %v4339
      %4397 = vmatpush2.bf16.msra.mxu0 %v4338
      %4398 = vmatprep.subr.bf16.mxu0 %v4337
      %4399 = vmatpush2.bf16.msra.mxu0 %v4336
      %4400 = vmatprep.subr.bf16.mxu0 %v4335
      %4401 = vmatpush2.bf16.msra.mxu0 %v4334
      %4402 = vmatprep.subr.bf16.mxu0 %v4333
      %4403 = vmatpush2.bf16.msra.mxu0 %v4332
      %4404 = vmatprep.subr.bf16.mxu0 %v4331
      %4405 = vmatpush2.bf16.msra.mxu0 %v4330
      %4406 = vmatprep.subr.bf16.mxu0 %v4329
      %4407 = vmatpush2.bf16.msra.mxu0 %v4328
      %4408 = vmatprep.mubr.bf16.mxu0 %v4182
      %4409 = vmatmul.mubr.bf16.gmra.mxu0 %v4181
      %v4410 = vpop.f32.mrf.mxu0
      %v4411 = vadd.f32 0.0, %v4410
      %v4412 = vpop.f32.mrf.mxu0
      %v4413 = vadd.f32 0.0, %v4412
      %v4414 = vpop.f32.mrf.mxu0
      %v4415 = vadd.f32 0.0, %v4414
      %v4416 = vpop.f32.mrf.mxu0
      %v4417 = vadd.f32 0.0, %v4416
      %4418 = vdwg.mxu0
      %v4419 = vadd.f32 %v4163, %v4411
      %v4420 = vadd.f32 %v4164, %v4413
      %v4421 = vadd.f32 %v4165, %v4415
      %v4422 = vadd.f32 %v4166, %v4417
      %v4423 = vadd.f32 %v4419, %v4420
      %4424 = vadd.xlane.f32.xlu0 %v4423
      %v4425 = vpop.xlane.xlu0 %4424
      %v4426 = vadd.f32 %v4421, %v4422
      %4427 = vadd.xlane.f32.xlu0 %v4426
      %v4428 = vpop.xlane.xlu0 %4427
      %v4429 = vmul.f32 %v4425, %v1949
      %v4430 = vmul.f32 %v4428, %v1949
      %v4431 = vsub.f32 %v4419, %v4429
      %v4432 = vsub.f32 %v4420, %v4429
      %v4433 = vsub.f32 %v4421, %v4430
      %v4434 = vsub.f32 %v4422, %v4430
      %v4435 = vmul.f32 %v4431, %v4431
      %v4436 = vmul.f32 %v4432, %v4432
      %v4437 = vmul.f32 %v4433, %v4433
      %v4438 = vmul.f32 %v4434, %v4434
      %v4439 = vadd.f32 %v4435, %v4436
      %4440 = vadd.xlane.f32.xlu0 %v4439
      %v4441 = vpop.xlane.xlu0 %4440
      %v4442 = vadd.f32 %v4437, %v4438
      %4443 = vadd.xlane.f32.xlu0 %v4442
      %v4444 = vpop.xlane.xlu0 %4443
      %v4445 = vmul.f32 %v4441, %v1949
      %v4446 = vmul.f32 %v4444, %v1949
      %v4447 = vadd.f32 %v4445, 1e-06
      %v4448 = vadd.f32 %v4446, 1e-06
      %v4449 = vrsqrt.pop %v4447
      %v4450 = vrsqrt.pop %v4448
      %v4451 = vmul.f32 %v4431, %v4449
      %v4452 = vmul.f32 %v4432, %v4449
      %v4453 = vmul.f32 %v4433, %v4450
      %v4454 = vmul.f32 %v4434, %v4450
      %v4455 = vld [vmem:[%s20] sm:$0x3]
      %v4457 = vlaneseq
      %v4458 = vshrl.u32 %v4457, 7
      %v4459 = vsub.s32 0, %v4458
      %v4460 = vrot.slane %v4455, %v4459
      %v4461 = vlaneseq
      %v4462 = vshrl.u32 %v4461, 7
      %v4463 = vsub.s32 1, %v4462
      %v4464 = vrot.slane %v4455, %v4463
      %v4467 = vmul.f32 %v4451, %v4460
      %v4468 = vmul.f32 %v4452, %v4464
      %v4469 = vmul.f32 %v4453, %v4460
      %v4470 = vmul.f32 %v4454, %v4464
      %v4471 = vld [vmem:[%s21] sm:$0x3]
      %v4473 = vlaneseq
      %v4474 = vshrl.u32 %v4473, 7
      %v4475 = vsub.s32 0, %v4474
      %v4476 = vrot.slane %v4471, %v4475
      %v4477 = vlaneseq
      %v4478 = vshrl.u32 %v4477, 7
      %v4479 = vsub.s32 1, %v4478
      %v4480 = vrot.slane %v4471, %v4479
      %v4483 = vadd.f32 %v4467, %v4476
      %v4484 = vadd.f32 %v4468, %v4480
      %v4485 = vadd.f32 %v4469, %v4476
      %v4486 = vadd.f32 %v4470, %v4480
      %v4487 = vpack.c.bf16 %v4485, %v4483
      %v4488 = vpack.c.bf16 %v4486, %v4484
      %v4489 = vld [vmem:[%s22] sm:$0xf]
      %v4490 = vld [vmem:[%s22 + $0x4] sm:$0xf]
      %v4491 = vld [vmem:[%s22 + $0x8] sm:$0xf]
      %v4492 = vld [vmem:[%s22 + $0xc] sm:$0xf]
      %v4493 = vld [vmem:[%s22 + $0x10] sm:$0xf]
      %v4494 = vld [vmem:[%s22 + $0x14] sm:$0xf]
      %v4495 = vld [vmem:[%s22 + $0x18] sm:$0xf]
      %v4496 = vld [vmem:[%s22 + $0x1c] sm:$0xf]
      %v4497 = vld [vmem:[%s22 + $0x20] sm:$0xf]
      %v4498 = vld [vmem:[%s22 + $0x24] sm:$0xf]
      %v4499 = vld [vmem:[%s22 + $0x28] sm:$0xf]
      %v4500 = vld [vmem:[%s22 + $0x2c] sm:$0xf]
      %v4501 = vld [vmem:[%s22 + $0x30] sm:$0xf]
      %v4502 = vld [vmem:[%s22 + $0x34] sm:$0xf]
      %v4503 = vld [vmem:[%s22 + $0x38] sm:$0xf]
      %v4504 = vld [vmem:[%s22 + $0x3c] sm:$0xf]
      %v4505 = vld [vmem:[%s22 + $0x40] sm:$0xf]
      %v4506 = vld [vmem:[%s22 + $0x44] sm:$0xf]
      %v4507 = vld [vmem:[%s22 + $0x48] sm:$0xf]
      %v4508 = vld [vmem:[%s22 + $0x4c] sm:$0xf]
      %v4509 = vld [vmem:[%s22 + $0x50] sm:$0xf]
      %v4510 = vld [vmem:[%s22 + $0x54] sm:$0xf]
      %v4511 = vld [vmem:[%s22 + $0x58] sm:$0xf]
      %v4512 = vld [vmem:[%s22 + $0x5c] sm:$0xf]
      %v4513 = vld [vmem:[%s22 + $0x60] sm:$0xf]
      %v4514 = vld [vmem:[%s22 + $0x64] sm:$0xf]
      %v4515 = vld [vmem:[%s22 + $0x68] sm:$0xf]
      %v4516 = vld [vmem:[%s22 + $0x6c] sm:$0xf]
      %v4517 = vld [vmem:[%s22 + $0x70] sm:$0xf]
      %v4518 = vld [vmem:[%s22 + $0x74] sm:$0xf]
      %v4519 = vld [vmem:[%s22 + $0x78] sm:$0xf]
      %v4520 = vld [vmem:[%s22 + $0x7c] sm:$0xf]
      %v4553 = vunpack.c.l.b16 %v4489
      %v4554 = vunpack.c.l.b16 %v4490
      %v4555 = vunpack.c.l.b16 %v4491
      %v4556 = vunpack.c.l.b16 %v4492
      %v4557 = vunpack.c.l.b16 %v4493
      %v4558 = vunpack.c.l.b16 %v4494
      %v4559 = vunpack.c.l.b16 %v4495
      %v4560 = vunpack.c.l.b16 %v4496
      %v4561 = vunpack.c.l.b16 %v4497
      %v4562 = vunpack.c.l.b16 %v4498
      %v4563 = vunpack.c.l.b16 %v4499
      %v4564 = vunpack.c.l.b16 %v4500
      %v4565 = vunpack.c.l.b16 %v4501
      %v4566 = vunpack.c.l.b16 %v4502
      %v4567 = vunpack.c.l.b16 %v4503
      %v4568 = vunpack.c.l.b16 %v4504
      %v4569 = vunpack.c.l.b16 %v4505
      %v4570 = vunpack.c.l.b16 %v4506
      %v4571 = vunpack.c.l.b16 %v4507
      %v4572 = vunpack.c.l.b16 %v4508
      %v4573 = vunpack.c.l.b16 %v4509
      %v4574 = vunpack.c.l.b16 %v4510
      %v4575 = vunpack.c.l.b16 %v4511
      %v4576 = vunpack.c.l.b16 %v4512
      %v4577 = vunpack.c.l.b16 %v4513
      %v4578 = vunpack.c.l.b16 %v4514
      %v4579 = vunpack.c.l.b16 %v4515
      %v4580 = vunpack.c.l.b16 %v4516
      %v4581 = vunpack.c.l.b16 %v4517
      %v4582 = vunpack.c.l.b16 %v4518
      %v4583 = vunpack.c.l.b16 %v4519
      %v4584 = vunpack.c.l.b16 %v4520
      %v4585 = vpack.c.b16 %v4554, %v4553
      %v4586 = vpack.c.b16 %v4556, %v4555
      %v4587 = vpack.c.b16 %v4558, %v4557
      %v4588 = vpack.c.b16 %v4560, %v4559
      %v4589 = vpack.c.b16 %v4562, %v4561
      %v4590 = vpack.c.b16 %v4564, %v4563
      %v4591 = vpack.c.b16 %v4566, %v4565
      %v4592 = vpack.c.b16 %v4568, %v4567
      %v4593 = vpack.c.b16 %v4570, %v4569
      %v4594 = vpack.c.b16 %v4572, %v4571
      %v4595 = vpack.c.b16 %v4574, %v4573
      %v4596 = vpack.c.b16 %v4576, %v4575
      %v4597 = vpack.c.b16 %v4578, %v4577
      %v4598 = vpack.c.b16 %v4580, %v4579
      %v4599 = vpack.c.b16 %v4582, %v4581
      %v4600 = vpack.c.b16 %v4584, %v4583
      %4617 = vmatprep.subr.bf16.mxu0 0
      %4618 = vmatpush1.bf16.msra.mxu0 %v4592
      %4619 = vmatprep.subr.bf16.mxu0 0
      %4620 = vmatpush1.bf16.msra.mxu0 %v4591
      %4621 = vmatprep.subr.bf16.mxu0 0
      %4622 = vmatpush1.bf16.msra.mxu0 %v4590
      %4623 = vmatprep.subr.bf16.mxu0 0
      %4624 = vmatpush1.bf16.msra.mxu0 %v4589
      %4625 = vmatprep.subr.bf16.mxu0 0
      %4626 = vmatpush1.bf16.msra.mxu0 %v4588
      %4627 = vmatprep.subr.bf16.mxu0 0
      %4628 = vmatpush1.bf16.msra.mxu0 %v4587
      %4629 = vmatprep.subr.bf16.mxu0 0
      %4630 = vmatpush1.bf16.msra.mxu0 %v4586
      %4631 = vmatprep.subr.bf16.mxu0 0
      %4632 = vmatpush1.bf16.msra.mxu0 %v4585
      %4633 = vmatprep.subr.bf16.mxu0 0
      %4634 = vmatpush2.bf16.msra.mxu0 %v4600
      %4635 = vmatprep.subr.bf16.mxu0 0
      %4636 = vmatpush2.bf16.msra.mxu0 %v4599
      %4637 = vmatprep.subr.bf16.mxu0 0
      %4638 = vmatpush2.bf16.msra.mxu0 %v4598
      %4639 = vmatprep.subr.bf16.mxu0 0
      %4640 = vmatpush2.bf16.msra.mxu0 %v4597
      %4641 = vmatprep.subr.bf16.mxu0 0
      %4642 = vmatpush2.bf16.msra.mxu0 %v4596
      %4643 = vmatprep.subr.bf16.mxu0 0
      %4644 = vmatpush2.bf16.msra.mxu0 %v4595
      %4645 = vmatprep.subr.bf16.mxu0 0
      %4646 = vmatpush2.bf16.msra.mxu0 %v4594
      %4647 = vmatprep.subr.bf16.mxu0 0
      %4648 = vmatpush2.bf16.msra.mxu0 %v4593
      %4649 = vmatprep.mubr.bf16.mxu0 %v4488
      %4650 = vmatmul.mubr.bf16.gmra.mxu0 %v4487
      %v4651 = vpop.f32.mrf.mxu0
      %v4652 = vadd.f32 0.0, %v4651
      %v4653 = vpop.f32.mrf.mxu0
      %v4654 = vpop.f32.mrf.mxu0
      %v4655 = vadd.f32 0.0, %v4654
      %v4656 = vpop.f32.mrf.mxu0
      %4657 = vdwg.mxu0
      %v4658 = vmax.f32 %v4652, 0.0
      %v4659 = vmax.f32 %v4655, 0.0
      %v4660 = vpack.c.bf16 %v4659, %v4658
      %v4661 = vld [vmem:[%s23] sm:$0xf]
      %v4662 = vld [vmem:[%s23 + $0x4] sm:$0xf]
      %v4663 = vld [vmem:[%s23 + $0x8] sm:$0xf]
      %v4664 = vld [vmem:[%s23 + $0xc] sm:$0xf]
      %v4665 = vld [vmem:[%s23 + $0x10] sm:$0xf]
      %v4666 = vld [vmem:[%s23 + $0x14] sm:$0xf]
      %v4667 = vld [vmem:[%s23 + $0x18] sm:$0xf]
      %v4668 = vld [vmem:[%s23 + $0x1c] sm:$0xf]
      %v4669 = vld [vmem:[%s24] sm:$0x1]
      %v4671 = vlaneseq
      %v4672 = vshrl.u32 %v4671, 7
      %v4673 = vsub.s32 0, %v4672
      %v4674 = vrot.slane %v4669, %v4673
      %v4684 = vunpack.c.l.b16 %v4661
      %v4685 = vunpack.c.l.b16 %v4662
      %v4686 = vunpack.c.l.b16 %v4663
      %v4687 = vunpack.c.l.b16 %v4664
      %v4688 = vunpack.c.l.b16 %v4665
      %v4689 = vunpack.c.l.b16 %v4666
      %v4690 = vunpack.c.l.b16 %v4667
      %v4691 = vunpack.c.l.b16 %v4668
      %v4692 = vpack.c.b16 %v4685, %v4684
      %v4693 = vpack.c.b16 %v4687, %v4686
      %v4694 = vpack.c.b16 %v4689, %v4688
      %v4695 = vpack.c.b16 %v4691, %v4690
      %v4701 = vsel %vm902, %v4660, 0
      %4703 = vmatprep.subr.bf16.mxu0 0
      %4704 = vmatpush1.bf16.msra.mxu0 0
      %4705 = vmatprep.subr.bf16.mxu0 0
      %4706 = vmatpush1.bf16.msra.mxu0 0
      %4707 = vmatprep.subr.bf16.mxu0 0
      %4708 = vmatpush1.bf16.msra.mxu0 0
      %4709 = vmatprep.subr.bf16.mxu0 0
      %4710 = vmatpush1.bf16.msra.mxu0 0
      %4711 = vmatprep.subr.bf16.mxu0 0
      %4712 = vmatpush1.bf16.msra.mxu0 %v4695
      %4713 = vmatprep.subr.bf16.mxu0 0
      %4714 = vmatpush1.bf16.msra.mxu0 %v4694
      %4715 = vmatprep.subr.bf16.mxu0 0
      %4716 = vmatpush1.bf16.msra.mxu0 %v4693
      %4717 = vmatprep.subr.bf16.mxu0 0
      %4718 = vmatpush1.bf16.msra.mxu0 %v4692
      %4719 = vmatprep.subr.bf16.mxu0 0
      %4720 = vmatpush2.bf16.msra.mxu0 0
      %4721 = vmatprep.subr.bf16.mxu0 0
      %4722 = vmatpush2.bf16.msra.mxu0 0
      %4723 = vmatprep.subr.bf16.mxu0 0
      %4724 = vmatpush2.bf16.msra.mxu0 0
      %4725 = vmatprep.subr.bf16.mxu0 0
      %4726 = vmatpush2.bf16.msra.mxu0 0
      %4727 = vmatprep.subr.bf16.mxu0 0
      %4728 = vmatpush2.bf16.msra.mxu0 0
      %4729 = vmatprep.subr.bf16.mxu0 0
      %4730 = vmatpush2.bf16.msra.mxu0 0
      %4731 = vmatprep.subr.bf16.mxu0 0
      %4732 = vmatpush2.bf16.msra.mxu0 0
      %4733 = vmatprep.subr.bf16.mxu0 0
      %4734 = vmatpush2.bf16.msra.mxu0 0
      %4735 = vmatprep.mubr.bf16.mxu0 0
      %4736 = vmatmul.mubr.bf16.gmra.mxu0 %v4701
      %v4737 = vpop.f32.mrf.mxu0
      %v4738 = vadd.f32 %v4674, %v4737
      %v4739 = vpop.f32.mrf.mxu0
      %v4740 = vpop.f32.mrf.mxu0
      %v4741 = vadd.f32 %v4674, %v4740
      %v4742 = vpop.f32.mrf.mxu0
      %4743 = vdwg.mxu0
      %v4744 = vld [vmem:[%s25] sm:$0xff]
      %v4745 = vld [vmem:[%s25 + $0x8] sm:$0xff]
      %v4746 = vld [vmem:[%s25 + $0x10] sm:$0xff]
      %v4747 = vld [vmem:[%s25 + $0x18] sm:$0xff]
      %4748 = vxpose.xlu0.b32.start [1/16] %v4738, 128
      %4749 = vxpose.xlu0.b32.cont [2/16] %v4741, 128
      %4750 = vxpose.xlu0.b32.cont [3/16] 0.0, 128
      %4751 = vxpose.xlu0.b32.cont [4/16] 0.0, 128
      %4752 = vxpose.xlu0.b32.cont [5/16] 0.0, 128
      %4753 = vxpose.xlu0.b32.cont [6/16] 0.0, 128
      %4754 = vxpose.xlu0.b32.cont [7/16] 0.0, 128
      %4755 = vxpose.xlu0.b32.cont [8/16] 0.0, 128
      %4756 = vxpose.xlu0.b32.cont [9/16] 0.0, 128
      %4757 = vxpose.xlu0.b32.cont [10/16] 0.0, 128
      %4758 = vxpose.xlu0.b32.cont [11/16] 0.0, 128
      %4759 = vxpose.xlu0.b32.cont [12/16] 0.0, 128
      %4760 = vxpose.xlu0.b32.cont [13/16] 0.0, 128
      %4761 = vxpose.xlu0.b32.cont [14/16] 0.0, 128
      %4762 = vxpose.xlu0.b32.cont [15/16] 0.0, 128
      %4763 = vxpose.xlu0.b32.end [16/16] 0.0, 128
      %v4764 = vpop.trf.xlu0
      %v4765 = vpop.trf.xlu0
      %v4766 = vpop.trf.xlu0
      %v4767 = vpop.trf.xlu0
      %v4768 = vpop.trf.xlu0
      %v4769 = vpop.trf.xlu0
      %v4770 = vpop.trf.xlu0
      %v4771 = vpop.trf.xlu0
      %v4772 = vpop.trf.xlu0
      %v4773 = vpop.trf.xlu0
      %v4774 = vpop.trf.xlu0
      %v4775 = vpop.trf.xlu0
      %v4776 = vpop.trf.xlu0
      %v4777 = vpop.trf.xlu0
      %v4778 = vpop.trf.xlu0
      %v4779 = vpop.trf.xlu0
      %v4781 = vsel %vm1120, %v4764, 0
      %4783 = vmatprep.subr.mxu0 0.0
      %4784 = vmatpush1.msra.mxu0 0.0
      %4785 = vmatprep.subr.mxu0 0.0
      %4786 = vmatpush1.msra.mxu0 0.0
      %4787 = vmatprep.subr.mxu0 0.0
      %4788 = vmatpush1.msra.mxu0 0.0
      %4789 = vmatprep.subr.mxu0 0.0
      %4790 = vmatpush1.msra.mxu0 0.0
      %4791 = vmatprep.subr.mxu0 0.0
      %4792 = vmatpush1.msra.mxu0 0.0
      %4793 = vmatprep.subr.mxu0 0.0
      %4794 = vmatpush1.msra.mxu0 0.0
      %4795 = vmatprep.subr.mxu0 0.0
      %4796 = vmatpush1.msra.mxu0 0.0
      %4797 = vmatprep.subr.mxu0 0.0
      %4798 = vmatpush1.msra.mxu0 0.0
      %4799 = vmatprep.subr.mxu0 0.0
      %4800 = vmatpush1.msra.mxu0 0.0
      %4801 = vmatprep.subr.mxu0 0.0
      %4802 = vmatpush1.msra.mxu0 0.0
      %4803 = vmatprep.subr.mxu0 0.0
      %4804 = vmatpush1.msra.mxu0 0.0
      %4805 = vmatprep.subr.mxu0 0.0
      %4806 = vmatpush1.msra.mxu0 0.0
      %4807 = vmatprep.subr.mxu0 0.0
      %4808 = vmatpush1.msra.mxu0 0.0
      %4809 = vmatprep.subr.mxu0 0.0
      %4810 = vmatpush1.msra.mxu0 0.0
      %4811 = vmatprep.subr.mxu0 %v4747
      %4812 = vmatpush1.msra.mxu0 %v4746
      %4813 = vmatprep.subr.mxu0 %v4745
      %4814 = vmatpush1.msra.mxu0 %v4744
      %4815 = vmatprep.subr.mxu0 0.0
      %4816 = vmatpush2.msra.mxu0 0.0
      %4817 = vmatprep.subr.mxu0 0.0
      %4818 = vmatpush2.msra.mxu0 0.0
      %4819 = vmatprep.subr.mxu0 0.0
      %4820 = vmatpush2.msra.mxu0 0.0
      %4821 = vmatprep.subr.mxu0 0.0
      %4822 = vmatpush2.msra.mxu0 0.0
      %4823 = vmatprep.subr.mxu0 0.0
      %4824 = vmatpush2.msra.mxu0 0.0
      %4825 = vmatprep.subr.mxu0 0.0
      %4826 = vmatpush2.msra.mxu0 0.0
      %4827 = vmatprep.subr.mxu0 0.0
      %4828 = vmatpush2.msra.mxu0 0.0
      %4829 = vmatprep.subr.mxu0 0.0
      %4830 = vmatpush2.msra.mxu0 0.0
      %4831 = vmatprep.subr.mxu0 0.0
      %4832 = vmatpush2.msra.mxu0 0.0
      %4833 = vmatprep.subr.mxu0 0.0
      %4834 = vmatpush2.msra.mxu0 0.0
      %4835 = vmatprep.subr.mxu0 0.0
      %4836 = vmatpush2.msra.mxu0 0.0
      %4837 = vmatprep.subr.mxu0 0.0
      %4838 = vmatpush2.msra.mxu0 0.0
      %4839 = vmatprep.subr.mxu0 0.0
      %4840 = vmatpush2.msra.mxu0 0.0
      %4841 = vmatprep.subr.mxu0 0.0
      %4842 = vmatpush2.msra.mxu0 0.0
      %4843 = vmatprep.subr.mxu0 0.0
      %4844 = vmatpush2.msra.mxu0 0.0
      %4845 = vmatprep.subr.mxu0 0.0
      %4846 = vmatpush2.msra.mxu0 0.0
      %4847 = vmatprep.mubr.f32.mxu0 0.0
      %4848 = vmatmul.mubr.f32.gmra.mxu0 %v4781
      %v4849 = vpop.f32.mrf.mxu0
      %v4850 = vadd.f32 0.0, %v4849
      %v4851 = vpop.f32.mrf.mxu0
      %v4852 = vadd.f32 0.0, %v4851
      %4853 = vdwg.mxu0
      %4854 = vst [vmem:[%s791] sm:$0x1f] %v4850
      %4855 = vst [vmem:[%s791 + $0x8] sm:$0x1f] %v4852
      %p4856 = scmp.lt.s32.totalorder %s37, 1
      %s4857 = scalar_select %p4856, %s37, 1
      %s4858 = smul.addr %s4857, 2
      %s4859 = smul.addr %s4858, 8
      %s4860 = scalar_lea.vmem %s26, %s4859
      // Predicated region
      $region125: #{vit_cnn_forward.1} parent=123 // pred_check
        %p4861 = pneg %p606
      $region126: #{vit_cnn_forward.1} parent=123 // pred_check_branch
        %4863 = sbr.rel (%p4861) target = $region128
      $region127: #{vit_cnn_forward.1} parent=123 // pred_region
        _
      $region128: #{vit_cnn_forward.1} parent=123 // pred_fallthru
        _
    $region124: #{vit_cnn_forward.1} parent=5 // pred_fallthru
      _
    %p4864 = scmp.le.s32.totalorder 2, %s32
    // Predicated region
    $region129: #{vit_cnn_forward.1} parent=5 // pred_check
      %p4865 = pneg %p4864
    $region130: #{vit_cnn_forward.1} parent=5 // pred_check_branch
      %4867 = sbr.rel (%p4865) target = $region132
    $region131: #{vit_cnn_forward.1} parent=5 // pred_region
      %s4868 = ssub.s32 %s32, 2
      // Predicated region
      $region133: #{vit_cnn_forward.1} parent=131 // pred_check
        %p4869 = pneg %p612
      $region134: #{vit_cnn_forward.1} parent=131 // pred_check_branch
        %4871 = sbr.rel (%p4869) target = $region136
      $region135: #{vit_cnn_forward.1} parent=131 // pred_region
        %p4872 = scmp.lt.s32.totalorder %s38, 1
        %s4873 = scalar_select %p4872, %s38, 1
        %s4874 = smul.addr %s4873, 2
        %s4875 = smul.addr %s4874, 8
        %s4876 = scalar_lea.vmem %s26, %s4875
      $region136: #{vit_cnn_forward.1} parent=131 // pred_fallthru
        _
    $region132: #{vit_cnn_forward.1} parent=5 // pred_fallthru
      _
  $region6: #{vit_cnn_forward.1} parent=0 // loop_footer
    %s36 = sadd.s32 1, %s32
  $region7: #{vit_cnn_forward.1} parent=0 // loop_footer_branch
    %31 = sbr.rel target = $region3
  $region8: #{vit_cnn_forward.1} parent=0 // loop_exit
    _

</llo_original>
